<compile_context>
chip_gen: v5e
topology: v5e:2x2
jax: 0.10.0
libtpu: 0.0.40
codegen_flags: <defaults>
</compile_context>

<pallas_src>
import functools

import jax
import jax.numpy as jnp
from jax import lax
from jax.experimental import pallas as pl
from jax.experimental.pallas import tpu as pltpu


# ----------------------- Per-generation VMEM budget -----------------------
_VMEM_BUDGET = None


def _vmem_budget_bytes():
    """~75% of physical VMEM: ~96 MiB on v5e/v6e (128 MiB), ~48 MiB on v7x (64 MiB)."""
    global _VMEM_BUDGET
    if _VMEM_BUDGET is None:
        cap = 64 * 1024 * 1024                       # conservative fallback
        try:
            cap = int(getattr(pltpu.get_tpu_info(), "vmem_capacity_bytes", cap))
        except Exception:
            pass
        _VMEM_BUDGET = (cap * 3) // 4
    return _VMEM_BUDGET


# --------------- Fused VGG block: n x (Conv3x3+ReLU) + MaxPool2x2 ---------------
def _vgg_block_kernel(*refs, n_conv, cins, cout, H, W, use_patches):
    # refs = (x, w0, b0, ..., w_{n-1}, b_{n-1}, out, src[, patches])
    x_ref = refs[0]
    wb = refs[1:1 + 2 * n_conv]
    o_ref = refs[1 + 2 * n_conv]
    src_ref = refs[2 + 2 * n_conv]                   # (Nb, H+2, W+2, Cpad) f32 staging
    patches_ref = refs[3 + 2 * n_conv] if use_patches else None
    Nb = x_ref.shape[0]
    cpad = src_ref.shape[3]

    # Zero only the 1-px border of the padded staging buffer (interior is always
    # fully overwritten).  Done every step so each grid step is independent
    # (safe when the 'parallel' axis is split across TensorCores).
    src_ref[:, 0:1, :, :] = jnp.zeros((Nb, 1, W + 2, cpad), jnp.float32)
    src_ref[:, H + 1:H + 2, :, :] = jnp.zeros((Nb, 1, W + 2, cpad), jnp.float32)
    src_ref[:, :, 0:1, :] = jnp.zeros((Nb, H + 2, 1, cpad), jnp.float32)
    src_ref[:, :, W + 1:W + 2, :] = jnp.zeros((Nb, H + 2, 1, cpad), jnp.float32)

    # Stage the bf16 HBM input into the f32 padded scratch; every shifted-window
    # access below reads from this unpacked (f32) buffer.
    src_ref[:, 1:H + 1, 1:W + 1, :cins[0]] = x_ref[...].astype(jnp.float32)

    M = Nb * H * W
    for li in range(n_conv):
        cin = cins[li]
        w_ref, b_ref = wb[2 * li], wb[2 * li + 1]

        if cin < 128:
            # im2col: one MXU dot with K = 9*cin (good fill for narrow layers).
            for dy in range(3):
                for dx in range(3):
                    k = dy * 3 + dx
                    patches_ref[:, :, :, k * cin:(k + 1) * cin] = (
                        src_ref[:, dy:dy + H, dx:dx + W, :cin])
            p = patches_ref[:, :, :, 0:9 * cin].reshape(M, 9 * cin)
            acc = jnp.dot(p.astype(jnp.bfloat16), w_ref[...],
                          preferred_element_type=jnp.float32)
        else:
            # Wide channels: 9 shift-and-accumulate matmuls; every operand slice
            # is lane-aligned (cin % 128 == 0) and there is no patch replication.
            acc = jnp.zeros((M, cout), jnp.float32)
            for dy in range(3):
                for dx in range(3):
                    k = dy * 3 + dx
                    tap = src_ref[:, dy:dy + H, dx:dx + W, :cin]
                    tap = tap.reshape(M, cin).astype(jnp.bfloat16)
                    acc = acc + jnp.dot(tap, w_ref[k * cin:(k + 1) * cin, :],
                                        preferred_element_type=jnp.float32)

        acc = jnp.maximum(acc + b_ref[...], 0.0)      # bias + ReLU, f32 epilogue

        if li < n_conv - 1:
            # Intermediate activation stays in VMEM (input of the next conv).
            src_ref[:, 1:H + 1, 1:W + 1, :cout] = acc.reshape(Nb, H, W, cout)
        else:
            # Fused MaxPool2d(2,2): pairwise max along W, then along H.
            a = acc.reshape(Nb * H * (W // 2), 2, cout)
            a = jnp.max(a, axis=1)                               # pool along W
            a = a.reshape(Nb * (H // 2), 2, W // 2, cout)
            a = jnp.max(a, axis=1)                               # pool along H
            o_ref[...] = a.reshape(Nb, (H // 2) * (W // 2), cout).astype(o_ref.dtype)


def _conv_block_vmem_bytes(nb, H, W, cins, cout):
    cpad = max(max(cins), cout if len(cins) > 1 else 0)
    im2 = [c for c in cins if c < 128]
    p9 = 9 * max(im2) if im2 else 0
    w_bytes = 2 * sum(9 * c * cout * 2 + 4 * cout for c in cins)   # ~double-buffered
    src = nb * (H + 2) * (W + 2) * cpad * 4
    pat = nb * H * W * p9 * 4
    x_in = 2 * nb * H * W * cins[0] * 2
    out = 2 * nb * (H // 2) * (W // 2) * cout * 2
    return src + pat + w_bytes + x_in + out


def _choose_batch_tile(N, H, W, cins, cout):
    """Images per grid step: enough MXU rows (nb*H*W) without blowing the VMEM
    budget, keeping >= 2 grid steps when possible (v7x has 2 TensorCores)."""
    budget = _vmem_budget_bytes()
    divisors = [d for d in range(1, N + 1) if N % d == 0]
    fits = [d for d in divisors
            if _conv_block_vmem_bytes(d, H, W, cins, cout) <= budget] or [1]
    pref = [d for d in fits if N // d >= 2] or fits
    for d in pref:
        if d * H * W >= 2048:
            return d
    return pref[-1]


def vgg_block_forward(x_nhwc, block_params):
    """One torch vgg_block, fused into a single pallas_call.  x_nhwc: (N,H,W,Cin) bf16."""
    N, H, W, cin0 = x_nhwc.shape
    assert H % 2 == 0 and W % 2 == 0
    n_conv = len(block_params)
    cins = tuple(w.shape[0] // 9 for (w, _) in block_params)
    cout = block_params[0][0].shape[1]
    assert cins[0] == cin0
    use_patches = any(c < 128 for c in cins)
    cpad = max(max(cins), cout if n_conv > 1 else 0)
    nb = _choose_batch_tile(N, H, W, cins, cout)
    Ho, Wo = H // 2, W // 2

    in_specs = [pl.BlockSpec((nb, H, W, cin0), lambda n: (n, 0, 0, 0))]
    args = [x_nhwc]
    for (w, b) in block_params:
        in_specs.append(pl.BlockSpec(w.shape, lambda n: (0, 0)))    # resident weights
        in_specs.append(pl.BlockSpec((1, cout), lambda n: (0, 0)))  # resident bias
        args += [w, b.reshape(1, cout)]

    scratch = [pltpu.VMEM((nb, H + 2, W + 2, cpad), jnp.float32)]   # padded staging
    if use_patches:
        scratch.append(pltpu.VMEM(
            (nb, H, W, 9 * max(c for c in cins if c < 128)), jnp.float32))

    out = pl.pallas_call(
        functools.partial(_vgg_block_kernel, n_conv=n_conv, cins=cins, cout=cout,
                          H=H, W=W, use_patches=use_patches),
        out_shape=jax.ShapeDtypeStruct((N, Ho * Wo, cout), jnp.bfloat16),
        grid=(N // nb,),
        in_specs=in_specs,
        out_specs=pl.BlockSpec((nb, Ho * Wo, cout), lambda n: (n, 0, 0)),
        scratch_shapes=scratch,
        compiler_params=pltpu.CompilerParams(
            dimension_semantics=("parallel",),
            vmem_limit_bytes=_vmem_budget_bytes()),
    )(*args)
    return out.reshape(N, Ho, Wo, cout)


# ------------------------------ Tiled Linear (+ ReLU) ------------------------------
def _linear_kernel(x_ref, w_ref, b_ref, o_ref, acc_ref, *, apply_relu):
    @pl.when(pl.program_id(2) == 0)
    def _():
        acc_ref[...] = jnp.zeros_like(acc_ref)

    acc_ref[...] += jnp.dot(x_ref[...], w_ref[...],
                            preferred_element_type=jnp.float32)

    @pl.when(pl.program_id(2) == pl.num_programs(2) - 1)
    def _():
        y = acc_ref[...] + b_ref[...]
        if apply_relu:
            y = jnp.maximum(y, 0.0)
        o_ref[...] = y.astype(o_ref.dtype)


def _pick_tile(dim, target, unit):
    """Largest divisor of `dim` that is <= target and a multiple of `unit`;
    falls back to the full dim (always a legal block) only when none exists."""
    best = None
    t = unit
    while t <= min(dim, target):
        if dim % t == 0:
            best = t
        t += unit
    return best if best is not None else dim


def linear(x, w_t, b, *, apply_relu, out_dtype):
    # x: (B, Fin) bf16; w_t: (Fin, Fout) bf16 (torch weight transposed); b: (Fout,) f32
    B, Fin = x.shape
    Fout = w_t.shape[1]
    tm = B if B <= 256 else _pick_tile(B, 256, 8)
    tn = _pick_tile(Fout, 2048, 128)       # big N tile: weights stream (nearly) once
    tk = _pick_tile(Fin, 1024, 128)
    grid = (B // tm, Fout // tn, Fin // tk)
    return pl.pallas_call(
        functools.partial(_linear_kernel, apply_relu=apply_relu),
        out_shape=jax.ShapeDtypeStruct((B, Fout), out_dtype),
        grid=grid,
        in_specs=[
            pl.BlockSpec((tm, tk), lambda i, j, k: (i, k)),
            pl.BlockSpec((tk, tn), lambda i, j, k: (k, j)),
            pl.BlockSpec((1, tn), lambda i, j, k: (0, j)),
        ],
        out_specs=pl.BlockSpec((tm, tn), lambda i, j, k: (i, j)),
        scratch_shapes=[pltpu.VMEM((tm, tn), jnp.float32)],
        compiler_params=pltpu.CompilerParams(
            dimension_semantics=("parallel", "parallel", "arbitrary"),
            vmem_limit_bytes=_vmem_budget_bytes()),
    )(x, w_t, b.reshape(1, Fout))


# --------------------------- CrossEntropyLoss (mean) ---------------------------
def _ce_kernel(logits_ref, labels_ref, loss_ref):
    logits = logits_ref[...].astype(jnp.float32)                 # (B, C)
    labels = labels_ref[...]                                     # (B, 1) int32
    m = jnp.max(logits, axis=-1, keepdims=True)
    shifted = logits - m
    lse = jnp.log(jnp.sum(jnp.exp(shifted), axis=-1, keepdims=True))
    logp = shifted - lse                                         # log-softmax
    cls = lax.broadcasted_iota(jnp.int32, logits.shape, 1)
    onehot = (cls == labels).astype(jnp.float32)
    nll = -jnp.sum(logp * onehot, axis=-1, keepdims=True)        # (B, 1)
    loss_ref[...] = jnp.sum(nll, axis=0, keepdims=True) / logits.shape[0]


def cross_entropy(logits, labels):
    B = logits.shape[0]
    loss = pl.pallas_call(
        _ce_kernel,
        out_shape=jax.ShapeDtypeStruct((1, 1), jnp.float32),
    )(logits, labels.astype(jnp.int32).reshape(B, 1))
    return loss[0, 0]


# --------------------------------- Parameters ---------------------------------
def init_params(key, arch, feat_chw, fc_hidden_units, num_labels=10):
    """Synthetic init mirroring the torch module's shapes + kernel-friendly folding.

    feat_chw = (C_last, Hf, Wf) of the final feature map (torch NCHW order).
    """
    C_last, Hf, Wf = feat_chw
    fc_features = C_last * Hf * Wf
    params = {"vggs": [], "classifier": []}
    for (num_hidden_layers, in_ch, out_ch) in arch:
        block = []
        for i in range(num_hidden_layers):
            cin = in_ch if i == 0 else out_ch
            key, kw, kb = jax.random.split(key, 3)
            # torch Conv2d weight (Cout, Cin, 3, 3)
            w = jax.random.normal(kw, (out_ch, cin, 3, 3), jnp.float32) * 0.1
            b = jax.random.normal(kb, (out_ch,), jnp.float32) * 0.01
            # fold: (Cout,Cin,3,3) -> (3,3,Cin,Cout) -> (9*Cin, Cout), bf16 for the MXU
            w_folded = jnp.transpose(w, (2, 3, 1, 0)).reshape(9 * cin, out_ch)
            block.append((w_folded.astype(jnp.bfloat16), b))
        params["vggs"].append(block)

    dims = [fc_features, fc_hidden_units, fc_hidden_units, num_labels]
    for li, (fin, fout) in enumerate(zip(dims[:-1], dims[1:])):
        key, kw, kb = jax.random.split(key, 3)
        w = jax.random.normal(kw, (fout, fin), jnp.float32) * 0.05   # torch (out, in)
        b = jax.random.normal(kb, (fout,), jnp.float32) * 0.01
        w_t = w.T                                                    # (fin, fout)
        if li == 0:
            # Permute rows so the first linear consumes the NHWC-flattened features
            # directly: row (c*Hf*Wf + h*Wf + w) -> row (h*Wf*C + w*C + c).
            # Reproduces torch's flatten(start_dim=1) NCHW semantics without an
            # HBM transpose of the feature map.
            w_t = (w_t.reshape(C_last, Hf, Wf, fout)
                       .transpose(1, 2, 0, 3)
                       .reshape(Hf * Wf * C_last, fout))
        params["classifier"].append((w_t.astype(jnp.bfloat16), b))
    return params


# ----------------------------------- Forward -----------------------------------
def net_forward(params, x_nchw, labels):
    """Returns (loss, logits), matching Net.forward(x, labels, criterion=None)."""
    # NCHW -> NHWC once; conv activations live in HBM as bf16 between blocks.
    x = jnp.transpose(x_nchw, (0, 2, 3, 1)).astype(jnp.bfloat16)
    for block in params["vggs"]:                     # self.vggs (fused per block)
        x = vgg_block_forward(x, block)
    # flatten(start_dim=1): free NHWC reshape; w1 rows were permuted at init.
    feat = x.reshape(x.shape[0], -1)
    # classifier: Linear-ReLU-[Dropout]-Linear-ReLU-[Dropout]-Linear (eval mode)
    (w1, b1), (w2, b2), (w3, b3) = params["classifier"]
    h = linear(feat, w1, b1, apply_relu=True, out_dtype=jnp.bfloat16)
    h = linear(h, w2, b2, apply_relu=True, out_dtype=jnp.bfloat16)
    logits = linear(h, w3, b3, apply_relu=False, out_dtype=jnp.float32)
    loss = None
    if labels is not None:
        loss = cross_entropy(logits, labels)         # nn.CrossEntropyLoss()
    return loss, logits


if __name__ == "__main__":
    key = jax.random.PRNGKey(0)
    # Scaled-down VGG arch with the same structure as the default
    # [[1,1,8],[2,8,64],[2,64,512],[2,512,512]]; small demo sizes.
    arch = [[1, 1, 8], [2, 8, 16]]
    N, H, W = 2, 16, 16
    Hf, Wf = H // (2 ** len(arch)), W // (2 ** len(arch))   # 4, 4
    C_last = arch[-1][2]                                    # 16
    fc_hidden = 64

    kx, kl, kp = jax.random.split(key, 3)
    x = jax.random.normal(kx, (N, 1, H, W), jnp.float32)    # NCHW like torch
    labels = jax.random.randint(kl, (N,), 0, 10)
    params = init_params(kp, arch, (C_last, Hf, Wf), fc_hidden)

    loss, logits = net_forward(params, x, labels)
    jax.block_until_ready((loss, logits))
    assert logits.shape == (N, 10)
    assert loss.shape == ()
    print("KERNEL_OK")
</pallas_src>

<mosaic_0001>
module attributes {stable_mosaic.version = 11 : i64} {
  func.func @_vgg_block_kernel(%arg0: i32, %arg1: memref<1x16x16x1xbf16, #tpu.memory_space<vmem>>, %arg2: memref<9x8xbf16, #tpu.memory_space<vmem>>, %arg3: memref<1x8xf32, #tpu.memory_space<vmem>>, %arg4: memref<1x64x8xbf16, #tpu.memory_space<vmem>>, %arg5: memref<1x18x18x1xf32, #tpu.memory_space<vmem>>, %arg6: memref<1x16x16x9xf32, #tpu.memory_space<vmem>>) attributes {dimension_semantics = [#tpu.dimension_semantics<parallel>], iteration_bounds = array<i64: 2>, scalar_prefetch = 0 : i64, scratch_operands = 2 : i64, tpu.core_type = #tpu.core_type<tc>, window_params = [{transform_indices = @transform_0, window_bounds = array<i64: 1, 16, 16, 1>}, {pipeline_mode = #tpu.pipeline_mode<synchronous>, transform_indices = @transform_1, window_bounds = array<i64: 9, 8>}, {pipeline_mode = #tpu.pipeline_mode<synchronous>, transform_indices = @transform_2, window_bounds = array<i64: 1, 8>}, {transform_indices = @transform_3, window_bounds = array<i64: 1, 64, 8>}]} {
    %cst = arith.constant 0.000000e+00 : f32
    %0 = vector.broadcast %cst : f32 to vector<1x1x18x1xf32>
    %c0 = arith.constant 0 : index
    %c0_0 = arith.constant 0 : index
    %c0_1 = arith.constant 0 : index
    %c0_2 = arith.constant 0 : index
    %1 = vector.load %arg5[%c0, %c0_0, %c0_1, %c0_2] : memref<1x18x18x1xf32, #tpu.memory_space<vmem>>, vector<1x1x18x1xf32>
    tpu.vector_store %arg5[%c0, %c0_0, %c0_1, %c0_2], %0 {strides = array<i32>} : memref<1x18x18x1xf32, #tpu.memory_space<vmem>>, vector<1x1x18x1xf32>,
    %cst_3 = arith.constant 0.000000e+00 : f32
    %2 = vector.broadcast %cst_3 : f32 to vector<1x1x18x1xf32>
    %c0_4 = arith.constant 0 : index
    %c17 = arith.constant 17 : index
    %c0_5 = arith.constant 0 : index
    %c0_6 = arith.constant 0 : index
    %3 = vector.load %arg5[%c0_4, %c17, %c0_5, %c0_6] : memref<1x18x18x1xf32, #tpu.memory_space<vmem>>, vector<1x1x18x1xf32>
    tpu.vector_store %arg5[%c0_4, %c17, %c0_5, %c0_6], %2 {strides = array<i32>} : memref<1x18x18x1xf32, #tpu.memory_space<vmem>>, vector<1x1x18x1xf32>,
    %cst_7 = arith.constant 0.000000e+00 : f32
    %4 = vector.broadcast %cst_7 : f32 to vector<1x18x1x1xf32>
    %c0_8 = arith.constant 0 : index
    %c0_9 = arith.constant 0 : index
    %c0_10 = arith.constant 0 : index
    %c0_11 = arith.constant 0 : index
    %5 = vector.load %arg5[%c0_8, %c0_9, %c0_10, %c0_11] : memref<1x18x18x1xf32, #tpu.memory_space<vmem>>, vector<1x18x1x1xf32>
    tpu.vector_store %arg5[%c0_8, %c0_9, %c0_10, %c0_11], %4 {strides = array<i32>} : memref<1x18x18x1xf32, #tpu.memory_space<vmem>>, vector<1x18x1x1xf32>,
    %cst_12 = arith.constant 0.000000e+00 : f32
    %6 = vector.broadcast %cst_12 : f32 to vector<1x18x1x1xf32>
    %c0_13 = arith.constant 0 : index
    %c0_14 = arith.constant 0 : index
    %c17_15 = arith.constant 17 : index
    %c0_16 = arith.constant 0 : index
    %7 = vector.load %arg5[%c0_13, %c0_14, %c17_15, %c0_16] : memref<1x18x18x1xf32, #tpu.memory_space<vmem>>, vector<1x18x1x1xf32>
    tpu.vector_store %arg5[%c0_13, %c0_14, %c17_15, %c0_16], %6 {strides = array<i32>} : memref<1x18x18x1xf32, #tpu.memory_space<vmem>>, vector<1x18x1x1xf32>,
    %c0_17 = arith.constant 0 : index
    %c0_18 = arith.constant 0 : index
    %c0_19 = arith.constant 0 : index
    %c0_20 = arith.constant 0 : index
    %8 = vector.load %arg1[%c0_17, %c0_18, %c0_19, %c0_20] : memref<1x16x16x1xbf16, #tpu.memory_space<vmem>>, vector<1x16x16x1xbf16>
    %9 = arith.extf %8 : vector<1x16x16x1xbf16> to vector<1x16x16x1xf32>
    %c0_21 = arith.constant 0 : index
    %c1 = arith.constant 1 : index
    %c1_22 = arith.constant 1 : index
    %c0_23 = arith.constant 0 : index
    %10 = vector.load %arg5[%c0_21, %c1, %c1_22, %c0_23] : memref<1x18x18x1xf32, #tpu.memory_space<vmem>>, vector<1x16x16x1xf32>
    tpu.vector_store %arg5[%c0_21, %c1, %c1_22, %c0_23], %9 {strides = array<i32>} : memref<1x18x18x1xf32, #tpu.memory_space<vmem>>, vector<1x16x16x1xf32>,
    %c0_24 = arith.constant 0 : index
    %c0_25 = arith.constant 0 : index
    %c0_26 = arith.constant 0 : index
    %c0_27 = arith.constant 0 : index
    %11 = vector.load %arg5[%c0_24, %c0_25, %c0_26, %c0_27] : memref<1x18x18x1xf32, #tpu.memory_space<vmem>>, vector<1x16x16x1xf32>
    %c0_28 = arith.constant 0 : index
    %c0_29 = arith.constant 0 : index
    %c0_30 = arith.constant 0 : index
    %c0_31 = arith.constant 0 : index
    %12 = vector.load %arg6[%c0_28, %c0_29, %c0_30, %c0_31] : memref<1x16x16x9xf32, #tpu.memory_space<vmem>>, vector<1x16x16x1xf32>
    tpu.vector_store %arg6[%c0_28, %c0_29, %c0_30, %c0_31], %11 {strides = array<i32>} : memref<1x16x16x9xf32, #tpu.memory_space<vmem>>, vector<1x16x16x1xf32>,
    %c0_32 = arith.constant 0 : index
    %c0_33 = arith.constant 0 : index
    %c1_34 = arith.constant 1 : index
    %c0_35 = arith.constant 0 : index
    %13 = vector.load %arg5[%c0_32, %c0_33, %c1_34, %c0_35] : memref<1x18x18x1xf32, #tpu.memory_space<vmem>>, vector<1x16x16x1xf32>
    %c0_36 = arith.constant 0 : index
    %c0_37 = arith.constant 0 : index
    %c0_38 = arith.constant 0 : index
    %c1_39 = arith.constant 1 : index
    %14 = vector.load %arg6[%c0_36, %c0_37, %c0_38, %c1_39] : memref<1x16x16x9xf32, #tpu.memory_space<vmem>>, vector<1x16x16x1xf32>
    tpu.vector_store %arg6[%c0_36, %c0_37, %c0_38, %c1_39], %13 {strides = array<i32>} : memref<1x16x16x9xf32, #tpu.memory_space<vmem>>, vector<1x16x16x1xf32>,
    %c0_40 = arith.constant 0 : index
    %c0_41 = arith.constant 0 : index
    %c2 = arith.constant 2 : index
    %c0_42 = arith.constant 0 : index
    %15 = vector.load %arg5[%c0_40, %c0_41, %c2, %c0_42] : memref<1x18x18x1xf32, #tpu.memory_space<vmem>>, vector<1x16x16x1xf32>
    %c0_43 = arith.constant 0 : index
    %c0_44 = arith.constant 0 : index
    %c0_45 = arith.constant 0 : index
    %c2_46 = arith.constant 2 : index
    %16 = vector.load %arg6[%c0_43, %c0_44, %c0_45, %c2_46] : memref<1x16x16x9xf32, #tpu.memory_space<vmem>>, vector<1x16x16x1xf32>
    tpu.vector_store %arg6[%c0_43, %c0_44, %c0_45, %c2_46], %15 {strides = array<i32>} : memref<1x16x16x9xf32, #tpu.memory_space<vmem>>, vector<1x16x16x1xf32>,
    %c0_47 = arith.constant 0 : index
    %c1_48 = arith.constant 1 : index
    %c0_49 = arith.constant 0 : index
    %c0_50 = arith.constant 0 : index
    %17 = vector.load %arg5[%c0_47, %c1_48, %c0_49, %c0_50] : memref<1x18x18x1xf32, #tpu.memory_space<vmem>>, vector<1x16x16x1xf32>
    %c0_51 = arith.constant 0 : index
    %c0_52 = arith.constant 0 : index
    %c0_53 = arith.constant 0 : index
    %c3 = arith.constant 3 : index
    %18 = vector.load %arg6[%c0_51, %c0_52, %c0_53, %c3] : memref<1x16x16x9xf32, #tpu.memory_space<vmem>>, vector<1x16x16x1xf32>
    tpu.vector_store %arg6[%c0_51, %c0_52, %c0_53, %c3], %17 {strides = array<i32>} : memref<1x16x16x9xf32, #tpu.memory_space<vmem>>, vector<1x16x16x1xf32>,
    %c0_54 = arith.constant 0 : index
    %c1_55 = arith.constant 1 : index
    %c1_56 = arith.constant 1 : index
    %c0_57 = arith.constant 0 : index
    %19 = vector.load %arg5[%c0_54, %c1_55, %c1_56, %c0_57] : memref<1x18x18x1xf32, #tpu.memory_space<vmem>>, vector<1x16x16x1xf32>
    %c0_58 = arith.constant 0 : index
    %c0_59 = arith.constant 0 : index
    %c0_60 = arith.constant 0 : index
    %c4 = arith.constant 4 : index
    %20 = vector.load %arg6[%c0_58, %c0_59, %c0_60, %c4] : memref<1x16x16x9xf32, #tpu.memory_space<vmem>>, vector<1x16x16x1xf32>
    tpu.vector_store %arg6[%c0_58, %c0_59, %c0_60, %c4], %19 {strides = array<i32>} : memref<1x16x16x9xf32, #tpu.memory_space<vmem>>, vector<1x16x16x1xf32>,
    %c0_61 = arith.constant 0 : index
    %c1_62 = arith.constant 1 : index
    %c2_63 = arith.constant 2 : index
    %c0_64 = arith.constant 0 : index
    %21 = vector.load %arg5[%c0_61, %c1_62, %c2_63, %c0_64] : memref<1x18x18x1xf32, #tpu.memory_space<vmem>>, vector<1x16x16x1xf32>
    %c0_65 = arith.constant 0 : index
    %c0_66 = arith.constant 0 : index
    %c0_67 = arith.constant 0 : index
    %c5 = arith.constant 5 : index
    %22 = vector.load %arg6[%c0_65, %c0_66, %c0_67, %c5] : memref<1x16x16x9xf32, #tpu.memory_space<vmem>>, vector<1x16x16x1xf32>
    tpu.vector_store %arg6[%c0_65, %c0_66, %c0_67, %c5], %21 {strides = array<i32>} : memref<1x16x16x9xf32, #tpu.memory_space<vmem>>, vector<1x16x16x1xf32>,
    %c0_68 = arith.constant 0 : index
    %c2_69 = arith.constant 2 : index
    %c0_70 = arith.constant 0 : index
    %c0_71 = arith.constant 0 : index
    %23 = vector.load %arg5[%c0_68, %c2_69, %c0_70, %c0_71] : memref<1x18x18x1xf32, #tpu.memory_space<vmem>>, vector<1x16x16x1xf32>
    %c0_72 = arith.constant 0 : index
    %c0_73 = arith.constant 0 : index
    %c0_74 = arith.constant 0 : index
    %c6 = arith.constant 6 : index
    %24 = vector.load %arg6[%c0_72, %c0_73, %c0_74, %c6] : memref<1x16x16x9xf32, #tpu.memory_space<vmem>>, vector<1x16x16x1xf32>
    tpu.vector_store %arg6[%c0_72, %c0_73, %c0_74, %c6], %23 {strides = array<i32>} : memref<1x16x16x9xf32, #tpu.memory_space<vmem>>, vector<1x16x16x1xf32>,
    %c0_75 = arith.constant 0 : index
    %c2_76 = arith.constant 2 : index
    %c1_77 = arith.constant 1 : index
    %c0_78 = arith.constant 0 : index
    %25 = vector.load %arg5[%c0_75, %c2_76, %c1_77, %c0_78] : memref<1x18x18x1xf32, #tpu.memory_space<vmem>>, vector<1x16x16x1xf32>
    %c0_79 = arith.constant 0 : index
    %c0_80 = arith.constant 0 : index
    %c0_81 = arith.constant 0 : index
    %c7 = arith.constant 7 : index
    %26 = vector.load %arg6[%c0_79, %c0_80, %c0_81, %c7] : memref<1x16x16x9xf32, #tpu.memory_space<vmem>>, vector<1x16x16x1xf32>
    tpu.vector_store %arg6[%c0_79, %c0_80, %c0_81, %c7], %25 {strides = array<i32>} : memref<1x16x16x9xf32, #tpu.memory_space<vmem>>, vector<1x16x16x1xf32>,
    %c0_82 = arith.constant 0 : index
    %c2_83 = arith.constant 2 : index
    %c2_84 = arith.constant 2 : index
    %c0_85 = arith.constant 0 : index
    %27 = vector.load %arg5[%c0_82, %c2_83, %c2_84, %c0_85] : memref<1x18x18x1xf32, #tpu.memory_space<vmem>>, vector<1x16x16x1xf32>
    %c0_86 = arith.constant 0 : index
    %c0_87 = arith.constant 0 : index
    %c0_88 = arith.constant 0 : index
    %c8 = arith.constant 8 : index
    %28 = vector.load %arg6[%c0_86, %c0_87, %c0_88, %c8] : memref<1x16x16x9xf32, #tpu.memory_space<vmem>>, vector<1x16x16x1xf32>
    tpu.vector_store %arg6[%c0_86, %c0_87, %c0_88, %c8], %27 {strides = array<i32>} : memref<1x16x16x9xf32, #tpu.memory_space<vmem>>, vector<1x16x16x1xf32>,
    %c0_89 = arith.constant 0 : index
    %c0_90 = arith.constant 0 : index
    %c0_91 = arith.constant 0 : index
    %c0_92 = arith.constant 0 : index
    %29 = vector.load %arg6[%c0_89, %c0_90, %c0_91, %c0_92] : memref<1x16x16x9xf32, #tpu.memory_space<vmem>>, vector<1x16x16x9xf32>
    %30 = vector.shape_cast %29 : vector<1x16x16x9xf32> to vector<256x9xf32>
    %31 = arith.truncf %30 : vector<256x9xf32> to vector<256x9xbf16>
    %c0_93 = arith.constant 0 : index
    %c0_94 = arith.constant 0 : index
    %32 = vector.load %arg2[%c0_93, %c0_94] : memref<9x8xbf16, #tpu.memory_space<vmem>>, vector<9x8xbf16>
    %cst_95 = arith.constant dense<0.000000e+00> : vector<256x8xf32>
    %33 = tpu.matmul %31, %32, %cst_95 {dimension_numbers = #tpu.dot_dimension_numbers<[1], [0], [0], [1], [0, 0, 1, 1], [], []>} : vector<256x9xbf16>, vector<9x8xbf16>, vector<256x8xf32> -> vector<256x8xf32>
    %c0_96 = arith.constant 0 : index
    %c0_97 = arith.constant 0 : index
    %34 = vector.load %arg3[%c0_96, %c0_97] : memref<1x8xf32, #tpu.memory_space<vmem>>, vector<1x8xf32>
    %35 = vector.broadcast %34 : vector<1x8xf32> to vector<256x8xf32>
    %36 = arith.addf %33, %35 : vector<256x8xf32>
    %cst_98 = arith.constant 0.000000e+00 : f32
    %37 = vector.broadcast %cst_98 : f32 to vector<256x8xf32>
    %38 = arith.maximumf %36, %37 : vector<256x8xf32>
    %39 = vector.shape_cast %38 : vector<256x8xf32> to vector<128x2x8xf32>
    %cst_99 = arith.constant dense<0xFF800000> : vector<128x8xf32>
    %40 = vector.multi_reduction <maximumf>, %39, %cst_99 [1] : vector<128x2x8xf32> to vector<128x8xf32>
    %41 = vector.shape_cast %40 : vector<128x8xf32> to vector<8x2x8x8xf32>
    %cst_100 = arith.constant dense<0xFF800000> : vector<8x8x8xf32>
    %42 = vector.multi_reduction <maximumf>, %41, %cst_100 [1] : vector<8x2x8x8xf32> to vector<8x8x8xf32>
    %43 = vector.shape_cast %42 : vector<8x8x8xf32> to vector<1x64x8xf32>
    %44 = arith.truncf %43 : vector<1x64x8xf32> to vector<1x64x8xbf16>
    %c0_101 = arith.constant 0 : index
    %c0_102 = arith.constant 0 : index
    %c0_103 = arith.constant 0 : index
    %45 = vector.load %arg4[%c0_101, %c0_102, %c0_103] : memref<1x64x8xbf16, #tpu.memory_space<vmem>>, vector<1x64x8xbf16>
    tpu.vector_store %arg4[%c0_101, %c0_102, %c0_103], %44 {strides = array<i32>} : memref<1x64x8xbf16, #tpu.memory_space<vmem>>, vector<1x64x8xbf16>,
    return
  }
  func.func @transform_0(%arg0: i32) -> (i32, i32, i32, i32) {
    %c0_i32 = arith.constant 0 : i32
    %c0_i32_0 = arith.constant 0 : i32
    %c0_i32_1 = arith.constant 0 : i32
    %c0_i32_2 = arith.constant 0 : i32
    return %arg0, %c0_i32, %c0_i32_0, %c0_i32_1 : i32, i32, i32, i32
  }
  func.func @transform_1(%arg0: i32) -> (i32, i32) {
    %c0_i32 = arith.constant 0 : i32
    %c0_i32_0 = arith.constant 0 : i32
    %c0_i32_1 = arith.constant 0 : i32
    return %c0_i32, %c0_i32_0 : i32, i32
  }
  func.func @transform_2(%arg0: i32) -> (i32, i32) {
    %c0_i32 = arith.constant 0 : i32
    %c0_i32_0 = arith.constant 0 : i32
    %c0_i32_1 = arith.constant 0 : i32
    return %c0_i32, %c0_i32_0 : i32, i32
  }
  func.func @transform_3(%arg0: i32) -> (i32, i32, i32) {
    %c0_i32 = arith.constant 0 : i32
    %c0_i32_0 = arith.constant 0 : i32
    %c0_i32_1 = arith.constant 0 : i32
    return %arg0, %c0_i32, %c0_i32_0 : i32, i32, i32
  }
}

</mosaic_0001>

<llo_original>
// kernel: tpu_custom_call.1
$region0: #{tpu_custom_call.1}
  #allocation0 [shape = 'u32[]', space=smem, size = 0x4, offset = 0x4, fixed_abs, tag = 'smem constant byte address 0x4 - core index']
  #allocation1 [shape = 'u32[72,128]{1,0:T(1,128)}', space=vmem, size = 0x9000, scoped, tag = 'internal scratch']
  #allocation2 [shape = 'f32[1,18,18,1]{3,2,1,0:T(8,128)}', space=vmem, size = 0x36000, scoped, tag = 'scratch operand']
  #allocation3 [shape = 'f32[1,16,16,9]{3,2,1,0:T(8,128)}', space=vmem, size = 0x20000, scoped, tag = 'scratch operand']
  %s0 = inlined_call_operand.vmem [shape: bf16[2,16,16,1], index: 0, kind: input, shape index: {}]
  %s1 = inlined_call_operand.vmem [shape: bf16[9,8], index: 1, kind: input, shape index: {}]
  %s2 = inlined_call_operand.vmem [shape: f32[1,8], index: 2, kind: input, shape index: {}]
  %s3 = inlined_call_operand.vmem [shape: bf16[2,64,8], index: 3, kind: output, shape index: {}]
  %s4 = sld [smem:[#allocation0]]
  $region45: #{tpu_custom_call.1} parent=0
    _
  %s6 = ssub.s32 1, %s4
  %s7 = scalar_select 0, %s6, %s4
  loop: start=0, step=1, limit=4
  $region2: #{tpu_custom_call.1} parent=0 // loop_pre_header
    _
  $region3: #{tpu_custom_call.1} parent=0 // loop_header
    %s9 = sphi 0, %s13
    %p10 = scmp.ge.s32.totalorder %s9, 4
    %s19 = sphi 0, %s21
    %s22 = sphi 0, %s19
    %s23 = sphi 0, %s22
    %s39 = sphi 0, %s23
    %s43 = sphi 0, %s43
    %s45 = sphi 0, %s43
    %s46 = sphi 0, %s45
    %s60 = sphi 0, %s46
    %s64 = sphi 0, %s64
    %s66 = sphi 0, %s64
    %s67 = sphi 0, %s66
    %s81 = sphi 0, %s67
    %s87 = sphi 0, %s89
    %s90 = sphi 0, %s87
    %s91 = sphi 0, %s90
    %s107 = sphi 0, %s91
  $region4: #{tpu_custom_call.1} parent=0 // loop_header_branch
    %12 = sbr.rel (%p10) target = $region8
  $region5: #{tpu_custom_call.1} parent=0 // loop_body
    %s14 = ssub.s32 %s9, 1
    %s15 = ssub.s32 %s9, 2
    %s16 = sadd.s32 %s9, 1
    %s17 = ssub.s32 %s9, %s16
    %p18 = scmp.eq.s32.totalorder %s17, 0
    %s20 = sadd.s32 %s19, 1
    %s21 = scalar_select %p18, %s19, %s20
    %p24 = pneg %p18
    %p25 = scmp.eq.s32.totalorder %s9, 1
    %p26 = por %p24, %p25
    %p27 = scmp.ne.s32.totalorder %s19, %s22
    %p28 = scmp.eq.s32.totalorder %s9, 0
    %p29 = por %p27, %p28
    %p30 = scmp.ne.s32.totalorder %s19, %s22
    %p31 = scmp.eq.s32.totalorder %s14, 1
    %p32 = por %p30, %p31
    %p33 = scmp.ne.s32.totalorder %s22, %s23
    %p34 = scmp.eq.s32.totalorder %s14, 0
    %p35 = por %p33, %p34
    %p36 = scmp.ne.s32.totalorder %s22, %s23
    %p37 = scmp.eq.s32.totalorder %s15, 1
    %p38 = por %p36, %p37
    %p40 = scmp.ne.s32.totalorder %s23, %s39
    %p41 = scmp.eq.s32.totalorder %s15, 0
    %p42 = por %p40, %p41
    %s44 = sadd.s32 %s43, 1
    %p47 = scmp.eq.s32.totalorder %s9, 1
    %p48 = scmp.ne.s32.totalorder %s43, %s45
    %p49 = scmp.eq.s32.totalorder %s9, 0
    %p50 = por %p48, %p49
    %p51 = scmp.ne.s32.totalorder %s43, %s45
    %p52 = scmp.eq.s32.totalorder %s14, 1
    %p53 = por %p51, %p52
    %p54 = scmp.ne.s32.totalorder %s45, %s46
    %p55 = scmp.eq.s32.totalorder %s14, 0
    %p56 = por %p54, %p55
    %p57 = scmp.ne.s32.totalorder %s45, %s46
    %p58 = scmp.eq.s32.totalorder %s15, 1
    %p59 = por %p57, %p58
    %p61 = scmp.ne.s32.totalorder %s46, %s60
    %p62 = scmp.eq.s32.totalorder %s15, 0
    %p63 = por %p61, %p62
    %s65 = sadd.s32 %s64, 1
    %p68 = scmp.eq.s32.totalorder %s9, 1
    %p69 = scmp.ne.s32.totalorder %s64, %s66
    %p70 = scmp.eq.s32.totalorder %s9, 0
    %p71 = por %p69, %p70
    %p72 = scmp.ne.s32.totalorder %s64, %s66
    %p73 = scmp.eq.s32.totalorder %s14, 1
    %p74 = por %p72, %p73
    %p75 = scmp.ne.s32.totalorder %s66, %s67
    %p76 = scmp.eq.s32.totalorder %s14, 0
    %p77 = por %p75, %p76
    %p78 = scmp.ne.s32.totalorder %s66, %s67
    %p79 = scmp.eq.s32.totalorder %s15, 1
    %p80 = por %p78, %p79
    %p82 = scmp.ne.s32.totalorder %s67, %s81
    %p83 = scmp.eq.s32.totalorder %s15, 0
    %p84 = por %p82, %p83
    %s85 = ssub.s32 %s9, %s16
    %p86 = scmp.eq.s32.totalorder %s85, 0
    %s88 = sadd.s32 %s87, 1
    %s89 = scalar_select %p86, %s87, %s88
    %p92 = pneg %p86
    %p93 = scmp.eq.s32.totalorder %s9, 1
    %p94 = por %p92, %p93
    %p95 = scmp.ne.s32.totalorder %s87, %s90
    %p96 = scmp.eq.s32.totalorder %s9, 0
    %p97 = por %p95, %p96
    %p98 = scmp.ne.s32.totalorder %s87, %s90
    %p99 = scmp.eq.s32.totalorder %s14, 1
    %p100 = por %p98, %p99
    %p101 = scmp.ne.s32.totalorder %s90, %s91
    %p102 = scmp.eq.s32.totalorder %s14, 0
    %p103 = por %p101, %p102
    %p104 = scmp.ne.s32.totalorder %s90, %s91
    %p105 = scmp.eq.s32.totalorder %s15, 1
    %p106 = por %p104, %p105
    %p108 = scmp.ne.s32.totalorder %s91, %s107
    %p109 = scmp.eq.s32.totalorder %s15, 0
    %p110 = por %p108, %p109
    %p111 = scmp.le.s32.totalorder 1, %s9
    %p112 = scmp.lt.s32.totalorder %s9, 3
    %p113 = pnand %p111, %p112
    %p114 = pneg %p113
    // Predicated region
    $region9: #{tpu_custom_call.1} parent=5 // pred_check
      _
    $region10: #{tpu_custom_call.1} parent=5 // pred_check_branch
      %116 = sbr.rel (%p113) target = $region12
    $region11: #{tpu_custom_call.1} parent=5 // pred_region
      %s117 = ssub.s32 %s9, 1
      // Predicated region
      $region13: #{tpu_custom_call.1} parent=11 // pred_check
        %p118 = pneg %p56
      $region14: #{tpu_custom_call.1} parent=11 // pred_check_branch
        %120 = sbr.rel (%p118) target = $region16
      $region15: #{tpu_custom_call.1} parent=11 // pred_region
        _
      $region16: #{tpu_custom_call.1} parent=11 // pred_fallthru
        _
      // Predicated region
      $region17: #{tpu_custom_call.1} parent=11 // pred_check
        %p121 = pneg %p77
      $region18: #{tpu_custom_call.1} parent=11 // pred_check_branch
        %123 = sbr.rel (%p121) target = $region20
      $region19: #{tpu_custom_call.1} parent=11 // pred_region
        _
      $region20: #{tpu_custom_call.1} parent=11 // pred_fallthru
        _
    $region12: #{tpu_custom_call.1} parent=5 // pred_fallthru
      _
    %p124 = scmp.lt.s32.totalorder %s9, 2
    // Predicated region
    $region21: #{tpu_custom_call.1} parent=5 // pred_check
      %p125 = pneg %p124
    $region22: #{tpu_custom_call.1} parent=5 // pred_check_branch
      %127 = sbr.rel (%p125) target = $region24
    $region23: #{tpu_custom_call.1} parent=5 // pred_region
      // Predicated region
      $region25: #{tpu_custom_call.1} parent=23 // pred_check
        %p128 = pneg %p29
      $region26: #{tpu_custom_call.1} parent=23 // pred_check_branch
        %130 = sbr.rel (%p128) target = $region28
      $region27: #{tpu_custom_call.1} parent=23 // pred_region
        %p131 = scmp.lt.s32.totalorder %s9, 1
        %s132 = scalar_select %p131, %s9, 1
        %s133 = smul.addr %s132, 32
        %s134 = smul.addr %s133, 4
        %s135 = scalar_lea.vmem %s0, %s134
      $region28: #{tpu_custom_call.1} parent=23 // pred_fallthru
        _
    $region24: #{tpu_custom_call.1} parent=5 // pred_fallthru
      _
    %p136 = scmp.le.s32.totalorder 1, %s9
    %p137 = scmp.lt.s32.totalorder %s9, 3
    %p138 = pnand %p136, %p137
    %p139 = pneg %p138
    // Predicated region
    $region29: #{tpu_custom_call.1} parent=5 // pred_check
      _
    $region30: #{tpu_custom_call.1} parent=5 // pred_check_branch
      %141 = sbr.rel (%p138) target = $region32
    $region31: #{tpu_custom_call.1} parent=5 // pred_region
      %s142 = ssub.s32 %s9, 1
      %p143 = scmp.lt.s32.totalorder %s14, 1
      %s144 = scalar_select %p143, %s14, 1
      %s145 = smul.addr %s144, 32
      %s146 = smul.addr %s145, 4
      %s147 = scalar_lea.vmem %s0, %s146
      %p148 = pneg %p35
      %p149 = pneg %p32
      %p150 = pneg %p56
      %p151 = pneg %p53
      %p152 = pneg %p77
      %p153 = pneg %p74
      %p154 = pneg %p103
      %p155 = pneg %p100
      %p156 = scmp.lt.s32.totalorder %s14, 1
      %s157 = scalar_select %p156, %s14, 1
      %s158 = smul.addr %s157, 8
      %s159 = smul.addr %s158, 4
      %s160 = scalar_lea.vmem %s3, %s159
      %p161 = scmp.lt.s32.totalorder %s14, 1
      %s162 = scalar_select %p161, %s14, 1
      %s163 = smul.addr %s162, 32
      %s164 = smul.addr %s163, 4
      %s165 = scalar_lea.vmem %s0, %s164
      %p166 = scmp.lt.s32.totalorder %s14, 1
      %s167 = scalar_select %p166, %s14, 1
      %s168 = smul.addr %s167, 8
      %s169 = smul.addr %s168, 4
      %s170 = scalar_lea.vmem %s3, %s169
      %vm172 = vcmask 7168
      %173 = vst.msk [vmem:[#allocation2] sm:$0xff] %vm172, 0.0
      %174 = vst.msk [vmem:[#allocation2 + $0x8] sm:$0xff] %vm172, 0.0
      %vm175 = vcmask 1024
      %176 = vst.msk [vmem:[#allocation2 + $0x10] sm:$0x3] %vm175, 0.0
      %s177 = scalar_lea.vmem [#allocation2], 408
      %178 = vst.msk [vmem:[%s177] sm:$0xff] %vm172, 0.0
      %179 = vst.msk [vmem:[%s177 + $0x8] sm:$0xff] %vm172, 0.0
      %180 = vst.msk [vmem:[%s177 + $0x10] sm:$0x3] %vm175, 0.0
      %vm181 = vcmask 0
      %182 = vst.msk [vmem:[#allocation2] sm:$0x1] %vm181, 0.0
      %183 = vst.msk [vmem:[#allocation2 + $0x18] sm:$0x1] %vm181, 0.0
      %184 = vst.msk [vmem:[#allocation2 + $0x30] sm:$0x1] %vm181, 0.0
      %185 = vst.msk [vmem:[#allocation2 + $0x48] sm:$0x1] %vm181, 0.0
      %186 = vst.msk [vmem:[#allocation2 + $0x60] sm:$0x1] %vm181, 0.0
      %187 = vst.msk [vmem:[#allocation2 + $0x78] sm:$0x1] %vm181, 0.0
      %188 = vst.msk [vmem:[#allocation2 + $0x90] sm:$0x1] %vm181, 0.0
      %189 = vst.msk [vmem:[#allocation2 + $0xa8] sm:$0x1] %vm181, 0.0
      %190 = vst.msk [vmem:[#allocation2 + $0xc0] sm:$0x1] %vm181, 0.0
      %191 = vst.msk [vmem:[#allocation2 + $0xd8] sm:$0x1] %vm181, 0.0
      %192 = vst.msk [vmem:[#allocation2 + $0xf0] sm:$0x1] %vm181, 0.0
      %193 = vst.msk [vmem:[#allocation2 + $0x108] sm:$0x1] %vm181, 0.0
      %194 = vst.msk [vmem:[#allocation2 + $0x120] sm:$0x1] %vm181, 0.0
      %195 = vst.msk [vmem:[#allocation2 + $0x138] sm:$0x1] %vm181, 0.0
      %196 = vst.msk [vmem:[#allocation2 + $0x150] sm:$0x1] %vm181, 0.0
      %197 = vst.msk [vmem:[#allocation2 + $0x168] sm:$0x1] %vm181, 0.0
      %198 = vst.msk [vmem:[#allocation2 + $0x180] sm:$0x1] %vm181, 0.0
      %199 = vst.msk [vmem:[#allocation2 + $0x198] sm:$0x1] %vm181, 0.0
      %200 = vst.msk [vmem:[#allocation2 + $0x11] sm:$0x1] %vm181, 0.0
      %201 = vst.msk [vmem:[#allocation2 + $0x29] sm:$0x1] %vm181, 0.0
      %202 = vst.msk [vmem:[#allocation2 + $0x41] sm:$0x1] %vm181, 0.0
      %203 = vst.msk [vmem:[#allocation2 + $0x59] sm:$0x1] %vm181, 0.0
      %204 = vst.msk [vmem:[#allocation2 + $0x71] sm:$0x1] %vm181, 0.0
      %205 = vst.msk [vmem:[#allocation2 + $0x89] sm:$0x1] %vm181, 0.0
      %206 = vst.msk [vmem:[#allocation2 + $0xa1] sm:$0x1] %vm181, 0.0
      %207 = vst.msk [vmem:[#allocation2 + $0xb9] sm:$0x1] %vm181, 0.0
      %208 = vst.msk [vmem:[#allocation2 + $0xd1] sm:$0x1] %vm181, 0.0
      %209 = vst.msk [vmem:[#allocation2 + $0xe9] sm:$0x1] %vm181, 0.0
      %210 = vst.msk [vmem:[#allocation2 + $0x101] sm:$0x1] %vm181, 0.0
      %211 = vst.msk [vmem:[#allocation2 + $0x119] sm:$0x1] %vm181, 0.0
      %212 = vst.msk [vmem:[#allocation2 + $0x131] sm:$0x1] %vm181, 0.0
      %213 = vst.msk [vmem:[#allocation2 + $0x149] sm:$0x1] %vm181, 0.0
      %214 = vst.msk [vmem:[#allocation2 + $0x161] sm:$0x1] %vm181, 0.0
      %215 = vst.msk [vmem:[#allocation2 + $0x179] sm:$0x1] %vm181, 0.0
      %216 = vst.msk [vmem:[#allocation2 + $0x191] sm:$0x1] %vm181, 0.0
      %217 = vst.msk [vmem:[#allocation2 + $0x1a9] sm:$0x1] %vm181, 0.0
      %v218 = vld [vmem:[%s165] sm:$0xf]
      %v219 = vld [vmem:[%s165 + $0x4] sm:$0xf]
      %v220 = vld [vmem:[%s165 + $0x8] sm:$0xf]
      %v221 = vld [vmem:[%s165 + $0xc] sm:$0xf]
      %v222 = vld [vmem:[%s165 + $0x10] sm:$0xf]
      %v223 = vld [vmem:[%s165 + $0x14] sm:$0xf]
      %v224 = vld [vmem:[%s165 + $0x18] sm:$0xf]
      %v225 = vld [vmem:[%s165 + $0x1c] sm:$0xf]
      %v226 = vld [vmem:[%s165 + $0x20] sm:$0xf]
      %v227 = vld [vmem:[%s165 + $0x24] sm:$0xf]
      %v228 = vld [vmem:[%s165 + $0x28] sm:$0xf]
      %v229 = vld [vmem:[%s165 + $0x2c] sm:$0xf]
      %v230 = vld [vmem:[%s165 + $0x30] sm:$0xf]
      %v231 = vld [vmem:[%s165 + $0x34] sm:$0xf]
      %v232 = vld [vmem:[%s165 + $0x38] sm:$0xf]
      %v233 = vld [vmem:[%s165 + $0x3c] sm:$0xf]
      %v234 = vld [vmem:[%s165 + $0x40] sm:$0xf]
      %v235 = vld [vmem:[%s165 + $0x44] sm:$0xf]
      %v236 = vld [vmem:[%s165 + $0x48] sm:$0xf]
      %v237 = vld [vmem:[%s165 + $0x4c] sm:$0xf]
      %v238 = vld [vmem:[%s165 + $0x50] sm:$0xf]
      %v239 = vld [vmem:[%s165 + $0x54] sm:$0xf]
      %v240 = vld [vmem:[%s165 + $0x58] sm:$0xf]
      %v241 = vld [vmem:[%s165 + $0x5c] sm:$0xf]
      %v242 = vld [vmem:[%s165 + $0x60] sm:$0xf]
      %v243 = vld [vmem:[%s165 + $0x64] sm:$0xf]
      %v244 = vld [vmem:[%s165 + $0x68] sm:$0xf]
      %v245 = vld [vmem:[%s165 + $0x6c] sm:$0xf]
      %v246 = vld [vmem:[%s165 + $0x70] sm:$0xf]
      %v247 = vld [vmem:[%s165 + $0x74] sm:$0xf]
      %v248 = vld [vmem:[%s165 + $0x78] sm:$0xf]
      %v249 = vld [vmem:[%s165 + $0x7c] sm:$0xf]
      %v250 = vunpack.c.l.bf16 %v218
      %v251 = vunpack.c.l.bf16 %v219
      %v252 = vunpack.c.l.bf16 %v220
      %v253 = vunpack.c.l.bf16 %v221
      %v254 = vunpack.c.l.bf16 %v222
      %v255 = vunpack.c.l.bf16 %v223
      %v256 = vunpack.c.l.bf16 %v224
      %v257 = vunpack.c.l.bf16 %v225
      %v258 = vunpack.c.l.bf16 %v226
      %v259 = vunpack.c.l.bf16 %v227
      %v260 = vunpack.c.l.bf16 %v228
      %v261 = vunpack.c.l.bf16 %v229
      %v262 = vunpack.c.l.bf16 %v230
      %v263 = vunpack.c.l.bf16 %v231
      %v264 = vunpack.c.l.bf16 %v232
      %v265 = vunpack.c.l.bf16 %v233
      %v266 = vunpack.c.l.bf16 %v234
      %v267 = vunpack.c.l.bf16 %v235
      %v268 = vunpack.c.l.bf16 %v236
      %v269 = vunpack.c.l.bf16 %v237
      %v270 = vunpack.c.l.bf16 %v238
      %v271 = vunpack.c.l.bf16 %v239
      %v272 = vunpack.c.l.bf16 %v240
      %v273 = vunpack.c.l.bf16 %v241
      %v274 = vunpack.c.l.bf16 %v242
      %v275 = vunpack.c.l.bf16 %v243
      %v276 = vunpack.c.l.bf16 %v244
      %v277 = vunpack.c.l.bf16 %v245
      %v278 = vunpack.c.l.bf16 %v246
      %v279 = vunpack.c.l.bf16 %v247
      %v280 = vunpack.c.l.bf16 %v248
      %v281 = vunpack.c.l.bf16 %v249
      %s282 = scalar_lea.vmem [#allocation2], 24
      %283 = vst.msk [vmem:[%s282 + $0x1] sm:$0xff] %vm172, %v250
      %284 = vst.msk [vmem:[%s282 + $0x9] sm:$0xff] %vm172, %v251
      %285 = vst.msk [vmem:[%s282 + $0x19] sm:$0xff] %vm172, %v252
      %286 = vst.msk [vmem:[%s282 + $0x21] sm:$0xff] %vm172, %v253
      %287 = vst.msk [vmem:[%s282 + $0x31] sm:$0xff] %vm172, %v254
      %288 = vst.msk [vmem:[%s282 + $0x39] sm:$0xff] %vm172, %v255
      %289 = vst.msk [vmem:[%s282 + $0x49] sm:$0xff] %vm172, %v256
      %290 = vst.msk [vmem:[%s282 + $0x51] sm:$0xff] %vm172, %v257
      %291 = vst.msk [vmem:[%s282 + $0x61] sm:$0xff] %vm172, %v258
      %292 = vst.msk [vmem:[%s282 + $0x69] sm:$0xff] %vm172, %v259
      %293 = vst.msk [vmem:[%s282 + $0x79] sm:$0xff] %vm172, %v260
      %294 = vst.msk [vmem:[%s282 + $0x81] sm:$0xff] %vm172, %v261
      %295 = vst.msk [vmem:[%s282 + $0x91] sm:$0xff] %vm172, %v262
      %296 = vst.msk [vmem:[%s282 + $0x99] sm:$0xff] %vm172, %v263
      %297 = vst.msk [vmem:[%s282 + $0xa9] sm:$0xff] %vm172, %v264
      %298 = vst.msk [vmem:[%s282 + $0xb1] sm:$0xff] %vm172, %v265
      %299 = vst.msk [vmem:[%s282 + $0xc1] sm:$0xff] %vm172, %v266
      %300 = vst.msk [vmem:[%s282 + $0xc9] sm:$0xff] %vm172, %v267
      %301 = vst.msk [vmem:[%s282 + $0xd9] sm:$0xff] %vm172, %v268
      %302 = vst.msk [vmem:[%s282 + $0xe1] sm:$0xff] %vm172, %v269
      %303 = vst.msk [vmem:[%s282 + $0xf1] sm:$0xff] %vm172, %v270
      %304 = vst.msk [vmem:[%s282 + $0xf9] sm:$0xff] %vm172, %v271
      %305 = vst.msk [vmem:[%s282 + $0x109] sm:$0xff] %vm172, %v272
      %306 = vst.msk [vmem:[%s282 + $0x111] sm:$0xff] %vm172, %v273
      %307 = vst.msk [vmem:[%s282 + $0x121] sm:$0xff] %vm172, %v274
      %308 = vst.msk [vmem:[%s282 + $0x129] sm:$0xff] %vm172, %v275
      %309 = vst.msk [vmem:[%s282 + $0x139] sm:$0xff] %vm172, %v276
      %310 = vst.msk [vmem:[%s282 + $0x141] sm:$0xff] %vm172, %v277
      %311 = vst.msk [vmem:[%s282 + $0x151] sm:$0xff] %vm172, %v278
      %312 = vst.msk [vmem:[%s282 + $0x159] sm:$0xff] %vm172, %v279
      %313 = vst.msk [vmem:[%s282 + $0x169] sm:$0xff] %vm172, %v280
      %314 = vst.msk [vmem:[%s282 + $0x171] sm:$0xff] %vm172, %v281
      %v315 = vld [vmem:[#allocation2] sm:$0xff]
      %v316 = vld [vmem:[#allocation2 + $0x8] sm:$0xff]
      %v317 = vld [vmem:[#allocation2 + $0x18] sm:$0xff]
      %v318 = vld [vmem:[#allocation2 + $0x20] sm:$0xff]
      %v319 = vld [vmem:[#allocation2 + $0x30] sm:$0xff]
      %v320 = vld [vmem:[#allocation2 + $0x38] sm:$0xff]
      %v321 = vld [vmem:[#allocation2 + $0x48] sm:$0xff]
      %v322 = vld [vmem:[#allocation2 + $0x50] sm:$0xff]
      %v323 = vld [vmem:[#allocation2 + $0x60] sm:$0xff]
      %v324 = vld [vmem:[#allocation2 + $0x68] sm:$0xff]
      %v325 = vld [vmem:[#allocation2 + $0x78] sm:$0xff]
      %v326 = vld [vmem:[#allocation2 + $0x80] sm:$0xff]
      %v327 = vld [vmem:[#allocation2 + $0x90] sm:$0xff]
      %v328 = vld [vmem:[#allocation2 + $0x98] sm:$0xff]
      %v329 = vld [vmem:[#allocation2 + $0xa8] sm:$0xff]
      %v330 = vld [vmem:[#allocation2 + $0xb0] sm:$0xff]
      %v331 = vld [vmem:[#allocation2 + $0xc0] sm:$0xff]
      %v332 = vld [vmem:[#allocation2 + $0xc8] sm:$0xff]
      %v333 = vld [vmem:[#allocation2 + $0xd8] sm:$0xff]
      %v334 = vld [vmem:[#allocation2 + $0xe0] sm:$0xff]
      %v335 = vld [vmem:[#allocation2 + $0xf0] sm:$0xff]
      %v336 = vld [vmem:[#allocation2 + $0xf8] sm:$0xff]
      %v337 = vld [vmem:[#allocation2 + $0x108] sm:$0xff]
      %v338 = vld [vmem:[#allocation2 + $0x110] sm:$0xff]
      %v339 = vld [vmem:[#allocation2 + $0x120] sm:$0xff]
      %v340 = vld [vmem:[#allocation2 + $0x128] sm:$0xff]
      %v341 = vld [vmem:[#allocation2 + $0x138] sm:$0xff]
      %v342 = vld [vmem:[#allocation2 + $0x140] sm:$0xff]
      %v343 = vld [vmem:[#allocation2 + $0x150] sm:$0xff]
      %v344 = vld [vmem:[#allocation2 + $0x158] sm:$0xff]
      %v345 = vld [vmem:[#allocation2 + $0x168] sm:$0xff]
      %v346 = vld [vmem:[#allocation2 + $0x170] sm:$0xff]
      %347 = vst.msk [vmem:[#allocation3] sm:$0xff] %vm172, %v315
      %348 = vst.msk [vmem:[#allocation3 + $0x8] sm:$0xff] %vm172, %v316
      %349 = vst.msk [vmem:[#allocation3 + $0x10] sm:$0xff] %vm172, %v317
      %350 = vst.msk [vmem:[#allocation3 + $0x18] sm:$0xff] %vm172, %v318
      %351 = vst.msk [vmem:[#allocation3 + $0x20] sm:$0xff] %vm172, %v319
      %352 = vst.msk [vmem:[#allocation3 + $0x28] sm:$0xff] %vm172, %v320
      %353 = vst.msk [vmem:[#allocation3 + $0x30] sm:$0xff] %vm172, %v321
      %354 = vst.msk [vmem:[#allocation3 + $0x38] sm:$0xff] %vm172, %v322
      %355 = vst.msk [vmem:[#allocation3 + $0x40] sm:$0xff] %vm172, %v323
      %356 = vst.msk [vmem:[#allocation3 + $0x48] sm:$0xff] %vm172, %v324
      %357 = vst.msk [vmem:[#allocation3 + $0x50] sm:$0xff] %vm172, %v325
      %358 = vst.msk [vmem:[#allocation3 + $0x58] sm:$0xff] %vm172, %v326
      %359 = vst.msk [vmem:[#allocation3 + $0x60] sm:$0xff] %vm172, %v327
      %360 = vst.msk [vmem:[#allocation3 + $0x68] sm:$0xff] %vm172, %v328
      %361 = vst.msk [vmem:[#allocation3 + $0x70] sm:$0xff] %vm172, %v329
      %362 = vst.msk [vmem:[#allocation3 + $0x78] sm:$0xff] %vm172, %v330
      %363 = vst.msk [vmem:[#allocation3 + $0x80] sm:$0xff] %vm172, %v331
      %364 = vst.msk [vmem:[#allocation3 + $0x88] sm:$0xff] %vm172, %v332
      %365 = vst.msk [vmem:[#allocation3 + $0x90] sm:$0xff] %vm172, %v333
      %366 = vst.msk [vmem:[#allocation3 + $0x98] sm:$0xff] %vm172, %v334
      %367 = vst.msk [vmem:[#allocation3 + $0xa0] sm:$0xff] %vm172, %v335
      %368 = vst.msk [vmem:[#allocation3 + $0xa8] sm:$0xff] %vm172, %v336
      %369 = vst.msk [vmem:[#allocation3 + $0xb0] sm:$0xff] %vm172, %v337
      %370 = vst.msk [vmem:[#allocation3 + $0xb8] sm:$0xff] %vm172, %v338
      %371 = vst.msk [vmem:[#allocation3 + $0xc0] sm:$0xff] %vm172, %v339
      %372 = vst.msk [vmem:[#allocation3 + $0xc8] sm:$0xff] %vm172, %v340
      %373 = vst.msk [vmem:[#allocation3 + $0xd0] sm:$0xff] %vm172, %v341
      %374 = vst.msk [vmem:[#allocation3 + $0xd8] sm:$0xff] %vm172, %v342
      %375 = vst.msk [vmem:[#allocation3 + $0xe0] sm:$0xff] %vm172, %v343
      %376 = vst.msk [vmem:[#allocation3 + $0xe8] sm:$0xff] %vm172, %v344
      %377 = vst.msk [vmem:[#allocation3 + $0xf0] sm:$0xff] %vm172, %v345
      %378 = vst.msk [vmem:[#allocation3 + $0xf8] sm:$0xff] %vm172, %v346
      %v379 = vld [vmem:[#allocation2 + $0x1] sm:$0xff]
      %v380 = vld [vmem:[#allocation2 + $0x9] sm:$0xff]
      %v381 = vld [vmem:[#allocation2 + $0x19] sm:$0xff]
      %v382 = vld [vmem:[#allocation2 + $0x21] sm:$0xff]
      %v383 = vld [vmem:[#allocation2 + $0x31] sm:$0xff]
      %v384 = vld [vmem:[#allocation2 + $0x39] sm:$0xff]
      %v385 = vld [vmem:[#allocation2 + $0x49] sm:$0xff]
      %v386 = vld [vmem:[#allocation2 + $0x51] sm:$0xff]
      %v387 = vld [vmem:[#allocation2 + $0x61] sm:$0xff]
      %v388 = vld [vmem:[#allocation2 + $0x69] sm:$0xff]
      %v389 = vld [vmem:[#allocation2 + $0x79] sm:$0xff]
      %v390 = vld [vmem:[#allocation2 + $0x81] sm:$0xff]
      %v391 = vld [vmem:[#allocation2 + $0x91] sm:$0xff]
      %v392 = vld [vmem:[#allocation2 + $0x99] sm:$0xff]
      %v393 = vld [vmem:[#allocation2 + $0xa9] sm:$0xff]
      %v394 = vld [vmem:[#allocation2 + $0xb1] sm:$0xff]
      %v395 = vld [vmem:[#allocation2 + $0xc1] sm:$0xff]
      %v396 = vld [vmem:[#allocation2 + $0xc9] sm:$0xff]
      %v397 = vld [vmem:[#allocation2 + $0xd9] sm:$0xff]
      %v398 = vld [vmem:[#allocation2 + $0xe1] sm:$0xff]
      %v399 = vld [vmem:[#allocation2 + $0xf1] sm:$0xff]
      %v400 = vld [vmem:[#allocation2 + $0xf9] sm:$0xff]
      %v401 = vld [vmem:[#allocation2 + $0x109] sm:$0xff]
      %v402 = vld [vmem:[#allocation2 + $0x111] sm:$0xff]
      %v403 = vld [vmem:[#allocation2 + $0x121] sm:$0xff]
      %v404 = vld [vmem:[#allocation2 + $0x129] sm:$0xff]
      %v405 = vld [vmem:[#allocation2 + $0x139] sm:$0xff]
      %v406 = vld [vmem:[#allocation2 + $0x141] sm:$0xff]
      %v407 = vld [vmem:[#allocation2 + $0x151] sm:$0xff]
      %v408 = vld [vmem:[#allocation2 + $0x159] sm:$0xff]
      %v409 = vld [vmem:[#allocation2 + $0x169] sm:$0xff]
      %v410 = vld [vmem:[#allocation2 + $0x171] sm:$0xff]
      %443 = vrot.lane.b32.xlu0 %v379, 1
      %v444 = vpop.permute.xlu0 %443
      %445 = vrot.lane.b32.xlu0 %v380, 1
      %v446 = vpop.permute.xlu0 %445
      %447 = vrot.lane.b32.xlu0 %v381, 1
      %v448 = vpop.permute.xlu0 %447
      %449 = vrot.lane.b32.xlu0 %v382, 1
      %v450 = vpop.permute.xlu0 %449
      %451 = vrot.lane.b32.xlu0 %v383, 1
      %v452 = vpop.permute.xlu0 %451
      %453 = vrot.lane.b32.xlu0 %v384, 1
      %v454 = vpop.permute.xlu0 %453
      %455 = vrot.lane.b32.xlu0 %v385, 1
      %v456 = vpop.permute.xlu0 %455
      %457 = vrot.lane.b32.xlu0 %v386, 1
      %v458 = vpop.permute.xlu0 %457
      %459 = vrot.lane.b32.xlu0 %v387, 1
      %v460 = vpop.permute.xlu0 %459
      %461 = vrot.lane.b32.xlu0 %v388, 1
      %v462 = vpop.permute.xlu0 %461
      %463 = vrot.lane.b32.xlu0 %v389, 1
      %v464 = vpop.permute.xlu0 %463
      %465 = vrot.lane.b32.xlu0 %v390, 1
      %v466 = vpop.permute.xlu0 %465
      %467 = vrot.lane.b32.xlu0 %v391, 1
      %v468 = vpop.permute.xlu0 %467
      %469 = vrot.lane.b32.xlu0 %v392, 1
      %v470 = vpop.permute.xlu0 %469
      %471 = vrot.lane.b32.xlu0 %v393, 1
      %v472 = vpop.permute.xlu0 %471
      %473 = vrot.lane.b32.xlu0 %v394, 1
      %v474 = vpop.permute.xlu0 %473
      %475 = vrot.lane.b32.xlu0 %v395, 1
      %v476 = vpop.permute.xlu0 %475
      %477 = vrot.lane.b32.xlu0 %v396, 1
      %v478 = vpop.permute.xlu0 %477
      %479 = vrot.lane.b32.xlu0 %v397, 1
      %v480 = vpop.permute.xlu0 %479
      %481 = vrot.lane.b32.xlu0 %v398, 1
      %v482 = vpop.permute.xlu0 %481
      %483 = vrot.lane.b32.xlu0 %v399, 1
      %v484 = vpop.permute.xlu0 %483
      %485 = vrot.lane.b32.xlu0 %v400, 1
      %v486 = vpop.permute.xlu0 %485
      %487 = vrot.lane.b32.xlu0 %v401, 1
      %v488 = vpop.permute.xlu0 %487
      %489 = vrot.lane.b32.xlu0 %v402, 1
      %v490 = vpop.permute.xlu0 %489
      %491 = vrot.lane.b32.xlu0 %v403, 1
      %v492 = vpop.permute.xlu0 %491
      %493 = vrot.lane.b32.xlu0 %v404, 1
      %v494 = vpop.permute.xlu0 %493
      %495 = vrot.lane.b32.xlu0 %v405, 1
      %v496 = vpop.permute.xlu0 %495
      %497 = vrot.lane.b32.xlu0 %v406, 1
      %v498 = vpop.permute.xlu0 %497
      %499 = vrot.lane.b32.xlu0 %v407, 1
      %v500 = vpop.permute.xlu0 %499
      %501 = vrot.lane.b32.xlu0 %v408, 1
      %v502 = vpop.permute.xlu0 %501
      %503 = vrot.lane.b32.xlu0 %v409, 1
      %v504 = vpop.permute.xlu0 %503
      %505 = vrot.lane.b32.xlu0 %v410, 1
      %v506 = vpop.permute.xlu0 %505
      %vm539 = vcmask 15368
      %540 = vst.msk [vmem:[#allocation3] sm:$0xff] %vm539, %v444
      %541 = vst.msk [vmem:[#allocation3 + $0x8] sm:$0xff] %vm539, %v446
      %542 = vst.msk [vmem:[#allocation3 + $0x10] sm:$0xff] %vm539, %v448
      %543 = vst.msk [vmem:[#allocation3 + $0x18] sm:$0xff] %vm539, %v450
      %544 = vst.msk [vmem:[#allocation3 + $0x20] sm:$0xff] %vm539, %v452
      %545 = vst.msk [vmem:[#allocation3 + $0x28] sm:$0xff] %vm539, %v454
      %546 = vst.msk [vmem:[#allocation3 + $0x30] sm:$0xff] %vm539, %v456
      %547 = vst.msk [vmem:[#allocation3 + $0x38] sm:$0xff] %vm539, %v458
      %548 = vst.msk [vmem:[#allocation3 + $0x40] sm:$0xff] %vm539, %v460
      %549 = vst.msk [vmem:[#allocation3 + $0x48] sm:$0xff] %vm539, %v462
      %550 = vst.msk [vmem:[#allocation3 + $0x50] sm:$0xff] %vm539, %v464
      %551 = vst.msk [vmem:[#allocation3 + $0x58] sm:$0xff] %vm539, %v466
      %552 = vst.msk [vmem:[#allocation3 + $0x60] sm:$0xff] %vm539, %v468
      %553 = vst.msk [vmem:[#allocation3 + $0x68] sm:$0xff] %vm539, %v470
      %554 = vst.msk [vmem:[#allocation3 + $0x70] sm:$0xff] %vm539, %v472
      %555 = vst.msk [vmem:[#allocation3 + $0x78] sm:$0xff] %vm539, %v474
      %556 = vst.msk [vmem:[#allocation3 + $0x80] sm:$0xff] %vm539, %v476
      %557 = vst.msk [vmem:[#allocation3 + $0x88] sm:$0xff] %vm539, %v478
      %558 = vst.msk [vmem:[#allocation3 + $0x90] sm:$0xff] %vm539, %v480
      %559 = vst.msk [vmem:[#allocation3 + $0x98] sm:$0xff] %vm539, %v482
      %560 = vst.msk [vmem:[#allocation3 + $0xa0] sm:$0xff] %vm539, %v484
      %561 = vst.msk [vmem:[#allocation3 + $0xa8] sm:$0xff] %vm539, %v486
      %562 = vst.msk [vmem:[#allocation3 + $0xb0] sm:$0xff] %vm539, %v488
      %563 = vst.msk [vmem:[#allocation3 + $0xb8] sm:$0xff] %vm539, %v490
      %564 = vst.msk [vmem:[#allocation3 + $0xc0] sm:$0xff] %vm539, %v492
      %565 = vst.msk [vmem:[#allocation3 + $0xc8] sm:$0xff] %vm539, %v494
      %566 = vst.msk [vmem:[#allocation3 + $0xd0] sm:$0xff] %vm539, %v496
      %567 = vst.msk [vmem:[#allocation3 + $0xd8] sm:$0xff] %vm539, %v498
      %568 = vst.msk [vmem:[#allocation3 + $0xe0] sm:$0xff] %vm539, %v500
      %569 = vst.msk [vmem:[#allocation3 + $0xe8] sm:$0xff] %vm539, %v502
      %570 = vst.msk [vmem:[#allocation3 + $0xf0] sm:$0xff] %vm539, %v504
      %571 = vst.msk [vmem:[#allocation3 + $0xf8] sm:$0xff] %vm539, %v506
      %v572 = vld [vmem:[#allocation2 + $0x2] sm:$0xff]
      %v573 = vld [vmem:[#allocation2 + $0xa] sm:$0xff]
      %v574 = vld [vmem:[#allocation2 + $0x1a] sm:$0xff]
      %v575 = vld [vmem:[#allocation2 + $0x22] sm:$0xff]
      %v576 = vld [vmem:[#allocation2 + $0x32] sm:$0xff]
      %v577 = vld [vmem:[#allocation2 + $0x3a] sm:$0xff]
      %v578 = vld [vmem:[#allocation2 + $0x4a] sm:$0xff]
      %v579 = vld [vmem:[#allocation2 + $0x52] sm:$0xff]
      %v580 = vld [vmem:[#allocation2 + $0x62] sm:$0xff]
      %v581 = vld [vmem:[#allocation2 + $0x6a] sm:$0xff]
      %v582 = vld [vmem:[#allocation2 + $0x7a] sm:$0xff]
      %v583 = vld [vmem:[#allocation2 + $0x82] sm:$0xff]
      %v584 = vld [vmem:[#allocation2 + $0x92] sm:$0xff]
      %v585 = vld [vmem:[#allocation2 + $0x9a] sm:$0xff]
      %v586 = vld [vmem:[#allocation2 + $0xaa] sm:$0xff]
      %v587 = vld [vmem:[#allocation2 + $0xb2] sm:$0xff]
      %v588 = vld [vmem:[#allocation2 + $0xc2] sm:$0xff]
      %v589 = vld [vmem:[#allocation2 + $0xca] sm:$0xff]
      %v590 = vld [vmem:[#allocation2 + $0xda] sm:$0xff]
      %v591 = vld [vmem:[#allocation2 + $0xe2] sm:$0xff]
      %v592 = vld [vmem:[#allocation2 + $0xf2] sm:$0xff]
      %v593 = vld [vmem:[#allocation2 + $0xfa] sm:$0xff]
      %v594 = vld [vmem:[#allocation2 + $0x10a] sm:$0xff]
      %v595 = vld [vmem:[#allocation2 + $0x112] sm:$0xff]
      %v596 = vld [vmem:[#allocation2 + $0x122] sm:$0xff]
      %v597 = vld [vmem:[#allocation2 + $0x12a] sm:$0xff]
      %v598 = vld [vmem:[#allocation2 + $0x13a] sm:$0xff]
      %v599 = vld [vmem:[#allocation2 + $0x142] sm:$0xff]
      %v600 = vld [vmem:[#allocation2 + $0x152] sm:$0xff]
      %v601 = vld [vmem:[#allocation2 + $0x15a] sm:$0xff]
      %v602 = vld [vmem:[#allocation2 + $0x16a] sm:$0xff]
      %v603 = vld [vmem:[#allocation2 + $0x172] sm:$0xff]
      %636 = vrot.lane.b32.xlu0 %v572, 2
      %v637 = vpop.permute.xlu0 %636
      %638 = vrot.lane.b32.xlu0 %v573, 2
      %v639 = vpop.permute.xlu0 %638
      %640 = vrot.lane.b32.xlu0 %v574, 2
      %v641 = vpop.permute.xlu0 %640
      %642 = vrot.lane.b32.xlu0 %v575, 2
      %v643 = vpop.permute.xlu0 %642
      %644 = vrot.lane.b32.xlu0 %v576, 2
      %v645 = vpop.permute.xlu0 %644
      %646 = vrot.lane.b32.xlu0 %v577, 2
      %v647 = vpop.permute.xlu0 %646
      %648 = vrot.lane.b32.xlu0 %v578, 2
      %v649 = vpop.permute.xlu0 %648
      %650 = vrot.lane.b32.xlu0 %v579, 2
      %v651 = vpop.permute.xlu0 %650
      %652 = vrot.lane.b32.xlu0 %v580, 2
      %v653 = vpop.permute.xlu0 %652
      %654 = vrot.lane.b32.xlu0 %v581, 2
      %v655 = vpop.permute.xlu0 %654
      %656 = vrot.lane.b32.xlu0 %v582, 2
      %v657 = vpop.permute.xlu0 %656
      %658 = vrot.lane.b32.xlu0 %v583, 2
      %v659 = vpop.permute.xlu0 %658
      %660 = vrot.lane.b32.xlu0 %v584, 2
      %v661 = vpop.permute.xlu0 %660
      %662 = vrot.lane.b32.xlu0 %v585, 2
      %v663 = vpop.permute.xlu0 %662
      %664 = vrot.lane.b32.xlu0 %v586, 2
      %v665 = vpop.permute.xlu0 %664
      %666 = vrot.lane.b32.xlu0 %v587, 2
      %v667 = vpop.permute.xlu0 %666
      %668 = vrot.lane.b32.xlu0 %v588, 2
      %v669 = vpop.permute.xlu0 %668
      %670 = vrot.lane.b32.xlu0 %v589, 2
      %v671 = vpop.permute.xlu0 %670
      %672 = vrot.lane.b32.xlu0 %v590, 2
      %v673 = vpop.permute.xlu0 %672
      %674 = vrot.lane.b32.xlu0 %v591, 2
      %v675 = vpop.permute.xlu0 %674
      %676 = vrot.lane.b32.xlu0 %v592, 2
      %v677 = vpop.permute.xlu0 %676
      %678 = vrot.lane.b32.xlu0 %v593, 2
      %v679 = vpop.permute.xlu0 %678
      %680 = vrot.lane.b32.xlu0 %v594, 2
      %v681 = vpop.permute.xlu0 %680
      %682 = vrot.lane.b32.xlu0 %v595, 2
      %v683 = vpop.permute.xlu0 %682
      %684 = vrot.lane.b32.xlu0 %v596, 2
      %v685 = vpop.permute.xlu0 %684
      %686 = vrot.lane.b32.xlu0 %v597, 2
      %v687 = vpop.permute.xlu0 %686
      %688 = vrot.lane.b32.xlu0 %v598, 2
      %v689 = vpop.permute.xlu0 %688
      %690 = vrot.lane.b32.xlu0 %v599, 2
      %v691 = vpop.permute.xlu0 %690
      %692 = vrot.lane.b32.xlu0 %v600, 2
      %v693 = vpop.permute.xlu0 %692
      %694 = vrot.lane.b32.xlu0 %v601, 2
      %v695 = vpop.permute.xlu0 %694
      %696 = vrot.lane.b32.xlu0 %v602, 2
      %v697 = vpop.permute.xlu0 %696
      %698 = vrot.lane.b32.xlu0 %v603, 2
      %v699 = vpop.permute.xlu0 %698
      %vm732 = vcmask 23568
      %733 = vst.msk [vmem:[#allocation3] sm:$0xff] %vm732, %v637
      %734 = vst.msk [vmem:[#allocation3 + $0x8] sm:$0xff] %vm732, %v639
      %735 = vst.msk [vmem:[#allocation3 + $0x10] sm:$0xff] %vm732, %v641
      %736 = vst.msk [vmem:[#allocation3 + $0x18] sm:$0xff] %vm732, %v643
      %737 = vst.msk [vmem:[#allocation3 + $0x20] sm:$0xff] %vm732, %v645
      %738 = vst.msk [vmem:[#allocation3 + $0x28] sm:$0xff] %vm732, %v647
      %739 = vst.msk [vmem:[#allocation3 + $0x30] sm:$0xff] %vm732, %v649
      %740 = vst.msk [vmem:[#allocation3 + $0x38] sm:$0xff] %vm732, %v651
      %741 = vst.msk [vmem:[#allocation3 + $0x40] sm:$0xff] %vm732, %v653
      %742 = vst.msk [vmem:[#allocation3 + $0x48] sm:$0xff] %vm732, %v655
      %743 = vst.msk [vmem:[#allocation3 + $0x50] sm:$0xff] %vm732, %v657
      %744 = vst.msk [vmem:[#allocation3 + $0x58] sm:$0xff] %vm732, %v659
      %745 = vst.msk [vmem:[#allocation3 + $0x60] sm:$0xff] %vm732, %v661
      %746 = vst.msk [vmem:[#allocation3 + $0x68] sm:$0xff] %vm732, %v663
      %747 = vst.msk [vmem:[#allocation3 + $0x70] sm:$0xff] %vm732, %v665
      %748 = vst.msk [vmem:[#allocation3 + $0x78] sm:$0xff] %vm732, %v667
      %749 = vst.msk [vmem:[#allocation3 + $0x80] sm:$0xff] %vm732, %v669
      %750 = vst.msk [vmem:[#allocation3 + $0x88] sm:$0xff] %vm732, %v671
      %751 = vst.msk [vmem:[#allocation3 + $0x90] sm:$0xff] %vm732, %v673
      %752 = vst.msk [vmem:[#allocation3 + $0x98] sm:$0xff] %vm732, %v675
      %753 = vst.msk [vmem:[#allocation3 + $0xa0] sm:$0xff] %vm732, %v677
      %754 = vst.msk [vmem:[#allocation3 + $0xa8] sm:$0xff] %vm732, %v679
      %755 = vst.msk [vmem:[#allocation3 + $0xb0] sm:$0xff] %vm732, %v681
      %756 = vst.msk [vmem:[#allocation3 + $0xb8] sm:$0xff] %vm732, %v683
      %757 = vst.msk [vmem:[#allocation3 + $0xc0] sm:$0xff] %vm732, %v685
      %758 = vst.msk [vmem:[#allocation3 + $0xc8] sm:$0xff] %vm732, %v687
      %759 = vst.msk [vmem:[#allocation3 + $0xd0] sm:$0xff] %vm732, %v689
      %760 = vst.msk [vmem:[#allocation3 + $0xd8] sm:$0xff] %vm732, %v691
      %761 = vst.msk [vmem:[#allocation3 + $0xe0] sm:$0xff] %vm732, %v693
      %762 = vst.msk [vmem:[#allocation3 + $0xe8] sm:$0xff] %vm732, %v695
      %763 = vst.msk [vmem:[#allocation3 + $0xf0] sm:$0xff] %vm732, %v697
      %764 = vst.msk [vmem:[#allocation3 + $0xf8] sm:$0xff] %vm732, %v699
      %v765 = vld [vmem:[%s282] sm:$0xff]
      %v766 = vld [vmem:[%s282 + $0x8] sm:$0xff]
      %v767 = vld [vmem:[%s282 + $0x18] sm:$0xff]
      %v768 = vld [vmem:[%s282 + $0x20] sm:$0xff]
      %v769 = vld [vmem:[%s282 + $0x30] sm:$0xff]
      %v770 = vld [vmem:[%s282 + $0x38] sm:$0xff]
      %v771 = vld [vmem:[%s282 + $0x48] sm:$0xff]
      %v772 = vld [vmem:[%s282 + $0x50] sm:$0xff]
      %v773 = vld [vmem:[%s282 + $0x60] sm:$0xff]
      %v774 = vld [vmem:[%s282 + $0x68] sm:$0xff]
      %v775 = vld [vmem:[%s282 + $0x78] sm:$0xff]
      %v776 = vld [vmem:[%s282 + $0x80] sm:$0xff]
      %v777 = vld [vmem:[%s282 + $0x90] sm:$0xff]
      %v778 = vld [vmem:[%s282 + $0x98] sm:$0xff]
      %v779 = vld [vmem:[%s282 + $0xa8] sm:$0xff]
      %v780 = vld [vmem:[%s282 + $0xb0] sm:$0xff]
      %v781 = vld [vmem:[%s282 + $0xc0] sm:$0xff]
      %v782 = vld [vmem:[%s282 + $0xc8] sm:$0xff]
      %v783 = vld [vmem:[%s282 + $0xd8] sm:$0xff]
      %v784 = vld [vmem:[%s282 + $0xe0] sm:$0xff]
      %v785 = vld [vmem:[%s282 + $0xf0] sm:$0xff]
      %v786 = vld [vmem:[%s282 + $0xf8] sm:$0xff]
      %v787 = vld [vmem:[%s282 + $0x108] sm:$0xff]
      %v788 = vld [vmem:[%s282 + $0x110] sm:$0xff]
      %v789 = vld [vmem:[%s282 + $0x120] sm:$0xff]
      %v790 = vld [vmem:[%s282 + $0x128] sm:$0xff]
      %v791 = vld [vmem:[%s282 + $0x138] sm:$0xff]
      %v792 = vld [vmem:[%s282 + $0x140] sm:$0xff]
      %v793 = vld [vmem:[%s282 + $0x150] sm:$0xff]
      %v794 = vld [vmem:[%s282 + $0x158] sm:$0xff]
      %v795 = vld [vmem:[%s282 + $0x168] sm:$0xff]
      %v796 = vld [vmem:[%s282 + $0x170] sm:$0xff]
      %829 = vrot.lane.b32.xlu0 %v765, 3
      %v830 = vpop.permute.xlu0 %829
      %831 = vrot.lane.b32.xlu0 %v766, 3
      %v832 = vpop.permute.xlu0 %831
      %833 = vrot.lane.b32.xlu0 %v767, 3
      %v834 = vpop.permute.xlu0 %833
      %835 = vrot.lane.b32.xlu0 %v768, 3
      %v836 = vpop.permute.xlu0 %835
      %837 = vrot.lane.b32.xlu0 %v769, 3
      %v838 = vpop.permute.xlu0 %837
      %839 = vrot.lane.b32.xlu0 %v770, 3
      %v840 = vpop.permute.xlu0 %839
      %841 = vrot.lane.b32.xlu0 %v771, 3
      %v842 = vpop.permute.xlu0 %841
      %843 = vrot.lane.b32.xlu0 %v772, 3
      %v844 = vpop.permute.xlu0 %843
      %845 = vrot.lane.b32.xlu0 %v773, 3
      %v846 = vpop.permute.xlu0 %845
      %847 = vrot.lane.b32.xlu0 %v774, 3
      %v848 = vpop.permute.xlu0 %847
      %849 = vrot.lane.b32.xlu0 %v775, 3
      %v850 = vpop.permute.xlu0 %849
      %851 = vrot.lane.b32.xlu0 %v776, 3
      %v852 = vpop.permute.xlu0 %851
      %853 = vrot.lane.b32.xlu0 %v777, 3
      %v854 = vpop.permute.xlu0 %853
      %855 = vrot.lane.b32.xlu0 %v778, 3
      %v856 = vpop.permute.xlu0 %855
      %857 = vrot.lane.b32.xlu0 %v779, 3
      %v858 = vpop.permute.xlu0 %857
      %859 = vrot.lane.b32.xlu0 %v780, 3
      %v860 = vpop.permute.xlu0 %859
      %861 = vrot.lane.b32.xlu0 %v781, 3
      %v862 = vpop.permute.xlu0 %861
      %863 = vrot.lane.b32.xlu0 %v782, 3
      %v864 = vpop.permute.xlu0 %863
      %865 = vrot.lane.b32.xlu0 %v783, 3
      %v866 = vpop.permute.xlu0 %865
      %867 = vrot.lane.b32.xlu0 %v784, 3
      %v868 = vpop.permute.xlu0 %867
      %869 = vrot.lane.b32.xlu0 %v785, 3
      %v870 = vpop.permute.xlu0 %869
      %871 = vrot.lane.b32.xlu0 %v786, 3
      %v872 = vpop.permute.xlu0 %871
      %873 = vrot.lane.b32.xlu0 %v787, 3
      %v874 = vpop.permute.xlu0 %873
      %875 = vrot.lane.b32.xlu0 %v788, 3
      %v876 = vpop.permute.xlu0 %875
      %877 = vrot.lane.b32.xlu0 %v789, 3
      %v878 = vpop.permute.xlu0 %877
      %879 = vrot.lane.b32.xlu0 %v790, 3
      %v880 = vpop.permute.xlu0 %879
      %881 = vrot.lane.b32.xlu0 %v791, 3
      %v882 = vpop.permute.xlu0 %881
      %883 = vrot.lane.b32.xlu0 %v792, 3
      %v884 = vpop.permute.xlu0 %883
      %885 = vrot.lane.b32.xlu0 %v793, 3
      %v886 = vpop.permute.xlu0 %885
      %887 = vrot.lane.b32.xlu0 %v794, 3
      %v888 = vpop.permute.xlu0 %887
      %889 = vrot.lane.b32.xlu0 %v795, 3
      %v890 = vpop.permute.xlu0 %889
      %891 = vrot.lane.b32.xlu0 %v796, 3
      %v892 = vpop.permute.xlu0 %891
      %vm925 = vcmask 31768
      %926 = vst.msk [vmem:[#allocation3] sm:$0xff] %vm925, %v830
      %927 = vst.msk [vmem:[#allocation3 + $0x8] sm:$0xff] %vm925, %v832
      %928 = vst.msk [vmem:[#allocation3 + $0x10] sm:$0xff] %vm925, %v834
      %929 = vst.msk [vmem:[#allocation3 + $0x18] sm:$0xff] %vm925, %v836
      %930 = vst.msk [vmem:[#allocation3 + $0x20] sm:$0xff] %vm925, %v838
      %931 = vst.msk [vmem:[#allocation3 + $0x28] sm:$0xff] %vm925, %v840
      %932 = vst.msk [vmem:[#allocation3 + $0x30] sm:$0xff] %vm925, %v842
      %933 = vst.msk [vmem:[#allocation3 + $0x38] sm:$0xff] %vm925, %v844
      %934 = vst.msk [vmem:[#allocation3 + $0x40] sm:$0xff] %vm925, %v846
      %935 = vst.msk [vmem:[#allocation3 + $0x48] sm:$0xff] %vm925, %v848
      %936 = vst.msk [vmem:[#allocation3 + $0x50] sm:$0xff] %vm925, %v850
      %937 = vst.msk [vmem:[#allocation3 + $0x58] sm:$0xff] %vm925, %v852
      %938 = vst.msk [vmem:[#allocation3 + $0x60] sm:$0xff] %vm925, %v854
      %939 = vst.msk [vmem:[#allocation3 + $0x68] sm:$0xff] %vm925, %v856
      %940 = vst.msk [vmem:[#allocation3 + $0x70] sm:$0xff] %vm925, %v858
      %941 = vst.msk [vmem:[#allocation3 + $0x78] sm:$0xff] %vm925, %v860
      %942 = vst.msk [vmem:[#allocation3 + $0x80] sm:$0xff] %vm925, %v862
      %943 = vst.msk [vmem:[#allocation3 + $0x88] sm:$0xff] %vm925, %v864
      %944 = vst.msk [vmem:[#allocation3 + $0x90] sm:$0xff] %vm925, %v866
      %945 = vst.msk [vmem:[#allocation3 + $0x98] sm:$0xff] %vm925, %v868
      %946 = vst.msk [vmem:[#allocation3 + $0xa0] sm:$0xff] %vm925, %v870
      %947 = vst.msk [vmem:[#allocation3 + $0xa8] sm:$0xff] %vm925, %v872
      %948 = vst.msk [vmem:[#allocation3 + $0xb0] sm:$0xff] %vm925, %v874
      %949 = vst.msk [vmem:[#allocation3 + $0xb8] sm:$0xff] %vm925, %v876
      %950 = vst.msk [vmem:[#allocation3 + $0xc0] sm:$0xff] %vm925, %v878
      %951 = vst.msk [vmem:[#allocation3 + $0xc8] sm:$0xff] %vm925, %v880
      %952 = vst.msk [vmem:[#allocation3 + $0xd0] sm:$0xff] %vm925, %v882
      %953 = vst.msk [vmem:[#allocation3 + $0xd8] sm:$0xff] %vm925, %v884
      %954 = vst.msk [vmem:[#allocation3 + $0xe0] sm:$0xff] %vm925, %v886
      %955 = vst.msk [vmem:[#allocation3 + $0xe8] sm:$0xff] %vm925, %v888
      %956 = vst.msk [vmem:[#allocation3 + $0xf0] sm:$0xff] %vm925, %v890
      %957 = vst.msk [vmem:[#allocation3 + $0xf8] sm:$0xff] %vm925, %v892
      %v958 = vld [vmem:[%s282 + $0x1] sm:$0xff]
      %v959 = vld [vmem:[%s282 + $0x9] sm:$0xff]
      %v960 = vld [vmem:[%s282 + $0x19] sm:$0xff]
      %v961 = vld [vmem:[%s282 + $0x21] sm:$0xff]
      %v962 = vld [vmem:[%s282 + $0x31] sm:$0xff]
      %v963 = vld [vmem:[%s282 + $0x39] sm:$0xff]
      %v964 = vld [vmem:[%s282 + $0x49] sm:$0xff]
      %v965 = vld [vmem:[%s282 + $0x51] sm:$0xff]
      %v966 = vld [vmem:[%s282 + $0x61] sm:$0xff]
      %v967 = vld [vmem:[%s282 + $0x69] sm:$0xff]
      %v968 = vld [vmem:[%s282 + $0x79] sm:$0xff]
      %v969 = vld [vmem:[%s282 + $0x81] sm:$0xff]
      %v970 = vld [vmem:[%s282 + $0x91] sm:$0xff]
      %v971 = vld [vmem:[%s282 + $0x99] sm:$0xff]
      %v972 = vld [vmem:[%s282 + $0xa9] sm:$0xff]
      %v973 = vld [vmem:[%s282 + $0xb1] sm:$0xff]
      %v974 = vld [vmem:[%s282 + $0xc1] sm:$0xff]
      %v975 = vld [vmem:[%s282 + $0xc9] sm:$0xff]
      %v976 = vld [vmem:[%s282 + $0xd9] sm:$0xff]
      %v977 = vld [vmem:[%s282 + $0xe1] sm:$0xff]
      %v978 = vld [vmem:[%s282 + $0xf1] sm:$0xff]
      %v979 = vld [vmem:[%s282 + $0xf9] sm:$0xff]
      %v980 = vld [vmem:[%s282 + $0x109] sm:$0xff]
      %v981 = vld [vmem:[%s282 + $0x111] sm:$0xff]
      %v982 = vld [vmem:[%s282 + $0x121] sm:$0xff]
      %v983 = vld [vmem:[%s282 + $0x129] sm:$0xff]
      %v984 = vld [vmem:[%s282 + $0x139] sm:$0xff]
      %v985 = vld [vmem:[%s282 + $0x141] sm:$0xff]
      %v986 = vld [vmem:[%s282 + $0x151] sm:$0xff]
      %v987 = vld [vmem:[%s282 + $0x159] sm:$0xff]
      %v988 = vld [vmem:[%s282 + $0x169] sm:$0xff]
      %v989 = vld [vmem:[%s282 + $0x171] sm:$0xff]
      %1022 = vrot.lane.b32.xlu0 %v958, 4
      %v1023 = vpop.permute.xlu0 %1022
      %1024 = vrot.lane.b32.xlu0 %v959, 4
      %v1025 = vpop.permute.xlu0 %1024
      %1026 = vrot.lane.b32.xlu0 %v960, 4
      %v1027 = vpop.permute.xlu0 %1026
      %1028 = vrot.lane.b32.xlu0 %v961, 4
      %v1029 = vpop.permute.xlu0 %1028
      %1030 = vrot.lane.b32.xlu0 %v962, 4
      %v1031 = vpop.permute.xlu0 %1030
      %1032 = vrot.lane.b32.xlu0 %v963, 4
      %v1033 = vpop.permute.xlu0 %1032
      %1034 = vrot.lane.b32.xlu0 %v964, 4
      %v1035 = vpop.permute.xlu0 %1034
      %1036 = vrot.lane.b32.xlu0 %v965, 4
      %v1037 = vpop.permute.xlu0 %1036
      %1038 = vrot.lane.b32.xlu0 %v966, 4
      %v1039 = vpop.permute.xlu0 %1038
      %1040 = vrot.lane.b32.xlu0 %v967, 4
      %v1041 = vpop.permute.xlu0 %1040
      %1042 = vrot.lane.b32.xlu0 %v968, 4
      %v1043 = vpop.permute.xlu0 %1042
      %1044 = vrot.lane.b32.xlu0 %v969, 4
      %v1045 = vpop.permute.xlu0 %1044
      %1046 = vrot.lane.b32.xlu0 %v970, 4
      %v1047 = vpop.permute.xlu0 %1046
      %1048 = vrot.lane.b32.xlu0 %v971, 4
      %v1049 = vpop.permute.xlu0 %1048
      %1050 = vrot.lane.b32.xlu0 %v972, 4
      %v1051 = vpop.permute.xlu0 %1050
      %1052 = vrot.lane.b32.xlu0 %v973, 4
      %v1053 = vpop.permute.xlu0 %1052
      %1054 = vrot.lane.b32.xlu0 %v974, 4
      %v1055 = vpop.permute.xlu0 %1054
      %1056 = vrot.lane.b32.xlu0 %v975, 4
      %v1057 = vpop.permute.xlu0 %1056
      %1058 = vrot.lane.b32.xlu0 %v976, 4
      %v1059 = vpop.permute.xlu0 %1058
      %1060 = vrot.lane.b32.xlu0 %v977, 4
      %v1061 = vpop.permute.xlu0 %1060
      %1062 = vrot.lane.b32.xlu0 %v978, 4
      %v1063 = vpop.permute.xlu0 %1062
      %1064 = vrot.lane.b32.xlu0 %v979, 4
      %v1065 = vpop.permute.xlu0 %1064
      %1066 = vrot.lane.b32.xlu0 %v980, 4
      %v1067 = vpop.permute.xlu0 %1066
      %1068 = vrot.lane.b32.xlu0 %v981, 4
      %v1069 = vpop.permute.xlu0 %1068
      %1070 = vrot.lane.b32.xlu0 %v982, 4
      %v1071 = vpop.permute.xlu0 %1070
      %1072 = vrot.lane.b32.xlu0 %v983, 4
      %v1073 = vpop.permute.xlu0 %1072
      %1074 = vrot.lane.b32.xlu0 %v984, 4
      %v1075 = vpop.permute.xlu0 %1074
      %1076 = vrot.lane.b32.xlu0 %v985, 4
      %v1077 = vpop.permute.xlu0 %1076
      %1078 = vrot.lane.b32.xlu0 %v986, 4
      %v1079 = vpop.permute.xlu0 %1078
      %1080 = vrot.lane.b32.xlu0 %v987, 4
      %v1081 = vpop.permute.xlu0 %1080
      %1082 = vrot.lane.b32.xlu0 %v988, 4
      %v1083 = vpop.permute.xlu0 %1082
      %1084 = vrot.lane.b32.xlu0 %v989, 4
      %v1085 = vpop.permute.xlu0 %1084
      %vm1118 = vcmask 39968
      %1119 = vst.msk [vmem:[#allocation3] sm:$0xff] %vm1118, %v1023
      %1120 = vst.msk [vmem:[#allocation3 + $0x8] sm:$0xff] %vm1118, %v1025
      %1121 = vst.msk [vmem:[#allocation3 + $0x10] sm:$0xff] %vm1118, %v1027
      %1122 = vst.msk [vmem:[#allocation3 + $0x18] sm:$0xff] %vm1118, %v1029
      %1123 = vst.msk [vmem:[#allocation3 + $0x20] sm:$0xff] %vm1118, %v1031
      %1124 = vst.msk [vmem:[#allocation3 + $0x28] sm:$0xff] %vm1118, %v1033
      %1125 = vst.msk [vmem:[#allocation3 + $0x30] sm:$0xff] %vm1118, %v1035
      %1126 = vst.msk [vmem:[#allocation3 + $0x38] sm:$0xff] %vm1118, %v1037
      %1127 = vst.msk [vmem:[#allocation3 + $0x40] sm:$0xff] %vm1118, %v1039
      %1128 = vst.msk [vmem:[#allocation3 + $0x48] sm:$0xff] %vm1118, %v1041
      %1129 = vst.msk [vmem:[#allocation3 + $0x50] sm:$0xff] %vm1118, %v1043
      %1130 = vst.msk [vmem:[#allocation3 + $0x58] sm:$0xff] %vm1118, %v1045
      %1131 = vst.msk [vmem:[#allocation3 + $0x60] sm:$0xff] %vm1118, %v1047
      %1132 = vst.msk [vmem:[#allocation3 + $0x68] sm:$0xff] %vm1118, %v1049
      %1133 = vst.msk [vmem:[#allocation3 + $0x70] sm:$0xff] %vm1118, %v1051
      %1134 = vst.msk [vmem:[#allocation3 + $0x78] sm:$0xff] %vm1118, %v1053
      %1135 = vst.msk [vmem:[#allocation3 + $0x80] sm:$0xff] %vm1118, %v1055
      %1136 = vst.msk [vmem:[#allocation3 + $0x88] sm:$0xff] %vm1118, %v1057
      %1137 = vst.msk [vmem:[#allocation3 + $0x90] sm:$0xff] %vm1118, %v1059
      %1138 = vst.msk [vmem:[#allocation3 + $0x98] sm:$0xff] %vm1118, %v1061
      %1139 = vst.msk [vmem:[#allocation3 + $0xa0] sm:$0xff] %vm1118, %v1063
      %1140 = vst.msk [vmem:[#allocation3 + $0xa8] sm:$0xff] %vm1118, %v1065
      %1141 = vst.msk [vmem:[#allocation3 + $0xb0] sm:$0xff] %vm1118, %v1067
      %1142 = vst.msk [vmem:[#allocation3 + $0xb8] sm:$0xff] %vm1118, %v1069
      %1143 = vst.msk [vmem:[#allocation3 + $0xc0] sm:$0xff] %vm1118, %v1071
      %1144 = vst.msk [vmem:[#allocation3 + $0xc8] sm:$0xff] %vm1118, %v1073
      %1145 = vst.msk [vmem:[#allocation3 + $0xd0] sm:$0xff] %vm1118, %v1075
      %1146 = vst.msk [vmem:[#allocation3 + $0xd8] sm:$0xff] %vm1118, %v1077
      %1147 = vst.msk [vmem:[#allocation3 + $0xe0] sm:$0xff] %vm1118, %v1079
      %1148 = vst.msk [vmem:[#allocation3 + $0xe8] sm:$0xff] %vm1118, %v1081
      %1149 = vst.msk [vmem:[#allocation3 + $0xf0] sm:$0xff] %vm1118, %v1083
      %1150 = vst.msk [vmem:[#allocation3 + $0xf8] sm:$0xff] %vm1118, %v1085
      %v1151 = vld [vmem:[%s282 + $0x2] sm:$0xff]
      %v1152 = vld [vmem:[%s282 + $0xa] sm:$0xff]
      %v1153 = vld [vmem:[%s282 + $0x1a] sm:$0xff]
      %v1154 = vld [vmem:[%s282 + $0x22] sm:$0xff]
      %v1155 = vld [vmem:[%s282 + $0x32] sm:$0xff]
      %v1156 = vld [vmem:[%s282 + $0x3a] sm:$0xff]
      %v1157 = vld [vmem:[%s282 + $0x4a] sm:$0xff]
      %v1158 = vld [vmem:[%s282 + $0x52] sm:$0xff]
      %v1159 = vld [vmem:[%s282 + $0x62] sm:$0xff]
      %v1160 = vld [vmem:[%s282 + $0x6a] sm:$0xff]
      %v1161 = vld [vmem:[%s282 + $0x7a] sm:$0xff]
      %v1162 = vld [vmem:[%s282 + $0x82] sm:$0xff]
      %v1163 = vld [vmem:[%s282 + $0x92] sm:$0xff]
      %v1164 = vld [vmem:[%s282 + $0x9a] sm:$0xff]
      %v1165 = vld [vmem:[%s282 + $0xaa] sm:$0xff]
      %v1166 = vld [vmem:[%s282 + $0xb2] sm:$0xff]
      %v1167 = vld [vmem:[%s282 + $0xc2] sm:$0xff]
      %v1168 = vld [vmem:[%s282 + $0xca] sm:$0xff]
      %v1169 = vld [vmem:[%s282 + $0xda] sm:$0xff]
      %v1170 = vld [vmem:[%s282 + $0xe2] sm:$0xff]
      %v1171 = vld [vmem:[%s282 + $0xf2] sm:$0xff]
      %v1172 = vld [vmem:[%s282 + $0xfa] sm:$0xff]
      %v1173 = vld [vmem:[%s282 + $0x10a] sm:$0xff]
      %v1174 = vld [vmem:[%s282 + $0x112] sm:$0xff]
      %v1175 = vld [vmem:[%s282 + $0x122] sm:$0xff]
      %v1176 = vld [vmem:[%s282 + $0x12a] sm:$0xff]
      %v1177 = vld [vmem:[%s282 + $0x13a] sm:$0xff]
      %v1178 = vld [vmem:[%s282 + $0x142] sm:$0xff]
      %v1179 = vld [vmem:[%s282 + $0x152] sm:$0xff]
      %v1180 = vld [vmem:[%s282 + $0x15a] sm:$0xff]
      %v1181 = vld [vmem:[%s282 + $0x16a] sm:$0xff]
      %v1182 = vld [vmem:[%s282 + $0x172] sm:$0xff]
      %1215 = vrot.lane.b32.xlu0 %v1151, 5
      %v1216 = vpop.permute.xlu0 %1215
      %1217 = vrot.lane.b32.xlu0 %v1152, 5
      %v1218 = vpop.permute.xlu0 %1217
      %1219 = vrot.lane.b32.xlu0 %v1153, 5
      %v1220 = vpop.permute.xlu0 %1219
      %1221 = vrot.lane.b32.xlu0 %v1154, 5
      %v1222 = vpop.permute.xlu0 %1221
      %1223 = vrot.lane.b32.xlu0 %v1155, 5
      %v1224 = vpop.permute.xlu0 %1223
      %1225 = vrot.lane.b32.xlu0 %v1156, 5
      %v1226 = vpop.permute.xlu0 %1225
      %1227 = vrot.lane.b32.xlu0 %v1157, 5
      %v1228 = vpop.permute.xlu0 %1227
      %1229 = vrot.lane.b32.xlu0 %v1158, 5
      %v1230 = vpop.permute.xlu0 %1229
      %1231 = vrot.lane.b32.xlu0 %v1159, 5
      %v1232 = vpop.permute.xlu0 %1231
      %1233 = vrot.lane.b32.xlu0 %v1160, 5
      %v1234 = vpop.permute.xlu0 %1233
      %1235 = vrot.lane.b32.xlu0 %v1161, 5
      %v1236 = vpop.permute.xlu0 %1235
      %1237 = vrot.lane.b32.xlu0 %v1162, 5
      %v1238 = vpop.permute.xlu0 %1237
      %1239 = vrot.lane.b32.xlu0 %v1163, 5
      %v1240 = vpop.permute.xlu0 %1239
      %1241 = vrot.lane.b32.xlu0 %v1164, 5
      %v1242 = vpop.permute.xlu0 %1241
      %1243 = vrot.lane.b32.xlu0 %v1165, 5
      %v1244 = vpop.permute.xlu0 %1243
      %1245 = vrot.lane.b32.xlu0 %v1166, 5
      %v1246 = vpop.permute.xlu0 %1245
      %1247 = vrot.lane.b32.xlu0 %v1167, 5
      %v1248 = vpop.permute.xlu0 %1247
      %1249 = vrot.lane.b32.xlu0 %v1168, 5
      %v1250 = vpop.permute.xlu0 %1249
      %1251 = vrot.lane.b32.xlu0 %v1169, 5
      %v1252 = vpop.permute.xlu0 %1251
      %1253 = vrot.lane.b32.xlu0 %v1170, 5
      %v1254 = vpop.permute.xlu0 %1253
      %1255 = vrot.lane.b32.xlu0 %v1171, 5
      %v1256 = vpop.permute.xlu0 %1255
      %1257 = vrot.lane.b32.xlu0 %v1172, 5
      %v1258 = vpop.permute.xlu0 %1257
      %1259 = vrot.lane.b32.xlu0 %v1173, 5
      %v1260 = vpop.permute.xlu0 %1259
      %1261 = vrot.lane.b32.xlu0 %v1174, 5
      %v1262 = vpop.permute.xlu0 %1261
      %1263 = vrot.lane.b32.xlu0 %v1175, 5
      %v1264 = vpop.permute.xlu0 %1263
      %1265 = vrot.lane.b32.xlu0 %v1176, 5
      %v1266 = vpop.permute.xlu0 %1265
      %1267 = vrot.lane.b32.xlu0 %v1177, 5
      %v1268 = vpop.permute.xlu0 %1267
      %1269 = vrot.lane.b32.xlu0 %v1178, 5
      %v1270 = vpop.permute.xlu0 %1269
      %1271 = vrot.lane.b32.xlu0 %v1179, 5
      %v1272 = vpop.permute.xlu0 %1271
      %1273 = vrot.lane.b32.xlu0 %v1180, 5
      %v1274 = vpop.permute.xlu0 %1273
      %1275 = vrot.lane.b32.xlu0 %v1181, 5
      %v1276 = vpop.permute.xlu0 %1275
      %1277 = vrot.lane.b32.xlu0 %v1182, 5
      %v1278 = vpop.permute.xlu0 %1277
      %vm1311 = vcmask 48168
      %1312 = vst.msk [vmem:[#allocation3] sm:$0xff] %vm1311, %v1216
      %1313 = vst.msk [vmem:[#allocation3 + $0x8] sm:$0xff] %vm1311, %v1218
      %1314 = vst.msk [vmem:[#allocation3 + $0x10] sm:$0xff] %vm1311, %v1220
      %1315 = vst.msk [vmem:[#allocation3 + $0x18] sm:$0xff] %vm1311, %v1222
      %1316 = vst.msk [vmem:[#allocation3 + $0x20] sm:$0xff] %vm1311, %v1224
      %1317 = vst.msk [vmem:[#allocation3 + $0x28] sm:$0xff] %vm1311, %v1226
      %1318 = vst.msk [vmem:[#allocation3 + $0x30] sm:$0xff] %vm1311, %v1228
      %1319 = vst.msk [vmem:[#allocation3 + $0x38] sm:$0xff] %vm1311, %v1230
      %1320 = vst.msk [vmem:[#allocation3 + $0x40] sm:$0xff] %vm1311, %v1232
      %1321 = vst.msk [vmem:[#allocation3 + $0x48] sm:$0xff] %vm1311, %v1234
      %1322 = vst.msk [vmem:[#allocation3 + $0x50] sm:$0xff] %vm1311, %v1236
      %1323 = vst.msk [vmem:[#allocation3 + $0x58] sm:$0xff] %vm1311, %v1238
      %1324 = vst.msk [vmem:[#allocation3 + $0x60] sm:$0xff] %vm1311, %v1240
      %1325 = vst.msk [vmem:[#allocation3 + $0x68] sm:$0xff] %vm1311, %v1242
      %1326 = vst.msk [vmem:[#allocation3 + $0x70] sm:$0xff] %vm1311, %v1244
      %1327 = vst.msk [vmem:[#allocation3 + $0x78] sm:$0xff] %vm1311, %v1246
      %1328 = vst.msk [vmem:[#allocation3 + $0x80] sm:$0xff] %vm1311, %v1248
      %1329 = vst.msk [vmem:[#allocation3 + $0x88] sm:$0xff] %vm1311, %v1250
      %1330 = vst.msk [vmem:[#allocation3 + $0x90] sm:$0xff] %vm1311, %v1252
      %1331 = vst.msk [vmem:[#allocation3 + $0x98] sm:$0xff] %vm1311, %v1254
      %1332 = vst.msk [vmem:[#allocation3 + $0xa0] sm:$0xff] %vm1311, %v1256
      %1333 = vst.msk [vmem:[#allocation3 + $0xa8] sm:$0xff] %vm1311, %v1258
      %1334 = vst.msk [vmem:[#allocation3 + $0xb0] sm:$0xff] %vm1311, %v1260
      %1335 = vst.msk [vmem:[#allocation3 + $0xb8] sm:$0xff] %vm1311, %v1262
      %1336 = vst.msk [vmem:[#allocation3 + $0xc0] sm:$0xff] %vm1311, %v1264
      %1337 = vst.msk [vmem:[#allocation3 + $0xc8] sm:$0xff] %vm1311, %v1266
      %1338 = vst.msk [vmem:[#allocation3 + $0xd0] sm:$0xff] %vm1311, %v1268
      %1339 = vst.msk [vmem:[#allocation3 + $0xd8] sm:$0xff] %vm1311, %v1270
      %1340 = vst.msk [vmem:[#allocation3 + $0xe0] sm:$0xff] %vm1311, %v1272
      %1341 = vst.msk [vmem:[#allocation3 + $0xe8] sm:$0xff] %vm1311, %v1274
      %1342 = vst.msk [vmem:[#allocation3 + $0xf0] sm:$0xff] %vm1311, %v1276
      %1343 = vst.msk [vmem:[#allocation3 + $0xf8] sm:$0xff] %vm1311, %v1278
      %s1344 = scalar_lea.vmem [#allocation2], 48
      %v1345 = vld [vmem:[%s1344] sm:$0xff]
      %v1346 = vld [vmem:[%s1344 + $0x8] sm:$0xff]
      %v1347 = vld [vmem:[%s1344 + $0x18] sm:$0xff]
      %v1348 = vld [vmem:[%s1344 + $0x20] sm:$0xff]
      %v1349 = vld [vmem:[%s1344 + $0x30] sm:$0xff]
      %v1350 = vld [vmem:[%s1344 + $0x38] sm:$0xff]
      %v1351 = vld [vmem:[%s1344 + $0x48] sm:$0xff]
      %v1352 = vld [vmem:[%s1344 + $0x50] sm:$0xff]
      %v1353 = vld [vmem:[%s1344 + $0x60] sm:$0xff]
      %v1354 = vld [vmem:[%s1344 + $0x68] sm:$0xff]
      %v1355 = vld [vmem:[%s1344 + $0x78] sm:$0xff]
      %v1356 = vld [vmem:[%s1344 + $0x80] sm:$0xff]
      %v1357 = vld [vmem:[%s1344 + $0x90] sm:$0xff]
      %v1358 = vld [vmem:[%s1344 + $0x98] sm:$0xff]
      %v1359 = vld [vmem:[%s1344 + $0xa8] sm:$0xff]
      %v1360 = vld [vmem:[%s1344 + $0xb0] sm:$0xff]
      %v1361 = vld [vmem:[%s1344 + $0xc0] sm:$0xff]
      %v1362 = vld [vmem:[%s1344 + $0xc8] sm:$0xff]
      %v1363 = vld [vmem:[%s1344 + $0xd8] sm:$0xff]
      %v1364 = vld [vmem:[%s1344 + $0xe0] sm:$0xff]
      %v1365 = vld [vmem:[%s1344 + $0xf0] sm:$0xff]
      %v1366 = vld [vmem:[%s1344 + $0xf8] sm:$0xff]
      %v1367 = vld [vmem:[%s1344 + $0x108] sm:$0xff]
      %v1368 = vld [vmem:[%s1344 + $0x110] sm:$0xff]
      %v1369 = vld [vmem:[%s1344 + $0x120] sm:$0xff]
      %v1370 = vld [vmem:[%s1344 + $0x128] sm:$0xff]
      %v1371 = vld [vmem:[%s1344 + $0x138] sm:$0xff]
      %v1372 = vld [vmem:[%s1344 + $0x140] sm:$0xff]
      %v1373 = vld [vmem:[%s1344 + $0x150] sm:$0xff]
      %v1374 = vld [vmem:[%s1344 + $0x158] sm:$0xff]
      %v1375 = vld [vmem:[%s1344 + $0x168] sm:$0xff]
      %v1376 = vld [vmem:[%s1344 + $0x170] sm:$0xff]
      %1409 = vrot.lane.b32.xlu0 %v1345, 6
      %v1410 = vpop.permute.xlu0 %1409
      %1411 = vrot.lane.b32.xlu0 %v1346, 6
      %v1412 = vpop.permute.xlu0 %1411
      %1413 = vrot.lane.b32.xlu0 %v1347, 6
      %v1414 = vpop.permute.xlu0 %1413
      %1415 = vrot.lane.b32.xlu0 %v1348, 6
      %v1416 = vpop.permute.xlu0 %1415
      %1417 = vrot.lane.b32.xlu0 %v1349, 6
      %v1418 = vpop.permute.xlu0 %1417
      %1419 = vrot.lane.b32.xlu0 %v1350, 6
      %v1420 = vpop.permute.xlu0 %1419
      %1421 = vrot.lane.b32.xlu0 %v1351, 6
      %v1422 = vpop.permute.xlu0 %1421
      %1423 = vrot.lane.b32.xlu0 %v1352, 6
      %v1424 = vpop.permute.xlu0 %1423
      %1425 = vrot.lane.b32.xlu0 %v1353, 6
      %v1426 = vpop.permute.xlu0 %1425
      %1427 = vrot.lane.b32.xlu0 %v1354, 6
      %v1428 = vpop.permute.xlu0 %1427
      %1429 = vrot.lane.b32.xlu0 %v1355, 6
      %v1430 = vpop.permute.xlu0 %1429
      %1431 = vrot.lane.b32.xlu0 %v1356, 6
      %v1432 = vpop.permute.xlu0 %1431
      %1433 = vrot.lane.b32.xlu0 %v1357, 6
      %v1434 = vpop.permute.xlu0 %1433
      %1435 = vrot.lane.b32.xlu0 %v1358, 6
      %v1436 = vpop.permute.xlu0 %1435
      %1437 = vrot.lane.b32.xlu0 %v1359, 6
      %v1438 = vpop.permute.xlu0 %1437
      %1439 = vrot.lane.b32.xlu0 %v1360, 6
      %v1440 = vpop.permute.xlu0 %1439
      %1441 = vrot.lane.b32.xlu0 %v1361, 6
      %v1442 = vpop.permute.xlu0 %1441
      %1443 = vrot.lane.b32.xlu0 %v1362, 6
      %v1444 = vpop.permute.xlu0 %1443
      %1445 = vrot.lane.b32.xlu0 %v1363, 6
      %v1446 = vpop.permute.xlu0 %1445
      %1447 = vrot.lane.b32.xlu0 %v1364, 6
      %v1448 = vpop.permute.xlu0 %1447
      %1449 = vrot.lane.b32.xlu0 %v1365, 6
      %v1450 = vpop.permute.xlu0 %1449
      %1451 = vrot.lane.b32.xlu0 %v1366, 6
      %v1452 = vpop.permute.xlu0 %1451
      %1453 = vrot.lane.b32.xlu0 %v1367, 6
      %v1454 = vpop.permute.xlu0 %1453
      %1455 = vrot.lane.b32.xlu0 %v1368, 6
      %v1456 = vpop.permute.xlu0 %1455
      %1457 = vrot.lane.b32.xlu0 %v1369, 6
      %v1458 = vpop.permute.xlu0 %1457
      %1459 = vrot.lane.b32.xlu0 %v1370, 6
      %v1460 = vpop.permute.xlu0 %1459
      %1461 = vrot.lane.b32.xlu0 %v1371, 6
      %v1462 = vpop.permute.xlu0 %1461
      %1463 = vrot.lane.b32.xlu0 %v1372, 6
      %v1464 = vpop.permute.xlu0 %1463
      %1465 = vrot.lane.b32.xlu0 %v1373, 6
      %v1466 = vpop.permute.xlu0 %1465
      %1467 = vrot.lane.b32.xlu0 %v1374, 6
      %v1468 = vpop.permute.xlu0 %1467
      %1469 = vrot.lane.b32.xlu0 %v1375, 6
      %v1470 = vpop.permute.xlu0 %1469
      %1471 = vrot.lane.b32.xlu0 %v1376, 6
      %v1472 = vpop.permute.xlu0 %1471
      %vm1505 = vcmask 56368
      %1506 = vst.msk [vmem:[#allocation3] sm:$0xff] %vm1505, %v1410
      %1507 = vst.msk [vmem:[#allocation3 + $0x8] sm:$0xff] %vm1505, %v1412
      %1508 = vst.msk [vmem:[#allocation3 + $0x10] sm:$0xff] %vm1505, %v1414
      %1509 = vst.msk [vmem:[#allocation3 + $0x18] sm:$0xff] %vm1505, %v1416
      %1510 = vst.msk [vmem:[#allocation3 + $0x20] sm:$0xff] %vm1505, %v1418
      %1511 = vst.msk [vmem:[#allocation3 + $0x28] sm:$0xff] %vm1505, %v1420
      %1512 = vst.msk [vmem:[#allocation3 + $0x30] sm:$0xff] %vm1505, %v1422
      %1513 = vst.msk [vmem:[#allocation3 + $0x38] sm:$0xff] %vm1505, %v1424
      %1514 = vst.msk [vmem:[#allocation3 + $0x40] sm:$0xff] %vm1505, %v1426
      %1515 = vst.msk [vmem:[#allocation3 + $0x48] sm:$0xff] %vm1505, %v1428
      %1516 = vst.msk [vmem:[#allocation3 + $0x50] sm:$0xff] %vm1505, %v1430
      %1517 = vst.msk [vmem:[#allocation3 + $0x58] sm:$0xff] %vm1505, %v1432
      %1518 = vst.msk [vmem:[#allocation3 + $0x60] sm:$0xff] %vm1505, %v1434
      %1519 = vst.msk [vmem:[#allocation3 + $0x68] sm:$0xff] %vm1505, %v1436
      %1520 = vst.msk [vmem:[#allocation3 + $0x70] sm:$0xff] %vm1505, %v1438
      %1521 = vst.msk [vmem:[#allocation3 + $0x78] sm:$0xff] %vm1505, %v1440
      %1522 = vst.msk [vmem:[#allocation3 + $0x80] sm:$0xff] %vm1505, %v1442
      %1523 = vst.msk [vmem:[#allocation3 + $0x88] sm:$0xff] %vm1505, %v1444
      %1524 = vst.msk [vmem:[#allocation3 + $0x90] sm:$0xff] %vm1505, %v1446
      %1525 = vst.msk [vmem:[#allocation3 + $0x98] sm:$0xff] %vm1505, %v1448
      %1526 = vst.msk [vmem:[#allocation3 + $0xa0] sm:$0xff] %vm1505, %v1450
      %1527 = vst.msk [vmem:[#allocation3 + $0xa8] sm:$0xff] %vm1505, %v1452
      %1528 = vst.msk [vmem:[#allocation3 + $0xb0] sm:$0xff] %vm1505, %v1454
      %1529 = vst.msk [vmem:[#allocation3 + $0xb8] sm:$0xff] %vm1505, %v1456
      %1530 = vst.msk [vmem:[#allocation3 + $0xc0] sm:$0xff] %vm1505, %v1458
      %1531 = vst.msk [vmem:[#allocation3 + $0xc8] sm:$0xff] %vm1505, %v1460
      %1532 = vst.msk [vmem:[#allocation3 + $0xd0] sm:$0xff] %vm1505, %v1462
      %1533 = vst.msk [vmem:[#allocation3 + $0xd8] sm:$0xff] %vm1505, %v1464
      %1534 = vst.msk [vmem:[#allocation3 + $0xe0] sm:$0xff] %vm1505, %v1466
      %1535 = vst.msk [vmem:[#allocation3 + $0xe8] sm:$0xff] %vm1505, %v1468
      %1536 = vst.msk [vmem:[#allocation3 + $0xf0] sm:$0xff] %vm1505, %v1470
      %1537 = vst.msk [vmem:[#allocation3 + $0xf8] sm:$0xff] %vm1505, %v1472
      %v1538 = vld [vmem:[%s1344 + $0x1] sm:$0xff]
      %v1539 = vld [vmem:[%s1344 + $0x9] sm:$0xff]
      %v1540 = vld [vmem:[%s1344 + $0x19] sm:$0xff]
      %v1541 = vld [vmem:[%s1344 + $0x21] sm:$0xff]
      %v1542 = vld [vmem:[%s1344 + $0x31] sm:$0xff]
      %v1543 = vld [vmem:[%s1344 + $0x39] sm:$0xff]
      %v1544 = vld [vmem:[%s1344 + $0x49] sm:$0xff]
      %v1545 = vld [vmem:[%s1344 + $0x51] sm:$0xff]
      %v1546 = vld [vmem:[%s1344 + $0x61] sm:$0xff]
      %v1547 = vld [vmem:[%s1344 + $0x69] sm:$0xff]
      %v1548 = vld [vmem:[%s1344 + $0x79] sm:$0xff]
      %v1549 = vld [vmem:[%s1344 + $0x81] sm:$0xff]
      %v1550 = vld [vmem:[%s1344 + $0x91] sm:$0xff]
      %v1551 = vld [vmem:[%s1344 + $0x99] sm:$0xff]
      %v1552 = vld [vmem:[%s1344 + $0xa9] sm:$0xff]
      %v1553 = vld [vmem:[%s1344 + $0xb1] sm:$0xff]
      %v1554 = vld [vmem:[%s1344 + $0xc1] sm:$0xff]
      %v1555 = vld [vmem:[%s1344 + $0xc9] sm:$0xff]
      %v1556 = vld [vmem:[%s1344 + $0xd9] sm:$0xff]
      %v1557 = vld [vmem:[%s1344 + $0xe1] sm:$0xff]
      %v1558 = vld [vmem:[%s1344 + $0xf1] sm:$0xff]
      %v1559 = vld [vmem:[%s1344 + $0xf9] sm:$0xff]
      %v1560 = vld [vmem:[%s1344 + $0x109] sm:$0xff]
      %v1561 = vld [vmem:[%s1344 + $0x111] sm:$0xff]
      %v1562 = vld [vmem:[%s1344 + $0x121] sm:$0xff]
      %v1563 = vld [vmem:[%s1344 + $0x129] sm:$0xff]
      %v1564 = vld [vmem:[%s1344 + $0x139] sm:$0xff]
      %v1565 = vld [vmem:[%s1344 + $0x141] sm:$0xff]
      %v1566 = vld [vmem:[%s1344 + $0x151] sm:$0xff]
      %v1567 = vld [vmem:[%s1344 + $0x159] sm:$0xff]
      %v1568 = vld [vmem:[%s1344 + $0x169] sm:$0xff]
      %v1569 = vld [vmem:[%s1344 + $0x171] sm:$0xff]
      %1602 = vrot.lane.b32.xlu0 %v1538, 7
      %v1603 = vpop.permute.xlu0 %1602
      %1604 = vrot.lane.b32.xlu0 %v1539, 7
      %v1605 = vpop.permute.xlu0 %1604
      %1606 = vrot.lane.b32.xlu0 %v1540, 7
      %v1607 = vpop.permute.xlu0 %1606
      %1608 = vrot.lane.b32.xlu0 %v1541, 7
      %v1609 = vpop.permute.xlu0 %1608
      %1610 = vrot.lane.b32.xlu0 %v1542, 7
      %v1611 = vpop.permute.xlu0 %1610
      %1612 = vrot.lane.b32.xlu0 %v1543, 7
      %v1613 = vpop.permute.xlu0 %1612
      %1614 = vrot.lane.b32.xlu0 %v1544, 7
      %v1615 = vpop.permute.xlu0 %1614
      %1616 = vrot.lane.b32.xlu0 %v1545, 7
      %v1617 = vpop.permute.xlu0 %1616
      %1618 = vrot.lane.b32.xlu0 %v1546, 7
      %v1619 = vpop.permute.xlu0 %1618
      %1620 = vrot.lane.b32.xlu0 %v1547, 7
      %v1621 = vpop.permute.xlu0 %1620
      %1622 = vrot.lane.b32.xlu0 %v1548, 7
      %v1623 = vpop.permute.xlu0 %1622
      %1624 = vrot.lane.b32.xlu0 %v1549, 7
      %v1625 = vpop.permute.xlu0 %1624
      %1626 = vrot.lane.b32.xlu0 %v1550, 7
      %v1627 = vpop.permute.xlu0 %1626
      %1628 = vrot.lane.b32.xlu0 %v1551, 7
      %v1629 = vpop.permute.xlu0 %1628
      %1630 = vrot.lane.b32.xlu0 %v1552, 7
      %v1631 = vpop.permute.xlu0 %1630
      %1632 = vrot.lane.b32.xlu0 %v1553, 7
      %v1633 = vpop.permute.xlu0 %1632
      %1634 = vrot.lane.b32.xlu0 %v1554, 7
      %v1635 = vpop.permute.xlu0 %1634
      %1636 = vrot.lane.b32.xlu0 %v1555, 7
      %v1637 = vpop.permute.xlu0 %1636
      %1638 = vrot.lane.b32.xlu0 %v1556, 7
      %v1639 = vpop.permute.xlu0 %1638
      %1640 = vrot.lane.b32.xlu0 %v1557, 7
      %v1641 = vpop.permute.xlu0 %1640
      %1642 = vrot.lane.b32.xlu0 %v1558, 7
      %v1643 = vpop.permute.xlu0 %1642
      %1644 = vrot.lane.b32.xlu0 %v1559, 7
      %v1645 = vpop.permute.xlu0 %1644
      %1646 = vrot.lane.b32.xlu0 %v1560, 7
      %v1647 = vpop.permute.xlu0 %1646
      %1648 = vrot.lane.b32.xlu0 %v1561, 7
      %v1649 = vpop.permute.xlu0 %1648
      %1650 = vrot.lane.b32.xlu0 %v1562, 7
      %v1651 = vpop.permute.xlu0 %1650
      %1652 = vrot.lane.b32.xlu0 %v1563, 7
      %v1653 = vpop.permute.xlu0 %1652
      %1654 = vrot.lane.b32.xlu0 %v1564, 7
      %v1655 = vpop.permute.xlu0 %1654
      %1656 = vrot.lane.b32.xlu0 %v1565, 7
      %v1657 = vpop.permute.xlu0 %1656
      %1658 = vrot.lane.b32.xlu0 %v1566, 7
      %v1659 = vpop.permute.xlu0 %1658
      %1660 = vrot.lane.b32.xlu0 %v1567, 7
      %v1661 = vpop.permute.xlu0 %1660
      %1662 = vrot.lane.b32.xlu0 %v1568, 7
      %v1663 = vpop.permute.xlu0 %1662
      %1664 = vrot.lane.b32.xlu0 %v1569, 7
      %v1665 = vpop.permute.xlu0 %1664
      %vm1698 = vcmask 64568
      %1699 = vst.msk [vmem:[#allocation3] sm:$0xff] %vm1698, %v1603
      %1700 = vst.msk [vmem:[#allocation3 + $0x8] sm:$0xff] %vm1698, %v1605
      %1701 = vst.msk [vmem:[#allocation3 + $0x10] sm:$0xff] %vm1698, %v1607
      %1702 = vst.msk [vmem:[#allocation3 + $0x18] sm:$0xff] %vm1698, %v1609
      %1703 = vst.msk [vmem:[#allocation3 + $0x20] sm:$0xff] %vm1698, %v1611
      %1704 = vst.msk [vmem:[#allocation3 + $0x28] sm:$0xff] %vm1698, %v1613
      %1705 = vst.msk [vmem:[#allocation3 + $0x30] sm:$0xff] %vm1698, %v1615
      %1706 = vst.msk [vmem:[#allocation3 + $0x38] sm:$0xff] %vm1698, %v1617
      %1707 = vst.msk [vmem:[#allocation3 + $0x40] sm:$0xff] %vm1698, %v1619
      %1708 = vst.msk [vmem:[#allocation3 + $0x48] sm:$0xff] %vm1698, %v1621
      %1709 = vst.msk [vmem:[#allocation3 + $0x50] sm:$0xff] %vm1698, %v1623
      %1710 = vst.msk [vmem:[#allocation3 + $0x58] sm:$0xff] %vm1698, %v1625
      %1711 = vst.msk [vmem:[#allocation3 + $0x60] sm:$0xff] %vm1698, %v1627
      %1712 = vst.msk [vmem:[#allocation3 + $0x68] sm:$0xff] %vm1698, %v1629
      %1713 = vst.msk [vmem:[#allocation3 + $0x70] sm:$0xff] %vm1698, %v1631
      %1714 = vst.msk [vmem:[#allocation3 + $0x78] sm:$0xff] %vm1698, %v1633
      %1715 = vst.msk [vmem:[#allocation3 + $0x80] sm:$0xff] %vm1698, %v1635
      %1716 = vst.msk [vmem:[#allocation3 + $0x88] sm:$0xff] %vm1698, %v1637
      %1717 = vst.msk [vmem:[#allocation3 + $0x90] sm:$0xff] %vm1698, %v1639
      %1718 = vst.msk [vmem:[#allocation3 + $0x98] sm:$0xff] %vm1698, %v1641
      %1719 = vst.msk [vmem:[#allocation3 + $0xa0] sm:$0xff] %vm1698, %v1643
      %1720 = vst.msk [vmem:[#allocation3 + $0xa8] sm:$0xff] %vm1698, %v1645
      %1721 = vst.msk [vmem:[#allocation3 + $0xb0] sm:$0xff] %vm1698, %v1647
      %1722 = vst.msk [vmem:[#allocation3 + $0xb8] sm:$0xff] %vm1698, %v1649
      %1723 = vst.msk [vmem:[#allocation3 + $0xc0] sm:$0xff] %vm1698, %v1651
      %1724 = vst.msk [vmem:[#allocation3 + $0xc8] sm:$0xff] %vm1698, %v1653
      %1725 = vst.msk [vmem:[#allocation3 + $0xd0] sm:$0xff] %vm1698, %v1655
      %1726 = vst.msk [vmem:[#allocation3 + $0xd8] sm:$0xff] %vm1698, %v1657
      %1727 = vst.msk [vmem:[#allocation3 + $0xe0] sm:$0xff] %vm1698, %v1659
      %1728 = vst.msk [vmem:[#allocation3 + $0xe8] sm:$0xff] %vm1698, %v1661
      %1729 = vst.msk [vmem:[#allocation3 + $0xf0] sm:$0xff] %vm1698, %v1663
      %1730 = vst.msk [vmem:[#allocation3 + $0xf8] sm:$0xff] %vm1698, %v1665
      %v1731 = vld [vmem:[%s1344 + $0x2] sm:$0xff]
      %v1732 = vld [vmem:[%s1344 + $0xa] sm:$0xff]
      %v1733 = vld [vmem:[%s1344 + $0x1a] sm:$0xff]
      %v1734 = vld [vmem:[%s1344 + $0x22] sm:$0xff]
      %v1735 = vld [vmem:[%s1344 + $0x32] sm:$0xff]
      %v1736 = vld [vmem:[%s1344 + $0x3a] sm:$0xff]
      %v1737 = vld [vmem:[%s1344 + $0x4a] sm:$0xff]
      %v1738 = vld [vmem:[%s1344 + $0x52] sm:$0xff]
      %v1739 = vld [vmem:[%s1344 + $0x62] sm:$0xff]
      %v1740 = vld [vmem:[%s1344 + $0x6a] sm:$0xff]
      %v1741 = vld [vmem:[%s1344 + $0x7a] sm:$0xff]
      %v1742 = vld [vmem:[%s1344 + $0x82] sm:$0xff]
      %v1743 = vld [vmem:[%s1344 + $0x92] sm:$0xff]
      %v1744 = vld [vmem:[%s1344 + $0x9a] sm:$0xff]
      %v1745 = vld [vmem:[%s1344 + $0xaa] sm:$0xff]
      %v1746 = vld [vmem:[%s1344 + $0xb2] sm:$0xff]
      %v1747 = vld [vmem:[%s1344 + $0xc2] sm:$0xff]
      %v1748 = vld [vmem:[%s1344 + $0xca] sm:$0xff]
      %v1749 = vld [vmem:[%s1344 + $0xda] sm:$0xff]
      %v1750 = vld [vmem:[%s1344 + $0xe2] sm:$0xff]
      %v1751 = vld [vmem:[%s1344 + $0xf2] sm:$0xff]
      %v1752 = vld [vmem:[%s1344 + $0xfa] sm:$0xff]
      %v1753 = vld [vmem:[%s1344 + $0x10a] sm:$0xff]
      %v1754 = vld [vmem:[%s1344 + $0x112] sm:$0xff]
      %v1755 = vld [vmem:[%s1344 + $0x122] sm:$0xff]
      %v1756 = vld [vmem:[%s1344 + $0x12a] sm:$0xff]
      %v1757 = vld [vmem:[%s1344 + $0x13a] sm:$0xff]
      %v1758 = vld [vmem:[%s1344 + $0x142] sm:$0xff]
      %v1759 = vld [vmem:[%s1344 + $0x152] sm:$0xff]
      %v1760 = vld [vmem:[%s1344 + $0x15a] sm:$0xff]
      %v1761 = vld [vmem:[%s1344 + $0x16a] sm:$0xff]
      %v1762 = vld [vmem:[%s1344 + $0x172] sm:$0xff]
      %1795 = vrot.lane.b32.xlu0 %v1731, 8
      %v1796 = vpop.permute.xlu0 %1795
      %1797 = vrot.lane.b32.xlu0 %v1732, 8
      %v1798 = vpop.permute.xlu0 %1797
      %1799 = vrot.lane.b32.xlu0 %v1733, 8
      %v1800 = vpop.permute.xlu0 %1799
      %1801 = vrot.lane.b32.xlu0 %v1734, 8
      %v1802 = vpop.permute.xlu0 %1801
      %1803 = vrot.lane.b32.xlu0 %v1735, 8
      %v1804 = vpop.permute.xlu0 %1803
      %1805 = vrot.lane.b32.xlu0 %v1736, 8
      %v1806 = vpop.permute.xlu0 %1805
      %1807 = vrot.lane.b32.xlu0 %v1737, 8
      %v1808 = vpop.permute.xlu0 %1807
      %1809 = vrot.lane.b32.xlu0 %v1738, 8
      %v1810 = vpop.permute.xlu0 %1809
      %1811 = vrot.lane.b32.xlu0 %v1739, 8
      %v1812 = vpop.permute.xlu0 %1811
      %1813 = vrot.lane.b32.xlu0 %v1740, 8
      %v1814 = vpop.permute.xlu0 %1813
      %1815 = vrot.lane.b32.xlu0 %v1741, 8
      %v1816 = vpop.permute.xlu0 %1815
      %1817 = vrot.lane.b32.xlu0 %v1742, 8
      %v1818 = vpop.permute.xlu0 %1817
      %1819 = vrot.lane.b32.xlu0 %v1743, 8
      %v1820 = vpop.permute.xlu0 %1819
      %1821 = vrot.lane.b32.xlu0 %v1744, 8
      %v1822 = vpop.permute.xlu0 %1821
      %1823 = vrot.lane.b32.xlu0 %v1745, 8
      %v1824 = vpop.permute.xlu0 %1823
      %1825 = vrot.lane.b32.xlu0 %v1746, 8
      %v1826 = vpop.permute.xlu0 %1825
      %1827 = vrot.lane.b32.xlu0 %v1747, 8
      %v1828 = vpop.permute.xlu0 %1827
      %1829 = vrot.lane.b32.xlu0 %v1748, 8
      %v1830 = vpop.permute.xlu0 %1829
      %1831 = vrot.lane.b32.xlu0 %v1749, 8
      %v1832 = vpop.permute.xlu0 %1831
      %1833 = vrot.lane.b32.xlu0 %v1750, 8
      %v1834 = vpop.permute.xlu0 %1833
      %1835 = vrot.lane.b32.xlu0 %v1751, 8
      %v1836 = vpop.permute.xlu0 %1835
      %1837 = vrot.lane.b32.xlu0 %v1752, 8
      %v1838 = vpop.permute.xlu0 %1837
      %1839 = vrot.lane.b32.xlu0 %v1753, 8
      %v1840 = vpop.permute.xlu0 %1839
      %1841 = vrot.lane.b32.xlu0 %v1754, 8
      %v1842 = vpop.permute.xlu0 %1841
      %1843 = vrot.lane.b32.xlu0 %v1755, 8
      %v1844 = vpop.permute.xlu0 %1843
      %1845 = vrot.lane.b32.xlu0 %v1756, 8
      %v1846 = vpop.permute.xlu0 %1845
      %1847 = vrot.lane.b32.xlu0 %v1757, 8
      %v1848 = vpop.permute.xlu0 %1847
      %1849 = vrot.lane.b32.xlu0 %v1758, 8
      %v1850 = vpop.permute.xlu0 %1849
      %1851 = vrot.lane.b32.xlu0 %v1759, 8
      %v1852 = vpop.permute.xlu0 %1851
      %1853 = vrot.lane.b32.xlu0 %v1760, 8
      %v1854 = vpop.permute.xlu0 %1853
      %1855 = vrot.lane.b32.xlu0 %v1761, 8
      %v1856 = vpop.permute.xlu0 %1855
      %1857 = vrot.lane.b32.xlu0 %v1762, 8
      %v1858 = vpop.permute.xlu0 %1857
      %vm1891 = vcmask 72768
      %1892 = vst.msk [vmem:[#allocation3] sm:$0xff] %vm1891, %v1796
      %1893 = vst.msk [vmem:[#allocation3 + $0x8] sm:$0xff] %vm1891, %v1798
      %1894 = vst.msk [vmem:[#allocation3 + $0x10] sm:$0xff] %vm1891, %v1800
      %1895 = vst.msk [vmem:[#allocation3 + $0x18] sm:$0xff] %vm1891, %v1802
      %1896 = vst.msk [vmem:[#allocation3 + $0x20] sm:$0xff] %vm1891, %v1804
      %1897 = vst.msk [vmem:[#allocation3 + $0x28] sm:$0xff] %vm1891, %v1806
      %1898 = vst.msk [vmem:[#allocation3 + $0x30] sm:$0xff] %vm1891, %v1808
      %1899 = vst.msk [vmem:[#allocation3 + $0x38] sm:$0xff] %vm1891, %v1810
      %1900 = vst.msk [vmem:[#allocation3 + $0x40] sm:$0xff] %vm1891, %v1812
      %1901 = vst.msk [vmem:[#allocation3 + $0x48] sm:$0xff] %vm1891, %v1814
      %1902 = vst.msk [vmem:[#allocation3 + $0x50] sm:$0xff] %vm1891, %v1816
      %1903 = vst.msk [vmem:[#allocation3 + $0x58] sm:$0xff] %vm1891, %v1818
      %1904 = vst.msk [vmem:[#allocation3 + $0x60] sm:$0xff] %vm1891, %v1820
      %1905 = vst.msk [vmem:[#allocation3 + $0x68] sm:$0xff] %vm1891, %v1822
      %1906 = vst.msk [vmem:[#allocation3 + $0x70] sm:$0xff] %vm1891, %v1824
      %1907 = vst.msk [vmem:[#allocation3 + $0x78] sm:$0xff] %vm1891, %v1826
      %1908 = vst.msk [vmem:[#allocation3 + $0x80] sm:$0xff] %vm1891, %v1828
      %1909 = vst.msk [vmem:[#allocation3 + $0x88] sm:$0xff] %vm1891, %v1830
      %1910 = vst.msk [vmem:[#allocation3 + $0x90] sm:$0xff] %vm1891, %v1832
      %1911 = vst.msk [vmem:[#allocation3 + $0x98] sm:$0xff] %vm1891, %v1834
      %1912 = vst.msk [vmem:[#allocation3 + $0xa0] sm:$0xff] %vm1891, %v1836
      %1913 = vst.msk [vmem:[#allocation3 + $0xa8] sm:$0xff] %vm1891, %v1838
      %1914 = vst.msk [vmem:[#allocation3 + $0xb0] sm:$0xff] %vm1891, %v1840
      %1915 = vst.msk [vmem:[#allocation3 + $0xb8] sm:$0xff] %vm1891, %v1842
      %1916 = vst.msk [vmem:[#allocation3 + $0xc0] sm:$0xff] %vm1891, %v1844
      %1917 = vst.msk [vmem:[#allocation3 + $0xc8] sm:$0xff] %vm1891, %v1846
      %1918 = vst.msk [vmem:[#allocation3 + $0xd0] sm:$0xff] %vm1891, %v1848
      %1919 = vst.msk [vmem:[#allocation3 + $0xd8] sm:$0xff] %vm1891, %v1850
      %1920 = vst.msk [vmem:[#allocation3 + $0xe0] sm:$0xff] %vm1891, %v1852
      %1921 = vst.msk [vmem:[#allocation3 + $0xe8] sm:$0xff] %vm1891, %v1854
      %1922 = vst.msk [vmem:[#allocation3 + $0xf0] sm:$0xff] %vm1891, %v1856
      %1923 = vst.msk [vmem:[#allocation3 + $0xf8] sm:$0xff] %vm1891, %v1858
      %v1924 = vld [vmem:[#allocation3] sm:$0xff]
      %v1925 = vld [vmem:[#allocation3 + $0x8] sm:$0xff]
      %v1926 = vld [vmem:[#allocation3 + $0x10] sm:$0xff]
      %v1927 = vld [vmem:[#allocation3 + $0x18] sm:$0xff]
      %v1928 = vld [vmem:[#allocation3 + $0x20] sm:$0xff]
      %v1929 = vld [vmem:[#allocation3 + $0x28] sm:$0xff]
      %v1930 = vld [vmem:[#allocation3 + $0x30] sm:$0xff]
      %v1931 = vld [vmem:[#allocation3 + $0x38] sm:$0xff]
      %v1932 = vld [vmem:[#allocation3 + $0x40] sm:$0xff]
      %v1933 = vld [vmem:[#allocation3 + $0x48] sm:$0xff]
      %v1934 = vld [vmem:[#allocation3 + $0x50] sm:$0xff]
      %v1935 = vld [vmem:[#allocation3 + $0x58] sm:$0xff]
      %v1936 = vld [vmem:[#allocation3 + $0x60] sm:$0xff]
      %v1937 = vld [vmem:[#allocation3 + $0x68] sm:$0xff]
      %v1938 = vld [vmem:[#allocation3 + $0x70] sm:$0xff]
      %v1939 = vld [vmem:[#allocation3 + $0x78] sm:$0xff]
      %v1940 = vld [vmem:[#allocation3 + $0x80] sm:$0xff]
      %v1941 = vld [vmem:[#allocation3 + $0x88] sm:$0xff]
      %v1942 = vld [vmem:[#allocation3 + $0x90] sm:$0xff]
      %v1943 = vld [vmem:[#allocation3 + $0x98] sm:$0xff]
      %v1944 = vld [vmem:[#allocation3 + $0xa0] sm:$0xff]
      %v1945 = vld [vmem:[#allocation3 + $0xa8] sm:$0xff]
      %v1946 = vld [vmem:[#allocation3 + $0xb0] sm:$0xff]
      %v1947 = vld [vmem:[#allocation3 + $0xb8] sm:$0xff]
      %v1948 = vld [vmem:[#allocation3 + $0xc0] sm:$0xff]
      %v1949 = vld [vmem:[#allocation3 + $0xc8] sm:$0xff]
      %v1950 = vld [vmem:[#allocation3 + $0xd0] sm:$0xff]
      %v1951 = vld [vmem:[#allocation3 + $0xd8] sm:$0xff]
      %v1952 = vld [vmem:[#allocation3 + $0xe0] sm:$0xff]
      %v1953 = vld [vmem:[#allocation3 + $0xe8] sm:$0xff]
      %v1954 = vld [vmem:[#allocation3 + $0xf0] sm:$0xff]
      %v1955 = vld [vmem:[#allocation3 + $0xf8] sm:$0xff]
      %v1956 = vpack.c.bf16 %v1925, %v1924
      %v1957 = vpack.c.bf16 %v1927, %v1926
      %v1958 = vpack.c.bf16 %v1929, %v1928
      %v1959 = vpack.c.bf16 %v1931, %v1930
      %v1960 = vpack.c.bf16 %v1933, %v1932
      %v1961 = vpack.c.bf16 %v1935, %v1934
      %v1962 = vpack.c.bf16 %v1937, %v1936
      %v1963 = vpack.c.bf16 %v1939, %v1938
      %v1964 = vpack.c.bf16 %v1941, %v1940
      %v1965 = vpack.c.bf16 %v1943, %v1942
      %v1966 = vpack.c.bf16 %v1945, %v1944
      %v1967 = vpack.c.bf16 %v1947, %v1946
      %v1968 = vpack.c.bf16 %v1949, %v1948
      %v1969 = vpack.c.bf16 %v1951, %v1950
      %v1970 = vpack.c.bf16 %v1953, %v1952
      %v1971 = vpack.c.bf16 %v1955, %v1954
      %v1972 = vld [vmem:[%s1] sm:$0xf]
      %v1973 = vld [vmem:[%s1 + $0x4] sm:$0x1]
      %v1974 = vld [vmem:[%s2] sm:$0x1]
      %v1976 = vperm.slane %v1974, 0
      %v1980 = vunpack.c.l.b16 %v1972
      %v1981 = vunpack.c.l.b16 %v1973
      %v1982 = vpack.c.b16 %v1981, %v1980
      %vm1983 = vcmask 72704
      %v1985 = vsel %vm1983, %v1956, 0
      %v1988 = vsel %vm1983, %v1957, 0
      %v1991 = vsel %vm1983, %v1958, 0
      %v1994 = vsel %vm1983, %v1959, 0
      %v1997 = vsel %vm1983, %v1960, 0
      %v2000 = vsel %vm1983, %v1961, 0
      %v2003 = vsel %vm1983, %v1962, 0
      %v2006 = vsel %vm1983, %v1963, 0
      %v2009 = vsel %vm1983, %v1964, 0
      %v2012 = vsel %vm1983, %v1965, 0
      %v2015 = vsel %vm1983, %v1966, 0
      %v2018 = vsel %vm1983, %v1967, 0
      %v2021 = vsel %vm1983, %v1968, 0
      %v2024 = vsel %vm1983, %v1969, 0
      %v2027 = vsel %vm1983, %v1970, 0
      %v2030 = vsel %vm1983, %v1971, 0
      %vm2032 = vcmask 1043456
      %vm2033 = vcmask 1044480
      %v2034 = vsel %vm2032, 4294967295, 65535
      %v2035 = vsel %vm2033, %v2034, 0
      %v2037 = vand.u32 %v1982, %v2035
      %2039 = vmatpush.bf16.msra.mxu0 0
      %2040 = vmatpush.bf16.msra.mxu0 0
      %2041 = vmatpush.bf16.msra.mxu0 0
      %2042 = vmatpush.bf16.msra.mxu0 0
      %2043 = vmatpush.bf16.msra.mxu0 0
      %2044 = vmatpush.bf16.msra.mxu0 0
      %2045 = vmatpush.bf16.msra.mxu0 0
      %2046 = vmatpush.bf16.msra.mxu0 %v2037
      %2047 = vmatmul.bf16.gmra.mxu0 %v1985
      %v2048 = vpop.f32.mrf.mxu0
      %v2049 = vadd.f32 %v1976, %v2048
      %v2050 = vpop.f32.mrf.mxu0
      %v2051 = vadd.f32 %v1976, %v2050
      %2052 = vmatmul.bf16.gmra.mxu0 %v1988
      %v2053 = vpop.f32.mrf.mxu0
      %v2054 = vadd.f32 %v1976, %v2053
      %v2055 = vpop.f32.mrf.mxu0
      %v2056 = vadd.f32 %v1976, %v2055
      %2057 = vmatmul.bf16.gmra.mxu0 %v1991
      %v2058 = vpop.f32.mrf.mxu0
      %v2059 = vadd.f32 %v1976, %v2058
      %v2060 = vpop.f32.mrf.mxu0
      %v2061 = vadd.f32 %v1976, %v2060
      %2062 = vmatmul.bf16.gmra.mxu0 %v1994
      %v2063 = vpop.f32.mrf.mxu0
      %v2064 = vadd.f32 %v1976, %v2063
      %v2065 = vpop.f32.mrf.mxu0
      %v2066 = vadd.f32 %v1976, %v2065
      %2067 = vmatmul.bf16.gmra.mxu0 %v1997
      %v2068 = vpop.f32.mrf.mxu0
      %v2069 = vadd.f32 %v1976, %v2068
      %v2070 = vpop.f32.mrf.mxu0
      %v2071 = vadd.f32 %v1976, %v2070
      %2072 = vmatmul.bf16.gmra.mxu0 %v2000
      %v2073 = vpop.f32.mrf.mxu0
      %v2074 = vadd.f32 %v1976, %v2073
      %v2075 = vpop.f32.mrf.mxu0
      %v2076 = vadd.f32 %v1976, %v2075
      %2077 = vmatmul.bf16.gmra.mxu0 %v2003
      %v2078 = vpop.f32.mrf.mxu0
      %v2079 = vadd.f32 %v1976, %v2078
      %v2080 = vpop.f32.mrf.mxu0
      %v2081 = vadd.f32 %v1976, %v2080
      %2082 = vmatmul.bf16.gmra.mxu0 %v2006
      %v2083 = vpop.f32.mrf.mxu0
      %v2084 = vadd.f32 %v1976, %v2083
      %v2085 = vpop.f32.mrf.mxu0
      %v2086 = vadd.f32 %v1976, %v2085
      %2087 = vmatmul.bf16.gmra.mxu0 %v2009
      %v2088 = vpop.f32.mrf.mxu0
      %v2089 = vadd.f32 %v1976, %v2088
      %v2090 = vpop.f32.mrf.mxu0
      %v2091 = vadd.f32 %v1976, %v2090
      %2092 = vmatmul.bf16.gmra.mxu0 %v2012
      %v2093 = vpop.f32.mrf.mxu0
      %v2094 = vadd.f32 %v1976, %v2093
      %v2095 = vpop.f32.mrf.mxu0
      %v2096 = vadd.f32 %v1976, %v2095
      %2097 = vmatmul.bf16.gmra.mxu0 %v2015
      %v2098 = vpop.f32.mrf.mxu0
      %v2099 = vadd.f32 %v1976, %v2098
      %v2100 = vpop.f32.mrf.mxu0
      %v2101 = vadd.f32 %v1976, %v2100
      %2102 = vmatmul.bf16.gmra.mxu0 %v2018
      %v2103 = vpop.f32.mrf.mxu0
      %v2104 = vadd.f32 %v1976, %v2103
      %v2105 = vpop.f32.mrf.mxu0
      %v2106 = vadd.f32 %v1976, %v2105
      %2107 = vmatmul.bf16.gmra.mxu0 %v2021
      %v2108 = vpop.f32.mrf.mxu0
      %v2109 = vadd.f32 %v1976, %v2108
      %v2110 = vpop.f32.mrf.mxu0
      %v2111 = vadd.f32 %v1976, %v2110
      %2112 = vmatmul.bf16.gmra.mxu0 %v2024
      %v2113 = vpop.f32.mrf.mxu0
      %v2114 = vadd.f32 %v1976, %v2113
      %v2115 = vpop.f32.mrf.mxu0
      %v2116 = vadd.f32 %v1976, %v2115
      %2117 = vmatmul.bf16.gmra.mxu0 %v2027
      %v2118 = vpop.f32.mrf.mxu0
      %v2119 = vadd.f32 %v1976, %v2118
      %v2120 = vpop.f32.mrf.mxu0
      %v2121 = vadd.f32 %v1976, %v2120
      %2122 = vmatmul.bf16.gmra.mxu0 %v2030
      %v2123 = vpop.f32.mrf.mxu0
      %v2124 = vadd.f32 %v1976, %v2123
      %v2125 = vpop.f32.mrf.mxu0
      %v2126 = vadd.f32 %v1976, %v2125
      %2127 = vdwg.mxu0
      %v2128 = vmax.f32 %v2049, 0.0
      %v2129 = vmax.f32 %v2051, 0.0
      %v2130 = vmax.f32 %v2054, 0.0
      %v2131 = vmax.f32 %v2056, 0.0
      %v2132 = vmax.f32 %v2059, 0.0
      %v2133 = vmax.f32 %v2061, 0.0
      %v2134 = vmax.f32 %v2064, 0.0
      %v2135 = vmax.f32 %v2066, 0.0
      %v2136 = vmax.f32 %v2069, 0.0
      %v2137 = vmax.f32 %v2071, 0.0
      %v2138 = vmax.f32 %v2074, 0.0
      %v2139 = vmax.f32 %v2076, 0.0
      %v2140 = vmax.f32 %v2079, 0.0
      %v2141 = vmax.f32 %v2081, 0.0
      %v2142 = vmax.f32 %v2084, 0.0
      %v2143 = vmax.f32 %v2086, 0.0
      %v2144 = vmax.f32 %v2089, 0.0
      %v2145 = vmax.f32 %v2091, 0.0
      %v2146 = vmax.f32 %v2094, 0.0
      %v2147 = vmax.f32 %v2096, 0.0
      %v2148 = vmax.f32 %v2099, 0.0
      %v2149 = vmax.f32 %v2101, 0.0
      %v2150 = vmax.f32 %v2104, 0.0
      %v2151 = vmax.f32 %v2106, 0.0
      %v2152 = vmax.f32 %v2109, 0.0
      %v2153 = vmax.f32 %v2111, 0.0
      %v2154 = vmax.f32 %v2114, 0.0
      %v2155 = vmax.f32 %v2116, 0.0
      %v2156 = vmax.f32 %v2119, 0.0
      %v2157 = vmax.f32 %v2121, 0.0
      %v2158 = vmax.f32 %v2124, 0.0
      %v2159 = vmax.f32 %v2126, 0.0
      %v2192 = vrot.slane %v2128, 2
      %v2193 = vrot.slane %v2128, 4
      %v2194 = vrot.slane %v2128, 6
      %v2195 = vrot.slane %v2129, 2
      %v2196 = vrot.slane %v2129, 4
      %v2197 = vrot.slane %v2129, 6
      %v2198 = vrot.slane %v2130, 2
      %v2199 = vrot.slane %v2130, 4
      %v2200 = vrot.slane %v2130, 6
      %v2201 = vrot.slane %v2131, 2
      %v2202 = vrot.slane %v2131, 4
      %v2203 = vrot.slane %v2131, 6
      %v2204 = vrot.slane %v2132, 2
      %v2205 = vrot.slane %v2132, 4
      %v2206 = vrot.slane %v2132, 6
      %v2207 = vrot.slane %v2133, 2
      %v2208 = vrot.slane %v2133, 4
      %v2209 = vrot.slane %v2133, 6
      %v2210 = vrot.slane %v2134, 2
      %v2211 = vrot.slane %v2134, 4
      %v2212 = vrot.slane %v2134, 6
      %v2213 = vrot.slane %v2135, 2
      %v2214 = vrot.slane %v2135, 4
      %v2215 = vrot.slane %v2135, 6
      %v2216 = vrot.slane %v2136, 2
      %v2217 = vrot.slane %v2136, 4
      %v2218 = vrot.slane %v2136, 6
      %v2219 = vrot.slane %v2137, 2
      %v2220 = vrot.slane %v2137, 4
      %v2221 = vrot.slane %v2137, 6
      %v2222 = vrot.slane %v2138, 2
      %v2223 = vrot.slane %v2138, 4
      %v2224 = vrot.slane %v2138, 6
      %v2225 = vrot.slane %v2139, 2
      %v2226 = vrot.slane %v2139, 4
      %v2227 = vrot.slane %v2139, 6
      %v2228 = vrot.slane %v2140, 2
      %v2229 = vrot.slane %v2140, 4
      %v2230 = vrot.slane %v2140, 6
      %v2231 = vrot.slane %v2141, 2
      %v2232 = vrot.slane %v2141, 4
      %v2233 = vrot.slane %v2141, 6
      %v2234 = vrot.slane %v2142, 2
      %v2235 = vrot.slane %v2142, 4
      %v2236 = vrot.slane %v2142, 6
      %v2237 = vrot.slane %v2143, 2
      %v2238 = vrot.slane %v2143, 4
      %v2239 = vrot.slane %v2143, 6
      %v2240 = vrot.slane %v2144, 2
      %v2241 = vrot.slane %v2144, 4
      %v2242 = vrot.slane %v2144, 6
      %v2243 = vrot.slane %v2145, 2
      %v2244 = vrot.slane %v2145, 4
      %v2245 = vrot.slane %v2145, 6
      %v2246 = vrot.slane %v2146, 2
      %v2247 = vrot.slane %v2146, 4
      %v2248 = vrot.slane %v2146, 6
      %v2249 = vrot.slane %v2147, 2
      %v2250 = vrot.slane %v2147, 4
      %v2251 = vrot.slane %v2147, 6
      %v2252 = vrot.slane %v2148, 2
      %v2253 = vrot.slane %v2148, 4
      %v2254 = vrot.slane %v2148, 6
      %v2255 = vrot.slane %v2149, 2
      %v2256 = vrot.slane %v2149, 4
      %v2257 = vrot.slane %v2149, 6
      %v2258 = vrot.slane %v2150, 2
      %v2259 = vrot.slane %v2150, 4
      %v2260 = vrot.slane %v2150, 6
      %v2261 = vrot.slane %v2151, 2
      %v2262 = vrot.slane %v2151, 4
      %v2263 = vrot.slane %v2151, 6
      %v2264 = vrot.slane %v2152, 2
      %v2265 = vrot.slane %v2152, 4
      %v2266 = vrot.slane %v2152, 6
      %v2267 = vrot.slane %v2153, 2
      %v2268 = vrot.slane %v2153, 4
      %v2269 = vrot.slane %v2153, 6
      %v2270 = vrot.slane %v2154, 2
      %v2271 = vrot.slane %v2154, 4
      %v2272 = vrot.slane %v2154, 6
      %v2273 = vrot.slane %v2155, 2
      %v2274 = vrot.slane %v2155, 4
      %v2275 = vrot.slane %v2155, 6
      %v2276 = vrot.slane %v2156, 2
      %v2277 = vrot.slane %v2156, 4
      %v2278 = vrot.slane %v2156, 6
      %v2279 = vrot.slane %v2157, 2
      %v2280 = vrot.slane %v2157, 4
      %v2281 = vrot.slane %v2157, 6
      %v2282 = vrot.slane %v2158, 2
      %v2283 = vrot.slane %v2158, 4
      %v2284 = vrot.slane %v2158, 6
      %v2285 = vrot.slane %v2159, 2
      %v2286 = vrot.slane %v2159, 4
      %v2287 = vrot.slane %v2159, 6
      %vm2384 = vcmask 58368
      %v2385 = vsel %vm2384, %v2128, -inf
      %v2386 = vrot.slane %v2385, 4
      %v2387 = vmax.f32 %v2385, %v2386
      %v2388 = vrot.slane %v2387, 2
      %v2389 = vmax.f32 %v2387, %v2388
      %v2390 = vrot.slane %v2389, 1
      %v2391 = vmax.f32 %v2389, %v2390
      %v2392 = vsel %vm2384, %v2192, -inf
      %v2393 = vrot.slane %v2392, 4
      %v2394 = vmax.f32 %v2392, %v2393
      %v2395 = vrot.slane %v2394, 2
      %v2396 = vmax.f32 %v2394, %v2395
      %v2397 = vrot.slane %v2396, 1
      %v2398 = vmax.f32 %v2396, %v2397
      %v2399 = vsel %vm2384, %v2193, -inf
      %v2400 = vrot.slane %v2399, 4
      %v2401 = vmax.f32 %v2399, %v2400
      %v2402 = vrot.slane %v2401, 2
      %v2403 = vmax.f32 %v2401, %v2402
      %v2404 = vrot.slane %v2403, 1
      %v2405 = vmax.f32 %v2403, %v2404
      %v2406 = vsel %vm2384, %v2194, -inf
      %v2407 = vrot.slane %v2406, 4
      %v2408 = vmax.f32 %v2406, %v2407
      %v2409 = vrot.slane %v2408, 2
      %v2410 = vmax.f32 %v2408, %v2409
      %v2411 = vrot.slane %v2410, 1
      %v2412 = vmax.f32 %v2410, %v2411
      %v2413 = vsel %vm2384, %v2129, -inf
      %v2414 = vrot.slane %v2413, 4
      %v2415 = vmax.f32 %v2413, %v2414
      %v2416 = vrot.slane %v2415, 2
      %v2417 = vmax.f32 %v2415, %v2416
      %v2418 = vrot.slane %v2417, 1
      %v2419 = vmax.f32 %v2417, %v2418
      %v2420 = vsel %vm2384, %v2195, -inf
      %v2421 = vrot.slane %v2420, 4
      %v2422 = vmax.f32 %v2420, %v2421
      %v2423 = vrot.slane %v2422, 2
      %v2424 = vmax.f32 %v2422, %v2423
      %v2425 = vrot.slane %v2424, 1
      %v2426 = vmax.f32 %v2424, %v2425
      %v2427 = vsel %vm2384, %v2196, -inf
      %v2428 = vrot.slane %v2427, 4
      %v2429 = vmax.f32 %v2427, %v2428
      %v2430 = vrot.slane %v2429, 2
      %v2431 = vmax.f32 %v2429, %v2430
      %v2432 = vrot.slane %v2431, 1
      %v2433 = vmax.f32 %v2431, %v2432
      %v2434 = vsel %vm2384, %v2197, -inf
      %v2435 = vrot.slane %v2434, 4
      %v2436 = vmax.f32 %v2434, %v2435
      %v2437 = vrot.slane %v2436, 2
      %v2438 = vmax.f32 %v2436, %v2437
      %v2439 = vrot.slane %v2438, 1
      %v2440 = vmax.f32 %v2438, %v2439
      %v2441 = vsel %vm2384, %v2130, -inf
      %v2442 = vrot.slane %v2441, 4
      %v2443 = vmax.f32 %v2441, %v2442
      %v2444 = vrot.slane %v2443, 2
      %v2445 = vmax.f32 %v2443, %v2444
      %v2446 = vrot.slane %v2445, 1
      %v2447 = vmax.f32 %v2445, %v2446
      %v2448 = vsel %vm2384, %v2198, -inf
      %v2449 = vrot.slane %v2448, 4
      %v2450 = vmax.f32 %v2448, %v2449
      %v2451 = vrot.slane %v2450, 2
      %v2452 = vmax.f32 %v2450, %v2451
      %v2453 = vrot.slane %v2452, 1
      %v2454 = vmax.f32 %v2452, %v2453
      %v2455 = vsel %vm2384, %v2199, -inf
      %v2456 = vrot.slane %v2455, 4
      %v2457 = vmax.f32 %v2455, %v2456
      %v2458 = vrot.slane %v2457, 2
      %v2459 = vmax.f32 %v2457, %v2458
      %v2460 = vrot.slane %v2459, 1
      %v2461 = vmax.f32 %v2459, %v2460
      %v2462 = vsel %vm2384, %v2200, -inf
      %v2463 = vrot.slane %v2462, 4
      %v2464 = vmax.f32 %v2462, %v2463
      %v2465 = vrot.slane %v2464, 2
      %v2466 = vmax.f32 %v2464, %v2465
      %v2467 = vrot.slane %v2466, 1
      %v2468 = vmax.f32 %v2466, %v2467
      %v2469 = vsel %vm2384, %v2131, -inf
      %v2470 = vrot.slane %v2469, 4
      %v2471 = vmax.f32 %v2469, %v2470
      %v2472 = vrot.slane %v2471, 2
      %v2473 = vmax.f32 %v2471, %v2472
      %v2474 = vrot.slane %v2473, 1
      %v2475 = vmax.f32 %v2473, %v2474
      %v2476 = vsel %vm2384, %v2201, -inf
      %v2477 = vrot.slane %v2476, 4
      %v2478 = vmax.f32 %v2476, %v2477
      %v2479 = vrot.slane %v2478, 2
      %v2480 = vmax.f32 %v2478, %v2479
      %v2481 = vrot.slane %v2480, 1
      %v2482 = vmax.f32 %v2480, %v2481
      %v2483 = vsel %vm2384, %v2202, -inf
      %v2484 = vrot.slane %v2483, 4
      %v2485 = vmax.f32 %v2483, %v2484
      %v2486 = vrot.slane %v2485, 2
      %v2487 = vmax.f32 %v2485, %v2486
      %v2488 = vrot.slane %v2487, 1
      %v2489 = vmax.f32 %v2487, %v2488
      %v2490 = vsel %vm2384, %v2203, -inf
      %v2491 = vrot.slane %v2490, 4
      %v2492 = vmax.f32 %v2490, %v2491
      %v2493 = vrot.slane %v2492, 2
      %v2494 = vmax.f32 %v2492, %v2493
      %v2495 = vrot.slane %v2494, 1
      %v2496 = vmax.f32 %v2494, %v2495
      %v2497 = vsel %vm2384, %v2132, -inf
      %v2498 = vrot.slane %v2497, 4
      %v2499 = vmax.f32 %v2497, %v2498
      %v2500 = vrot.slane %v2499, 2
      %v2501 = vmax.f32 %v2499, %v2500
      %v2502 = vrot.slane %v2501, 1
      %v2503 = vmax.f32 %v2501, %v2502
      %v2504 = vsel %vm2384, %v2204, -inf
      %v2505 = vrot.slane %v2504, 4
      %v2506 = vmax.f32 %v2504, %v2505
      %v2507 = vrot.slane %v2506, 2
      %v2508 = vmax.f32 %v2506, %v2507
      %v2509 = vrot.slane %v2508, 1
      %v2510 = vmax.f32 %v2508, %v2509
      %v2511 = vsel %vm2384, %v2205, -inf
      %v2512 = vrot.slane %v2511, 4
      %v2513 = vmax.f32 %v2511, %v2512
      %v2514 = vrot.slane %v2513, 2
      %v2515 = vmax.f32 %v2513, %v2514
      %v2516 = vrot.slane %v2515, 1
      %v2517 = vmax.f32 %v2515, %v2516
      %v2518 = vsel %vm2384, %v2206, -inf
      %v2519 = vrot.slane %v2518, 4
      %v2520 = vmax.f32 %v2518, %v2519
      %v2521 = vrot.slane %v2520, 2
      %v2522 = vmax.f32 %v2520, %v2521
      %v2523 = vrot.slane %v2522, 1
      %v2524 = vmax.f32 %v2522, %v2523
      %v2525 = vsel %vm2384, %v2133, -inf
      %v2526 = vrot.slane %v2525, 4
      %v2527 = vmax.f32 %v2525, %v2526
      %v2528 = vrot.slane %v2527, 2
      %v2529 = vmax.f32 %v2527, %v2528
      %v2530 = vrot.slane %v2529, 1
      %v2531 = vmax.f32 %v2529, %v2530
      %v2532 = vsel %vm2384, %v2207, -inf
      %v2533 = vrot.slane %v2532, 4
      %v2534 = vmax.f32 %v2532, %v2533
      %v2535 = vrot.slane %v2534, 2
      %v2536 = vmax.f32 %v2534, %v2535
      %v2537 = vrot.slane %v2536, 1
      %v2538 = vmax.f32 %v2536, %v2537
      %v2539 = vsel %vm2384, %v2208, -inf
      %v2540 = vrot.slane %v2539, 4
      %v2541 = vmax.f32 %v2539, %v2540
      %v2542 = vrot.slane %v2541, 2
      %v2543 = vmax.f32 %v2541, %v2542
      %v2544 = vrot.slane %v2543, 1
      %v2545 = vmax.f32 %v2543, %v2544
      %v2546 = vsel %vm2384, %v2209, -inf
      %v2547 = vrot.slane %v2546, 4
      %v2548 = vmax.f32 %v2546, %v2547
      %v2549 = vrot.slane %v2548, 2
      %v2550 = vmax.f32 %v2548, %v2549
      %v2551 = vrot.slane %v2550, 1
      %v2552 = vmax.f32 %v2550, %v2551
      %v2553 = vsel %vm2384, %v2134, -inf
      %v2554 = vrot.slane %v2553, 4
      %v2555 = vmax.f32 %v2553, %v2554
      %v2556 = vrot.slane %v2555, 2
      %v2557 = vmax.f32 %v2555, %v2556
      %v2558 = vrot.slane %v2557, 1
      %v2559 = vmax.f32 %v2557, %v2558
      %v2560 = vsel %vm2384, %v2210, -inf
      %v2561 = vrot.slane %v2560, 4
      %v2562 = vmax.f32 %v2560, %v2561
      %v2563 = vrot.slane %v2562, 2
      %v2564 = vmax.f32 %v2562, %v2563
      %v2565 = vrot.slane %v2564, 1
      %v2566 = vmax.f32 %v2564, %v2565
      %v2567 = vsel %vm2384, %v2211, -inf
      %v2568 = vrot.slane %v2567, 4
      %v2569 = vmax.f32 %v2567, %v2568
      %v2570 = vrot.slane %v2569, 2
      %v2571 = vmax.f32 %v2569, %v2570
      %v2572 = vrot.slane %v2571, 1
      %v2573 = vmax.f32 %v2571, %v2572
      %v2574 = vsel %vm2384, %v2212, -inf
      %v2575 = vrot.slane %v2574, 4
      %v2576 = vmax.f32 %v2574, %v2575
      %v2577 = vrot.slane %v2576, 2
      %v2578 = vmax.f32 %v2576, %v2577
      %v2579 = vrot.slane %v2578, 1
      %v2580 = vmax.f32 %v2578, %v2579
      %v2581 = vsel %vm2384, %v2135, -inf
      %v2582 = vrot.slane %v2581, 4
      %v2583 = vmax.f32 %v2581, %v2582
      %v2584 = vrot.slane %v2583, 2
      %v2585 = vmax.f32 %v2583, %v2584
      %v2586 = vrot.slane %v2585, 1
      %v2587 = vmax.f32 %v2585, %v2586
      %v2588 = vsel %vm2384, %v2213, -inf
      %v2589 = vrot.slane %v2588, 4
      %v2590 = vmax.f32 %v2588, %v2589
      %v2591 = vrot.slane %v2590, 2
      %v2592 = vmax.f32 %v2590, %v2591
      %v2593 = vrot.slane %v2592, 1
      %v2594 = vmax.f32 %v2592, %v2593
      %v2595 = vsel %vm2384, %v2214, -inf
      %v2596 = vrot.slane %v2595, 4
      %v2597 = vmax.f32 %v2595, %v2596
      %v2598 = vrot.slane %v2597, 2
      %v2599 = vmax.f32 %v2597, %v2598
      %v2600 = vrot.slane %v2599, 1
      %v2601 = vmax.f32 %v2599, %v2600
      %v2602 = vsel %vm2384, %v2215, -inf
      %v2603 = vrot.slane %v2602, 4
      %v2604 = vmax.f32 %v2602, %v2603
      %v2605 = vrot.slane %v2604, 2
      %v2606 = vmax.f32 %v2604, %v2605
      %v2607 = vrot.slane %v2606, 1
      %v2608 = vmax.f32 %v2606, %v2607
      %v2609 = vsel %vm2384, %v2136, -inf
      %v2610 = vrot.slane %v2609, 4
      %v2611 = vmax.f32 %v2609, %v2610
      %v2612 = vrot.slane %v2611, 2
      %v2613 = vmax.f32 %v2611, %v2612
      %v2614 = vrot.slane %v2613, 1
      %v2615 = vmax.f32 %v2613, %v2614
      %v2616 = vsel %vm2384, %v2216, -inf
      %v2617 = vrot.slane %v2616, 4
      %v2618 = vmax.f32 %v2616, %v2617
      %v2619 = vrot.slane %v2618, 2
      %v2620 = vmax.f32 %v2618, %v2619
      %v2621 = vrot.slane %v2620, 1
      %v2622 = vmax.f32 %v2620, %v2621
      %v2623 = vsel %vm2384, %v2217, -inf
      %v2624 = vrot.slane %v2623, 4
      %v2625 = vmax.f32 %v2623, %v2624
      %v2626 = vrot.slane %v2625, 2
      %v2627 = vmax.f32 %v2625, %v2626
      %v2628 = vrot.slane %v2627, 1
      %v2629 = vmax.f32 %v2627, %v2628
      %v2630 = vsel %vm2384, %v2218, -inf
      %v2631 = vrot.slane %v2630, 4
      %v2632 = vmax.f32 %v2630, %v2631
      %v2633 = vrot.slane %v2632, 2
      %v2634 = vmax.f32 %v2632, %v2633
      %v2635 = vrot.slane %v2634, 1
      %v2636 = vmax.f32 %v2634, %v2635
      %v2637 = vsel %vm2384, %v2137, -inf
      %v2638 = vrot.slane %v2637, 4
      %v2639 = vmax.f32 %v2637, %v2638
      %v2640 = vrot.slane %v2639, 2
      %v2641 = vmax.f32 %v2639, %v2640
      %v2642 = vrot.slane %v2641, 1
      %v2643 = vmax.f32 %v2641, %v2642
      %v2644 = vsel %vm2384, %v2219, -inf
      %v2645 = vrot.slane %v2644, 4
      %v2646 = vmax.f32 %v2644, %v2645
      %v2647 = vrot.slane %v2646, 2
      %v2648 = vmax.f32 %v2646, %v2647
      %v2649 = vrot.slane %v2648, 1
      %v2650 = vmax.f32 %v2648, %v2649
      %v2651 = vsel %vm2384, %v2220, -inf
      %v2652 = vrot.slane %v2651, 4
      %v2653 = vmax.f32 %v2651, %v2652
      %v2654 = vrot.slane %v2653, 2
      %v2655 = vmax.f32 %v2653, %v2654
      %v2656 = vrot.slane %v2655, 1
      %v2657 = vmax.f32 %v2655, %v2656
      %v2658 = vsel %vm2384, %v2221, -inf
      %v2659 = vrot.slane %v2658, 4
      %v2660 = vmax.f32 %v2658, %v2659
      %v2661 = vrot.slane %v2660, 2
      %v2662 = vmax.f32 %v2660, %v2661
      %v2663 = vrot.slane %v2662, 1
      %v2664 = vmax.f32 %v2662, %v2663
      %v2665 = vsel %vm2384, %v2138, -inf
      %v2666 = vrot.slane %v2665, 4
      %v2667 = vmax.f32 %v2665, %v2666
      %v2668 = vrot.slane %v2667, 2
      %v2669 = vmax.f32 %v2667, %v2668
      %v2670 = vrot.slane %v2669, 1
      %v2671 = vmax.f32 %v2669, %v2670
      %v2672 = vsel %vm2384, %v2222, -inf
      %v2673 = vrot.slane %v2672, 4
      %v2674 = vmax.f32 %v2672, %v2673
      %v2675 = vrot.slane %v2674, 2
      %v2676 = vmax.f32 %v2674, %v2675
      %v2677 = vrot.slane %v2676, 1
      %v2678 = vmax.f32 %v2676, %v2677
      %v2679 = vsel %vm2384, %v2223, -inf
      %v2680 = vrot.slane %v2679, 4
      %v2681 = vmax.f32 %v2679, %v2680
      %v2682 = vrot.slane %v2681, 2
      %v2683 = vmax.f32 %v2681, %v2682
      %v2684 = vrot.slane %v2683, 1
      %v2685 = vmax.f32 %v2683, %v2684
      %v2686 = vsel %vm2384, %v2224, -inf
      %v2687 = vrot.slane %v2686, 4
      %v2688 = vmax.f32 %v2686, %v2687
      %v2689 = vrot.slane %v2688, 2
      %v2690 = vmax.f32 %v2688, %v2689
      %v2691 = vrot.slane %v2690, 1
      %v2692 = vmax.f32 %v2690, %v2691
      %v2693 = vsel %vm2384, %v2139, -inf
      %v2694 = vrot.slane %v2693, 4
      %v2695 = vmax.f32 %v2693, %v2694
      %v2696 = vrot.slane %v2695, 2
      %v2697 = vmax.f32 %v2695, %v2696
      %v2698 = vrot.slane %v2697, 1
      %v2699 = vmax.f32 %v2697, %v2698
      %v2700 = vsel %vm2384, %v2225, -inf
      %v2701 = vrot.slane %v2700, 4
      %v2702 = vmax.f32 %v2700, %v2701
      %v2703 = vrot.slane %v2702, 2
      %v2704 = vmax.f32 %v2702, %v2703
      %v2705 = vrot.slane %v2704, 1
      %v2706 = vmax.f32 %v2704, %v2705
      %v2707 = vsel %vm2384, %v2226, -inf
      %v2708 = vrot.slane %v2707, 4
      %v2709 = vmax.f32 %v2707, %v2708
      %v2710 = vrot.slane %v2709, 2
      %v2711 = vmax.f32 %v2709, %v2710
      %v2712 = vrot.slane %v2711, 1
      %v2713 = vmax.f32 %v2711, %v2712
      %v2714 = vsel %vm2384, %v2227, -inf
      %v2715 = vrot.slane %v2714, 4
      %v2716 = vmax.f32 %v2714, %v2715
      %v2717 = vrot.slane %v2716, 2
      %v2718 = vmax.f32 %v2716, %v2717
      %v2719 = vrot.slane %v2718, 1
      %v2720 = vmax.f32 %v2718, %v2719
      %v2721 = vsel %vm2384, %v2140, -inf
      %v2722 = vrot.slane %v2721, 4
      %v2723 = vmax.f32 %v2721, %v2722
      %v2724 = vrot.slane %v2723, 2
      %v2725 = vmax.f32 %v2723, %v2724
      %v2726 = vrot.slane %v2725, 1
      %v2727 = vmax.f32 %v2725, %v2726
      %v2728 = vsel %vm2384, %v2228, -inf
      %v2729 = vrot.slane %v2728, 4
      %v2730 = vmax.f32 %v2728, %v2729
      %v2731 = vrot.slane %v2730, 2
      %v2732 = vmax.f32 %v2730, %v2731
      %v2733 = vrot.slane %v2732, 1
      %v2734 = vmax.f32 %v2732, %v2733
      %v2735 = vsel %vm2384, %v2229, -inf
      %v2736 = vrot.slane %v2735, 4
      %v2737 = vmax.f32 %v2735, %v2736
      %v2738 = vrot.slane %v2737, 2
      %v2739 = vmax.f32 %v2737, %v2738
      %v2740 = vrot.slane %v2739, 1
      %v2741 = vmax.f32 %v2739, %v2740
      %v2742 = vsel %vm2384, %v2230, -inf
      %v2743 = vrot.slane %v2742, 4
      %v2744 = vmax.f32 %v2742, %v2743
      %v2745 = vrot.slane %v2744, 2
      %v2746 = vmax.f32 %v2744, %v2745
      %v2747 = vrot.slane %v2746, 1
      %v2748 = vmax.f32 %v2746, %v2747
      %v2749 = vsel %vm2384, %v2141, -inf
      %v2750 = vrot.slane %v2749, 4
      %v2751 = vmax.f32 %v2749, %v2750
      %v2752 = vrot.slane %v2751, 2
      %v2753 = vmax.f32 %v2751, %v2752
      %v2754 = vrot.slane %v2753, 1
      %v2755 = vmax.f32 %v2753, %v2754
      %v2756 = vsel %vm2384, %v2231, -inf
      %v2757 = vrot.slane %v2756, 4
      %v2758 = vmax.f32 %v2756, %v2757
      %v2759 = vrot.slane %v2758, 2
      %v2760 = vmax.f32 %v2758, %v2759
      %v2761 = vrot.slane %v2760, 1
      %v2762 = vmax.f32 %v2760, %v2761
      %v2763 = vsel %vm2384, %v2232, -inf
      %v2764 = vrot.slane %v2763, 4
      %v2765 = vmax.f32 %v2763, %v2764
      %v2766 = vrot.slane %v2765, 2
      %v2767 = vmax.f32 %v2765, %v2766
      %v2768 = vrot.slane %v2767, 1
      %v2769 = vmax.f32 %v2767, %v2768
      %v2770 = vsel %vm2384, %v2233, -inf
      %v2771 = vrot.slane %v2770, 4
      %v2772 = vmax.f32 %v2770, %v2771
      %v2773 = vrot.slane %v2772, 2
      %v2774 = vmax.f32 %v2772, %v2773
      %v2775 = vrot.slane %v2774, 1
      %v2776 = vmax.f32 %v2774, %v2775
      %v2777 = vsel %vm2384, %v2142, -inf
      %v2778 = vrot.slane %v2777, 4
      %v2779 = vmax.f32 %v2777, %v2778
      %v2780 = vrot.slane %v2779, 2
      %v2781 = vmax.f32 %v2779, %v2780
      %v2782 = vrot.slane %v2781, 1
      %v2783 = vmax.f32 %v2781, %v2782
      %v2784 = vsel %vm2384, %v2234, -inf
      %v2785 = vrot.slane %v2784, 4
      %v2786 = vmax.f32 %v2784, %v2785
      %v2787 = vrot.slane %v2786, 2
      %v2788 = vmax.f32 %v2786, %v2787
      %v2789 = vrot.slane %v2788, 1
      %v2790 = vmax.f32 %v2788, %v2789
      %v2791 = vsel %vm2384, %v2235, -inf
      %v2792 = vrot.slane %v2791, 4
      %v2793 = vmax.f32 %v2791, %v2792
      %v2794 = vrot.slane %v2793, 2
      %v2795 = vmax.f32 %v2793, %v2794
      %v2796 = vrot.slane %v2795, 1
      %v2797 = vmax.f32 %v2795, %v2796
      %v2798 = vsel %vm2384, %v2236, -inf
      %v2799 = vrot.slane %v2798, 4
      %v2800 = vmax.f32 %v2798, %v2799
      %v2801 = vrot.slane %v2800, 2
      %v2802 = vmax.f32 %v2800, %v2801
      %v2803 = vrot.slane %v2802, 1
      %v2804 = vmax.f32 %v2802, %v2803
      %v2805 = vsel %vm2384, %v2143, -inf
      %v2806 = vrot.slane %v2805, 4
      %v2807 = vmax.f32 %v2805, %v2806
      %v2808 = vrot.slane %v2807, 2
      %v2809 = vmax.f32 %v2807, %v2808
      %v2810 = vrot.slane %v2809, 1
      %v2811 = vmax.f32 %v2809, %v2810
      %v2812 = vsel %vm2384, %v2237, -inf
      %v2813 = vrot.slane %v2812, 4
      %v2814 = vmax.f32 %v2812, %v2813
      %v2815 = vrot.slane %v2814, 2
      %v2816 = vmax.f32 %v2814, %v2815
      %v2817 = vrot.slane %v2816, 1
      %v2818 = vmax.f32 %v2816, %v2817
      %v2819 = vsel %vm2384, %v2238, -inf
      %v2820 = vrot.slane %v2819, 4
      %v2821 = vmax.f32 %v2819, %v2820
      %v2822 = vrot.slane %v2821, 2
      %v2823 = vmax.f32 %v2821, %v2822
      %v2824 = vrot.slane %v2823, 1
      %v2825 = vmax.f32 %v2823, %v2824
      %v2826 = vsel %vm2384, %v2239, -inf
      %v2827 = vrot.slane %v2826, 4
      %v2828 = vmax.f32 %v2826, %v2827
      %v2829 = vrot.slane %v2828, 2
      %v2830 = vmax.f32 %v2828, %v2829
      %v2831 = vrot.slane %v2830, 1
      %v2832 = vmax.f32 %v2830, %v2831
      %v2833 = vsel %vm2384, %v2144, -inf
      %v2834 = vrot.slane %v2833, 4
      %v2835 = vmax.f32 %v2833, %v2834
      %v2836 = vrot.slane %v2835, 2
      %v2837 = vmax.f32 %v2835, %v2836
      %v2838 = vrot.slane %v2837, 1
      %v2839 = vmax.f32 %v2837, %v2838
      %v2840 = vsel %vm2384, %v2240, -inf
      %v2841 = vrot.slane %v2840, 4
      %v2842 = vmax.f32 %v2840, %v2841
      %v2843 = vrot.slane %v2842, 2
      %v2844 = vmax.f32 %v2842, %v2843
      %v2845 = vrot.slane %v2844, 1
      %v2846 = vmax.f32 %v2844, %v2845
      %v2847 = vsel %vm2384, %v2241, -inf
      %v2848 = vrot.slane %v2847, 4
      %v2849 = vmax.f32 %v2847, %v2848
      %v2850 = vrot.slane %v2849, 2
      %v2851 = vmax.f32 %v2849, %v2850
      %v2852 = vrot.slane %v2851, 1
      %v2853 = vmax.f32 %v2851, %v2852
      %v2854 = vsel %vm2384, %v2242, -inf
      %v2855 = vrot.slane %v2854, 4
      %v2856 = vmax.f32 %v2854, %v2855
      %v2857 = vrot.slane %v2856, 2
      %v2858 = vmax.f32 %v2856, %v2857
      %v2859 = vrot.slane %v2858, 1
      %v2860 = vmax.f32 %v2858, %v2859
      %v2861 = vsel %vm2384, %v2145, -inf
      %v2862 = vrot.slane %v2861, 4
      %v2863 = vmax.f32 %v2861, %v2862
      %v2864 = vrot.slane %v2863, 2
      %v2865 = vmax.f32 %v2863, %v2864
      %v2866 = vrot.slane %v2865, 1
      %v2867 = vmax.f32 %v2865, %v2866
      %v2868 = vsel %vm2384, %v2243, -inf
      %v2869 = vrot.slane %v2868, 4
      %v2870 = vmax.f32 %v2868, %v2869
      %v2871 = vrot.slane %v2870, 2
      %v2872 = vmax.f32 %v2870, %v2871
      %v2873 = vrot.slane %v2872, 1
      %v2874 = vmax.f32 %v2872, %v2873
      %v2875 = vsel %vm2384, %v2244, -inf
      %v2876 = vrot.slane %v2875, 4
      %v2877 = vmax.f32 %v2875, %v2876
      %v2878 = vrot.slane %v2877, 2
      %v2879 = vmax.f32 %v2877, %v2878
      %v2880 = vrot.slane %v2879, 1
      %v2881 = vmax.f32 %v2879, %v2880
      %v2882 = vsel %vm2384, %v2245, -inf
      %v2883 = vrot.slane %v2882, 4
      %v2884 = vmax.f32 %v2882, %v2883
      %v2885 = vrot.slane %v2884, 2
      %v2886 = vmax.f32 %v2884, %v2885
      %v2887 = vrot.slane %v2886, 1
      %v2888 = vmax.f32 %v2886, %v2887
      %v2889 = vsel %vm2384, %v2146, -inf
      %v2890 = vrot.slane %v2889, 4
      %v2891 = vmax.f32 %v2889, %v2890
      %v2892 = vrot.slane %v2891, 2
      %v2893 = vmax.f32 %v2891, %v2892
      %v2894 = vrot.slane %v2893, 1
      %v2895 = vmax.f32 %v2893, %v2894
      %v2896 = vsel %vm2384, %v2246, -inf
      %v2897 = vrot.slane %v2896, 4
      %v2898 = vmax.f32 %v2896, %v2897
      %v2899 = vrot.slane %v2898, 2
      %v2900 = vmax.f32 %v2898, %v2899
      %v2901 = vrot.slane %v2900, 1
      %v2902 = vmax.f32 %v2900, %v2901
      %v2903 = vsel %vm2384, %v2247, -inf
      %v2904 = vrot.slane %v2903, 4
      %v2905 = vmax.f32 %v2903, %v2904
      %v2906 = vrot.slane %v2905, 2
      %v2907 = vmax.f32 %v2905, %v2906
      %v2908 = vrot.slane %v2907, 1
      %v2909 = vmax.f32 %v2907, %v2908
      %v2910 = vsel %vm2384, %v2248, -inf
      %v2911 = vrot.slane %v2910, 4
      %v2912 = vmax.f32 %v2910, %v2911
      %v2913 = vrot.slane %v2912, 2
      %v2914 = vmax.f32 %v2912, %v2913
      %v2915 = vrot.slane %v2914, 1
      %v2916 = vmax.f32 %v2914, %v2915
      %v2917 = vsel %vm2384, %v2147, -inf
      %v2918 = vrot.slane %v2917, 4
      %v2919 = vmax.f32 %v2917, %v2918
      %v2920 = vrot.slane %v2919, 2
      %v2921 = vmax.f32 %v2919, %v2920
      %v2922 = vrot.slane %v2921, 1
      %v2923 = vmax.f32 %v2921, %v2922
      %v2924 = vsel %vm2384, %v2249, -inf
      %v2925 = vrot.slane %v2924, 4
      %v2926 = vmax.f32 %v2924, %v2925
      %v2927 = vrot.slane %v2926, 2
      %v2928 = vmax.f32 %v2926, %v2927
      %v2929 = vrot.slane %v2928, 1
      %v2930 = vmax.f32 %v2928, %v2929
      %v2931 = vsel %vm2384, %v2250, -inf
      %v2932 = vrot.slane %v2931, 4
      %v2933 = vmax.f32 %v2931, %v2932
      %v2934 = vrot.slane %v2933, 2
      %v2935 = vmax.f32 %v2933, %v2934
      %v2936 = vrot.slane %v2935, 1
      %v2937 = vmax.f32 %v2935, %v2936
      %v2938 = vsel %vm2384, %v2251, -inf
      %v2939 = vrot.slane %v2938, 4
      %v2940 = vmax.f32 %v2938, %v2939
      %v2941 = vrot.slane %v2940, 2
      %v2942 = vmax.f32 %v2940, %v2941
      %v2943 = vrot.slane %v2942, 1
      %v2944 = vmax.f32 %v2942, %v2943
      %v2945 = vsel %vm2384, %v2148, -inf
      %v2946 = vrot.slane %v2945, 4
      %v2947 = vmax.f32 %v2945, %v2946
      %v2948 = vrot.slane %v2947, 2
      %v2949 = vmax.f32 %v2947, %v2948
      %v2950 = vrot.slane %v2949, 1
      %v2951 = vmax.f32 %v2949, %v2950
      %v2952 = vsel %vm2384, %v2252, -inf
      %v2953 = vrot.slane %v2952, 4
      %v2954 = vmax.f32 %v2952, %v2953
      %v2955 = vrot.slane %v2954, 2
      %v2956 = vmax.f32 %v2954, %v2955
      %v2957 = vrot.slane %v2956, 1
      %v2958 = vmax.f32 %v2956, %v2957
      %v2959 = vsel %vm2384, %v2253, -inf
      %v2960 = vrot.slane %v2959, 4
      %v2961 = vmax.f32 %v2959, %v2960
      %v2962 = vrot.slane %v2961, 2
      %v2963 = vmax.f32 %v2961, %v2962
      %v2964 = vrot.slane %v2963, 1
      %v2965 = vmax.f32 %v2963, %v2964
      %v2966 = vsel %vm2384, %v2254, -inf
      %v2967 = vrot.slane %v2966, 4
      %v2968 = vmax.f32 %v2966, %v2967
      %v2969 = vrot.slane %v2968, 2
      %v2970 = vmax.f32 %v2968, %v2969
      %v2971 = vrot.slane %v2970, 1
      %v2972 = vmax.f32 %v2970, %v2971
      %v2973 = vsel %vm2384, %v2149, -inf
      %v2974 = vrot.slane %v2973, 4
      %v2975 = vmax.f32 %v2973, %v2974
      %v2976 = vrot.slane %v2975, 2
      %v2977 = vmax.f32 %v2975, %v2976
      %v2978 = vrot.slane %v2977, 1
      %v2979 = vmax.f32 %v2977, %v2978
      %v2980 = vsel %vm2384, %v2255, -inf
      %v2981 = vrot.slane %v2980, 4
      %v2982 = vmax.f32 %v2980, %v2981
      %v2983 = vrot.slane %v2982, 2
      %v2984 = vmax.f32 %v2982, %v2983
      %v2985 = vrot.slane %v2984, 1
      %v2986 = vmax.f32 %v2984, %v2985
      %v2987 = vsel %vm2384, %v2256, -inf
      %v2988 = vrot.slane %v2987, 4
      %v2989 = vmax.f32 %v2987, %v2988
      %v2990 = vrot.slane %v2989, 2
      %v2991 = vmax.f32 %v2989, %v2990
      %v2992 = vrot.slane %v2991, 1
      %v2993 = vmax.f32 %v2991, %v2992
      %v2994 = vsel %vm2384, %v2257, -inf
      %v2995 = vrot.slane %v2994, 4
      %v2996 = vmax.f32 %v2994, %v2995
      %v2997 = vrot.slane %v2996, 2
      %v2998 = vmax.f32 %v2996, %v2997
      %v2999 = vrot.slane %v2998, 1
      %v3000 = vmax.f32 %v2998, %v2999
      %v3001 = vsel %vm2384, %v2150, -inf
      %v3002 = vrot.slane %v3001, 4
      %v3003 = vmax.f32 %v3001, %v3002
      %v3004 = vrot.slane %v3003, 2
      %v3005 = vmax.f32 %v3003, %v3004
      %v3006 = vrot.slane %v3005, 1
      %v3007 = vmax.f32 %v3005, %v3006
      %v3008 = vsel %vm2384, %v2258, -inf
      %v3009 = vrot.slane %v3008, 4
      %v3010 = vmax.f32 %v3008, %v3009
      %v3011 = vrot.slane %v3010, 2
      %v3012 = vmax.f32 %v3010, %v3011
      %v3013 = vrot.slane %v3012, 1
      %v3014 = vmax.f32 %v3012, %v3013
      %v3015 = vsel %vm2384, %v2259, -inf
      %v3016 = vrot.slane %v3015, 4
      %v3017 = vmax.f32 %v3015, %v3016
      %v3018 = vrot.slane %v3017, 2
      %v3019 = vmax.f32 %v3017, %v3018
      %v3020 = vrot.slane %v3019, 1
      %v3021 = vmax.f32 %v3019, %v3020
      %v3022 = vsel %vm2384, %v2260, -inf
      %v3023 = vrot.slane %v3022, 4
      %v3024 = vmax.f32 %v3022, %v3023
      %v3025 = vrot.slane %v3024, 2
      %v3026 = vmax.f32 %v3024, %v3025
      %v3027 = vrot.slane %v3026, 1
      %v3028 = vmax.f32 %v3026, %v3027
      %v3029 = vsel %vm2384, %v2151, -inf
      %v3030 = vrot.slane %v3029, 4
      %v3031 = vmax.f32 %v3029, %v3030
      %v3032 = vrot.slane %v3031, 2
      %v3033 = vmax.f32 %v3031, %v3032
      %v3034 = vrot.slane %v3033, 1
      %v3035 = vmax.f32 %v3033, %v3034
      %v3036 = vsel %vm2384, %v2261, -inf
      %v3037 = vrot.slane %v3036, 4
      %v3038 = vmax.f32 %v3036, %v3037
      %v3039 = vrot.slane %v3038, 2
      %v3040 = vmax.f32 %v3038, %v3039
      %v3041 = vrot.slane %v3040, 1
      %v3042 = vmax.f32 %v3040, %v3041
      %v3043 = vsel %vm2384, %v2262, -inf
      %v3044 = vrot.slane %v3043, 4
      %v3045 = vmax.f32 %v3043, %v3044
      %v3046 = vrot.slane %v3045, 2
      %v3047 = vmax.f32 %v3045, %v3046
      %v3048 = vrot.slane %v3047, 1
      %v3049 = vmax.f32 %v3047, %v3048
      %v3050 = vsel %vm2384, %v2263, -inf
      %v3051 = vrot.slane %v3050, 4
      %v3052 = vmax.f32 %v3050, %v3051
      %v3053 = vrot.slane %v3052, 2
      %v3054 = vmax.f32 %v3052, %v3053
      %v3055 = vrot.slane %v3054, 1
      %v3056 = vmax.f32 %v3054, %v3055
      %v3057 = vsel %vm2384, %v2152, -inf
      %v3058 = vrot.slane %v3057, 4
      %v3059 = vmax.f32 %v3057, %v3058
      %v3060 = vrot.slane %v3059, 2
      %v3061 = vmax.f32 %v3059, %v3060
      %v3062 = vrot.slane %v3061, 1
      %v3063 = vmax.f32 %v3061, %v3062
      %v3064 = vsel %vm2384, %v2264, -inf
      %v3065 = vrot.slane %v3064, 4
      %v3066 = vmax.f32 %v3064, %v3065
      %v3067 = vrot.slane %v3066, 2
      %v3068 = vmax.f32 %v3066, %v3067
      %v3069 = vrot.slane %v3068, 1
      %v3070 = vmax.f32 %v3068, %v3069
      %v3071 = vsel %vm2384, %v2265, -inf
      %v3072 = vrot.slane %v3071, 4
      %v3073 = vmax.f32 %v3071, %v3072
      %v3074 = vrot.slane %v3073, 2
      %v3075 = vmax.f32 %v3073, %v3074
      %v3076 = vrot.slane %v3075, 1
      %v3077 = vmax.f32 %v3075, %v3076
      %v3078 = vsel %vm2384, %v2266, -inf
      %v3079 = vrot.slane %v3078, 4
      %v3080 = vmax.f32 %v3078, %v3079
      %v3081 = vrot.slane %v3080, 2
      %v3082 = vmax.f32 %v3080, %v3081
      %v3083 = vrot.slane %v3082, 1
      %v3084 = vmax.f32 %v3082, %v3083
      %v3085 = vsel %vm2384, %v2153, -inf
      %v3086 = vrot.slane %v3085, 4
      %v3087 = vmax.f32 %v3085, %v3086
      %v3088 = vrot.slane %v3087, 2
      %v3089 = vmax.f32 %v3087, %v3088
      %v3090 = vrot.slane %v3089, 1
      %v3091 = vmax.f32 %v3089, %v3090
      %v3092 = vsel %vm2384, %v2267, -inf
      %v3093 = vrot.slane %v3092, 4
      %v3094 = vmax.f32 %v3092, %v3093
      %v3095 = vrot.slane %v3094, 2
      %v3096 = vmax.f32 %v3094, %v3095
      %v3097 = vrot.slane %v3096, 1
      %v3098 = vmax.f32 %v3096, %v3097
      %v3099 = vsel %vm2384, %v2268, -inf
      %v3100 = vrot.slane %v3099, 4
      %v3101 = vmax.f32 %v3099, %v3100
      %v3102 = vrot.slane %v3101, 2
      %v3103 = vmax.f32 %v3101, %v3102
      %v3104 = vrot.slane %v3103, 1
      %v3105 = vmax.f32 %v3103, %v3104
      %v3106 = vsel %vm2384, %v2269, -inf
      %v3107 = vrot.slane %v3106, 4
      %v3108 = vmax.f32 %v3106, %v3107
      %v3109 = vrot.slane %v3108, 2
      %v3110 = vmax.f32 %v3108, %v3109
      %v3111 = vrot.slane %v3110, 1
      %v3112 = vmax.f32 %v3110, %v3111
      %v3113 = vsel %vm2384, %v2154, -inf
      %v3114 = vrot.slane %v3113, 4
      %v3115 = vmax.f32 %v3113, %v3114
      %v3116 = vrot.slane %v3115, 2
      %v3117 = vmax.f32 %v3115, %v3116
      %v3118 = vrot.slane %v3117, 1
      %v3119 = vmax.f32 %v3117, %v3118
      %v3120 = vsel %vm2384, %v2270, -inf
      %v3121 = vrot.slane %v3120, 4
      %v3122 = vmax.f32 %v3120, %v3121
      %v3123 = vrot.slane %v3122, 2
      %v3124 = vmax.f32 %v3122, %v3123
      %v3125 = vrot.slane %v3124, 1
      %v3126 = vmax.f32 %v3124, %v3125
      %v3127 = vsel %vm2384, %v2271, -inf
      %v3128 = vrot.slane %v3127, 4
      %v3129 = vmax.f32 %v3127, %v3128
      %v3130 = vrot.slane %v3129, 2
      %v3131 = vmax.f32 %v3129, %v3130
      %v3132 = vrot.slane %v3131, 1
      %v3133 = vmax.f32 %v3131, %v3132
      %v3134 = vsel %vm2384, %v2272, -inf
      %v3135 = vrot.slane %v3134, 4
      %v3136 = vmax.f32 %v3134, %v3135
      %v3137 = vrot.slane %v3136, 2
      %v3138 = vmax.f32 %v3136, %v3137
      %v3139 = vrot.slane %v3138, 1
      %v3140 = vmax.f32 %v3138, %v3139
      %v3141 = vsel %vm2384, %v2155, -inf
      %v3142 = vrot.slane %v3141, 4
      %v3143 = vmax.f32 %v3141, %v3142
      %v3144 = vrot.slane %v3143, 2
      %v3145 = vmax.f32 %v3143, %v3144
      %v3146 = vrot.slane %v3145, 1
      %v3147 = vmax.f32 %v3145, %v3146
      %v3148 = vsel %vm2384, %v2273, -inf
      %v3149 = vrot.slane %v3148, 4
      %v3150 = vmax.f32 %v3148, %v3149
      %v3151 = vrot.slane %v3150, 2
      %v3152 = vmax.f32 %v3150, %v3151
      %v3153 = vrot.slane %v3152, 1
      %v3154 = vmax.f32 %v3152, %v3153
      %v3155 = vsel %vm2384, %v2274, -inf
      %v3156 = vrot.slane %v3155, 4
      %v3157 = vmax.f32 %v3155, %v3156
      %v3158 = vrot.slane %v3157, 2
      %v3159 = vmax.f32 %v3157, %v3158
      %v3160 = vrot.slane %v3159, 1
      %v3161 = vmax.f32 %v3159, %v3160
      %v3162 = vsel %vm2384, %v2275, -inf
      %v3163 = vrot.slane %v3162, 4
      %v3164 = vmax.f32 %v3162, %v3163
      %v3165 = vrot.slane %v3164, 2
      %v3166 = vmax.f32 %v3164, %v3165
      %v3167 = vrot.slane %v3166, 1
      %v3168 = vmax.f32 %v3166, %v3167
      %v3169 = vsel %vm2384, %v2156, -inf
      %v3170 = vrot.slane %v3169, 4
      %v3171 = vmax.f32 %v3169, %v3170
      %v3172 = vrot.slane %v3171, 2
      %v3173 = vmax.f32 %v3171, %v3172
      %v3174 = vrot.slane %v3173, 1
      %v3175 = vmax.f32 %v3173, %v3174
      %v3176 = vsel %vm2384, %v2276, -inf
      %v3177 = vrot.slane %v3176, 4
      %v3178 = vmax.f32 %v3176, %v3177
      %v3179 = vrot.slane %v3178, 2
      %v3180 = vmax.f32 %v3178, %v3179
      %v3181 = vrot.slane %v3180, 1
      %v3182 = vmax.f32 %v3180, %v3181
      %v3183 = vsel %vm2384, %v2277, -inf
      %v3184 = vrot.slane %v3183, 4
      %v3185 = vmax.f32 %v3183, %v3184
      %v3186 = vrot.slane %v3185, 2
      %v3187 = vmax.f32 %v3185, %v3186
      %v3188 = vrot.slane %v3187, 1
      %v3189 = vmax.f32 %v3187, %v3188
      %v3190 = vsel %vm2384, %v2278, -inf
      %v3191 = vrot.slane %v3190, 4
      %v3192 = vmax.f32 %v3190, %v3191
      %v3193 = vrot.slane %v3192, 2
      %v3194 = vmax.f32 %v3192, %v3193
      %v3195 = vrot.slane %v3194, 1
      %v3196 = vmax.f32 %v3194, %v3195
      %v3197 = vsel %vm2384, %v2157, -inf
      %v3198 = vrot.slane %v3197, 4
      %v3199 = vmax.f32 %v3197, %v3198
      %v3200 = vrot.slane %v3199, 2
      %v3201 = vmax.f32 %v3199, %v3200
      %v3202 = vrot.slane %v3201, 1
      %v3203 = vmax.f32 %v3201, %v3202
      %v3204 = vsel %vm2384, %v2279, -inf
      %v3205 = vrot.slane %v3204, 4
      %v3206 = vmax.f32 %v3204, %v3205
      %v3207 = vrot.slane %v3206, 2
      %v3208 = vmax.f32 %v3206, %v3207
      %v3209 = vrot.slane %v3208, 1
      %v3210 = vmax.f32 %v3208, %v3209
      %v3211 = vsel %vm2384, %v2280, -inf
      %v3212 = vrot.slane %v3211, 4
      %v3213 = vmax.f32 %v3211, %v3212
      %v3214 = vrot.slane %v3213, 2
      %v3215 = vmax.f32 %v3213, %v3214
      %v3216 = vrot.slane %v3215, 1
      %v3217 = vmax.f32 %v3215, %v3216
      %v3218 = vsel %vm2384, %v2281, -inf
      %v3219 = vrot.slane %v3218, 4
      %v3220 = vmax.f32 %v3218, %v3219
      %v3221 = vrot.slane %v3220, 2
      %v3222 = vmax.f32 %v3220, %v3221
      %v3223 = vrot.slane %v3222, 1
      %v3224 = vmax.f32 %v3222, %v3223
      %v3225 = vsel %vm2384, %v2158, -inf
      %v3226 = vrot.slane %v3225, 4
      %v3227 = vmax.f32 %v3225, %v3226
      %v3228 = vrot.slane %v3227, 2
      %v3229 = vmax.f32 %v3227, %v3228
      %v3230 = vrot.slane %v3229, 1
      %v3231 = vmax.f32 %v3229, %v3230
      %v3232 = vsel %vm2384, %v2282, -inf
      %v3233 = vrot.slane %v3232, 4
      %v3234 = vmax.f32 %v3232, %v3233
      %v3235 = vrot.slane %v3234, 2
      %v3236 = vmax.f32 %v3234, %v3235
      %v3237 = vrot.slane %v3236, 1
      %v3238 = vmax.f32 %v3236, %v3237
      %v3239 = vsel %vm2384, %v2283, -inf
      %v3240 = vrot.slane %v3239, 4
      %v3241 = vmax.f32 %v3239, %v3240
      %v3242 = vrot.slane %v3241, 2
      %v3243 = vmax.f32 %v3241, %v3242
      %v3244 = vrot.slane %v3243, 1
      %v3245 = vmax.f32 %v3243, %v3244
      %v3246 = vsel %vm2384, %v2284, -inf
      %v3247 = vrot.slane %v3246, 4
      %v3248 = vmax.f32 %v3246, %v3247
      %v3249 = vrot.slane %v3248, 2
      %v3250 = vmax.f32 %v3248, %v3249
      %v3251 = vrot.slane %v3250, 1
      %v3252 = vmax.f32 %v3250, %v3251
      %v3253 = vsel %vm2384, %v2159, -inf
      %v3254 = vrot.slane %v3253, 4
      %v3255 = vmax.f32 %v3253, %v3254
      %v3256 = vrot.slane %v3255, 2
      %v3257 = vmax.f32 %v3255, %v3256
      %v3258 = vrot.slane %v3257, 1
      %v3259 = vmax.f32 %v3257, %v3258
      %v3260 = vsel %vm2384, %v2285, -inf
      %v3261 = vrot.slane %v3260, 4
      %v3262 = vmax.f32 %v3260, %v3261
      %v3263 = vrot.slane %v3262, 2
      %v3264 = vmax.f32 %v3262, %v3263
      %v3265 = vrot.slane %v3264, 1
      %v3266 = vmax.f32 %v3264, %v3265
      %v3267 = vsel %vm2384, %v2286, -inf
      %v3268 = vrot.slane %v3267, 4
      %v3269 = vmax.f32 %v3267, %v3268
      %v3270 = vrot.slane %v3269, 2
      %v3271 = vmax.f32 %v3269, %v3270
      %v3272 = vrot.slane %v3271, 1
      %v3273 = vmax.f32 %v3271, %v3272
      %v3274 = vsel %vm2384, %v2287, -inf
      %v3275 = vrot.slane %v3274, 4
      %v3276 = vmax.f32 %v3274, %v3275
      %v3277 = vrot.slane %v3276, 2
      %v3278 = vmax.f32 %v3276, %v3277
      %v3279 = vrot.slane %v3278, 1
      %v3280 = vmax.f32 %v3278, %v3279
      %vm3281 = vcmask 64512
      %v3282 = vsel %vm3281, %v2391, -inf
      %v3283 = vsel %vm3281, %v2447, -inf
      %v3284 = vmax.f32 %v3282, %v3283
      %v3285 = vsel %vm3281, %v2398, -inf
      %v3286 = vsel %vm3281, %v2454, -inf
      %v3287 = vmax.f32 %v3285, %v3286
      %v3288 = vsel %vm3281, %v2405, -inf
      %v3289 = vsel %vm3281, %v2461, -inf
      %v3290 = vmax.f32 %v3288, %v3289
      %v3291 = vsel %vm3281, %v2412, -inf
      %v3292 = vsel %vm3281, %v2468, -inf
      %v3293 = vmax.f32 %v3291, %v3292
      %v3294 = vsel %vm3281, %v2419, -inf
      %v3295 = vsel %vm3281, %v2475, -inf
      %v3296 = vmax.f32 %v3294, %v3295
      %v3297 = vsel %vm3281, %v2426, -inf
      %v3298 = vsel %vm3281, %v2482, -inf
      %v3299 = vmax.f32 %v3297, %v3298
      %v3300 = vsel %vm3281, %v2433, -inf
      %v3301 = vsel %vm3281, %v2489, -inf
      %v3302 = vmax.f32 %v3300, %v3301
      %v3303 = vsel %vm3281, %v2440, -inf
      %v3304 = vsel %vm3281, %v2496, -inf
      %v3305 = vmax.f32 %v3303, %v3304
      %v3306 = vsel %vm3281, %v2503, -inf
      %v3307 = vsel %vm3281, %v2559, -inf
      %v3308 = vmax.f32 %v3306, %v3307
      %v3309 = vsel %vm3281, %v2510, -inf
      %v3310 = vsel %vm3281, %v2566, -inf
      %v3311 = vmax.f32 %v3309, %v3310
      %v3312 = vsel %vm3281, %v2517, -inf
      %v3313 = vsel %vm3281, %v2573, -inf
      %v3314 = vmax.f32 %v3312, %v3313
      %v3315 = vsel %vm3281, %v2524, -inf
      %v3316 = vsel %vm3281, %v2580, -inf
      %v3317 = vmax.f32 %v3315, %v3316
      %v3318 = vsel %vm3281, %v2531, -inf
      %v3319 = vsel %vm3281, %v2587, -inf
      %v3320 = vmax.f32 %v3318, %v3319
      %v3321 = vsel %vm3281, %v2538, -inf
      %v3322 = vsel %vm3281, %v2594, -inf
      %v3323 = vmax.f32 %v3321, %v3322
      %v3324 = vsel %vm3281, %v2545, -inf
      %v3325 = vsel %vm3281, %v2601, -inf
      %v3326 = vmax.f32 %v3324, %v3325
      %v3327 = vsel %vm3281, %v2552, -inf
      %v3328 = vsel %vm3281, %v2608, -inf
      %v3329 = vmax.f32 %v3327, %v3328
      %v3330 = vsel %vm3281, %v2615, -inf
      %v3331 = vsel %vm3281, %v2671, -inf
      %v3332 = vmax.f32 %v3330, %v3331
      %v3333 = vsel %vm3281, %v2622, -inf
      %v3334 = vsel %vm3281, %v2678, -inf
      %v3335 = vmax.f32 %v3333, %v3334
      %v3336 = vsel %vm3281, %v2629, -inf
      %v3337 = vsel %vm3281, %v2685, -inf
      %v3338 = vmax.f32 %v3336, %v3337
      %v3339 = vsel %vm3281, %v2636, -inf
      %v3340 = vsel %vm3281, %v2692, -inf
      %v3341 = vmax.f32 %v3339, %v3340
      %v3342 = vsel %vm3281, %v2643, -inf
      %v3343 = vsel %vm3281, %v2699, -inf
      %v3344 = vmax.f32 %v3342, %v3343
      %v3345 = vsel %vm3281, %v2650, -inf
      %v3346 = vsel %vm3281, %v2706, -inf
      %v3347 = vmax.f32 %v3345, %v3346
      %v3348 = vsel %vm3281, %v2657, -inf
      %v3349 = vsel %vm3281, %v2713, -inf
      %v3350 = vmax.f32 %v3348, %v3349
      %v3351 = vsel %vm3281, %v2664, -inf
      %v3352 = vsel %vm3281, %v2720, -inf
      %v3353 = vmax.f32 %v3351, %v3352
      %v3354 = vsel %vm3281, %v2727, -inf
      %v3355 = vsel %vm3281, %v2783, -inf
      %v3356 = vmax.f32 %v3354, %v3355
      %v3357 = vsel %vm3281, %v2734, -inf
      %v3358 = vsel %vm3281, %v2790, -inf
      %v3359 = vmax.f32 %v3357, %v3358
      %v3360 = vsel %vm3281, %v2741, -inf
      %v3361 = vsel %vm3281, %v2797, -inf
      %v3362 = vmax.f32 %v3360, %v3361
      %v3363 = vsel %vm3281, %v2748, -inf
      %v3364 = vsel %vm3281, %v2804, -inf
      %v3365 = vmax.f32 %v3363, %v3364
      %v3366 = vsel %vm3281, %v2755, -inf
      %v3367 = vsel %vm3281, %v2811, -inf
      %v3368 = vmax.f32 %v3366, %v3367
      %v3369 = vsel %vm3281, %v2762, -inf
      %v3370 = vsel %vm3281, %v2818, -inf
      %v3371 = vmax.f32 %v3369, %v3370
      %v3372 = vsel %vm3281, %v2769, -inf
      %v3373 = vsel %vm3281, %v2825, -inf
      %v3374 = vmax.f32 %v3372, %v3373
      %v3375 = vsel %vm3281, %v2776, -inf
      %v3376 = vsel %vm3281, %v2832, -inf
      %v3377 = vmax.f32 %v3375, %v3376
      %v3378 = vsel %vm3281, %v2839, -inf
      %v3379 = vsel %vm3281, %v2895, -inf
      %v3380 = vmax.f32 %v3378, %v3379
      %v3381 = vsel %vm3281, %v2846, -inf
      %v3382 = vsel %vm3281, %v2902, -inf
      %v3383 = vmax.f32 %v3381, %v3382
      %v3384 = vsel %vm3281, %v2853, -inf
      %v3385 = vsel %vm3281, %v2909, -inf
      %v3386 = vmax.f32 %v3384, %v3385
      %v3387 = vsel %vm3281, %v2860, -inf
      %v3388 = vsel %vm3281, %v2916, -inf
      %v3389 = vmax.f32 %v3387, %v3388
      %v3390 = vsel %vm3281, %v2867, -inf
      %v3391 = vsel %vm3281, %v2923, -inf
      %v3392 = vmax.f32 %v3390, %v3391
      %v3393 = vsel %vm3281, %v2874, -inf
      %v3394 = vsel %vm3281, %v2930, -inf
      %v3395 = vmax.f32 %v3393, %v3394
      %v3396 = vsel %vm3281, %v2881, -inf
      %v3397 = vsel %vm3281, %v2937, -inf
      %v3398 = vmax.f32 %v3396, %v3397
      %v3399 = vsel %vm3281, %v2888, -inf
      %v3400 = vsel %vm3281, %v2944, -inf
      %v3401 = vmax.f32 %v3399, %v3400
      %v3402 = vsel %vm3281, %v2951, -inf
      %v3403 = vsel %vm3281, %v3007, -inf
      %v3404 = vmax.f32 %v3402, %v3403
      %v3405 = vsel %vm3281, %v2958, -inf
      %v3406 = vsel %vm3281, %v3014, -inf
      %v3407 = vmax.f32 %v3405, %v3406
      %v3408 = vsel %vm3281, %v2965, -inf
      %v3409 = vsel %vm3281, %v3021, -inf
      %v3410 = vmax.f32 %v3408, %v3409
      %v3411 = vsel %vm3281, %v2972, -inf
      %v3412 = vsel %vm3281, %v3028, -inf
      %v3413 = vmax.f32 %v3411, %v3412
      %v3414 = vsel %vm3281, %v2979, -inf
      %v3415 = vsel %vm3281, %v3035, -inf
      %v3416 = vmax.f32 %v3414, %v3415
      %v3417 = vsel %vm3281, %v2986, -inf
      %v3418 = vsel %vm3281, %v3042, -inf
      %v3419 = vmax.f32 %v3417, %v3418
      %v3420 = vsel %vm3281, %v2993, -inf
      %v3421 = vsel %vm3281, %v3049, -inf
      %v3422 = vmax.f32 %v3420, %v3421
      %v3423 = vsel %vm3281, %v3000, -inf
      %v3424 = vsel %vm3281, %v3056, -inf
      %v3425 = vmax.f32 %v3423, %v3424
      %v3426 = vsel %vm3281, %v3063, -inf
      %v3427 = vsel %vm3281, %v3119, -inf
      %v3428 = vmax.f32 %v3426, %v3427
      %v3429 = vsel %vm3281, %v3070, -inf
      %v3430 = vsel %vm3281, %v3126, -inf
      %v3431 = vmax.f32 %v3429, %v3430
      %v3432 = vsel %vm3281, %v3077, -inf
      %v3433 = vsel %vm3281, %v3133, -inf
      %v3434 = vmax.f32 %v3432, %v3433
      %v3435 = vsel %vm3281, %v3084, -inf
      %v3436 = vsel %vm3281, %v3140, -inf
      %v3437 = vmax.f32 %v3435, %v3436
      %v3438 = vsel %vm3281, %v3091, -inf
      %v3439 = vsel %vm3281, %v3147, -inf
      %v3440 = vmax.f32 %v3438, %v3439
      %v3441 = vsel %vm3281, %v3098, -inf
      %v3442 = vsel %vm3281, %v3154, -inf
      %v3443 = vmax.f32 %v3441, %v3442
      %v3444 = vsel %vm3281, %v3105, -inf
      %v3445 = vsel %vm3281, %v3161, -inf
      %v3446 = vmax.f32 %v3444, %v3445
      %v3447 = vsel %vm3281, %v3112, -inf
      %v3448 = vsel %vm3281, %v3168, -inf
      %v3449 = vmax.f32 %v3447, %v3448
      %v3450 = vsel %vm3281, %v3175, -inf
      %v3451 = vsel %vm3281, %v3231, -inf
      %v3452 = vmax.f32 %v3450, %v3451
      %v3453 = vsel %vm3281, %v3182, -inf
      %v3454 = vsel %vm3281, %v3238, -inf
      %v3455 = vmax.f32 %v3453, %v3454
      %v3456 = vsel %vm3281, %v3189, -inf
      %v3457 = vsel %vm3281, %v3245, -inf
      %v3458 = vmax.f32 %v3456, %v3457
      %v3459 = vsel %vm3281, %v3196, -inf
      %v3460 = vsel %vm3281, %v3252, -inf
      %v3461 = vmax.f32 %v3459, %v3460
      %v3462 = vsel %vm3281, %v3203, -inf
      %v3463 = vsel %vm3281, %v3259, -inf
      %v3464 = vmax.f32 %v3462, %v3463
      %v3465 = vsel %vm3281, %v3210, -inf
      %v3466 = vsel %vm3281, %v3266, -inf
      %v3467 = vmax.f32 %v3465, %v3466
      %v3468 = vsel %vm3281, %v3217, -inf
      %v3469 = vsel %vm3281, %v3273, -inf
      %v3470 = vmax.f32 %v3468, %v3469
      %v3471 = vsel %vm3281, %v3224, -inf
      %v3472 = vsel %vm3281, %v3280, -inf
      %v3473 = vmax.f32 %v3471, %v3472
      %v3474 = vpack.c.bf16 %v3284, %v3284
      %v3475 = vpack.c.bf16 %v3287, %v3287
      %v3476 = vpack.c.bf16 %v3290, %v3290
      %v3477 = vpack.c.bf16 %v3293, %v3293
      %v3478 = vpack.c.bf16 %v3296, %v3296
      %v3479 = vpack.c.bf16 %v3299, %v3299
      %v3480 = vpack.c.bf16 %v3302, %v3302
      %v3481 = vpack.c.bf16 %v3305, %v3305
      %v3482 = vpack.c.bf16 %v3308, %v3308
      %v3483 = vpack.c.bf16 %v3311, %v3311
      %v3484 = vpack.c.bf16 %v3314, %v3314
      %v3485 = vpack.c.bf16 %v3317, %v3317
      %v3486 = vpack.c.bf16 %v3320, %v3320
      %v3487 = vpack.c.bf16 %v3323, %v3323
      %v3488 = vpack.c.bf16 %v3326, %v3326
      %v3489 = vpack.c.bf16 %v3329, %v3329
      %v3490 = vpack.c.bf16 %v3332, %v3332
      %v3491 = vpack.c.bf16 %v3335, %v3335
      %v3492 = vpack.c.bf16 %v3338, %v3338
      %v3493 = vpack.c.bf16 %v3341, %v3341
      %v3494 = vpack.c.bf16 %v3344, %v3344
      %v3495 = vpack.c.bf16 %v3347, %v3347
      %v3496 = vpack.c.bf16 %v3350, %v3350
      %v3497 = vpack.c.bf16 %v3353, %v3353
      %v3498 = vpack.c.bf16 %v3356, %v3356
      %v3499 = vpack.c.bf16 %v3359, %v3359
      %v3500 = vpack.c.bf16 %v3362, %v3362
      %v3501 = vpack.c.bf16 %v3365, %v3365
      %v3502 = vpack.c.bf16 %v3368, %v3368
      %v3503 = vpack.c.bf16 %v3371, %v3371
      %v3504 = vpack.c.bf16 %v3374, %v3374
      %v3505 = vpack.c.bf16 %v3377, %v3377
      %v3506 = vpack.c.bf16 %v3380, %v3380
      %v3507 = vpack.c.bf16 %v3383, %v3383
      %v3508 = vpack.c.bf16 %v3386, %v3386
      %v3509 = vpack.c.bf16 %v3389, %v3389
      %v3510 = vpack.c.bf16 %v3392, %v3392
      %v3511 = vpack.c.bf16 %v3395, %v3395
      %v3512 = vpack.c.bf16 %v3398, %v3398
      %v3513 = vpack.c.bf16 %v3401, %v3401
      %v3514 = vpack.c.bf16 %v3404, %v3404
      %v3515 = vpack.c.bf16 %v3407, %v3407
      %v3516 = vpack.c.bf16 %v3410, %v3410
      %v3517 = vpack.c.bf16 %v3413, %v3413
      %v3518 = vpack.c.bf16 %v3416, %v3416
      %v3519 = vpack.c.bf16 %v3419, %v3419
      %v3520 = vpack.c.bf16 %v3422, %v3422
      %v3521 = vpack.c.bf16 %v3425, %v3425
      %v3522 = vpack.c.bf16 %v3428, %v3428
      %v3523 = vpack.c.bf16 %v3431, %v3431
      %v3524 = vpack.c.bf16 %v3434, %v3434
      %v3525 = vpack.c.bf16 %v3437, %v3437
      %v3526 = vpack.c.bf16 %v3440, %v3440
      %v3527 = vpack.c.bf16 %v3443, %v3443
      %v3528 = vpack.c.bf16 %v3446, %v3446
      %v3529 = vpack.c.bf16 %v3449, %v3449
      %v3530 = vpack.c.bf16 %v3452, %v3452
      %v3531 = vpack.c.bf16 %v3455, %v3455
      %v3532 = vpack.c.bf16 %v3458, %v3458
      %v3533 = vpack.c.bf16 %v3461, %v3461
      %v3534 = vpack.c.bf16 %v3464, %v3464
      %v3535 = vpack.c.bf16 %v3467, %v3467
      %v3536 = vpack.c.bf16 %v3470, %v3470
      %v3537 = vpack.c.bf16 %v3473, %v3473
      %v3602 = vunpack.c.l.b16 %v3474
      %v3603 = vunpack.c.l.b16 %v3475
      %v3604 = vunpack.c.l.b16 %v3476
      %v3605 = vunpack.c.l.b16 %v3477
      %v3606 = vunpack.c.l.b16 %v3478
      %v3607 = vunpack.c.l.b16 %v3479
      %v3608 = vunpack.c.l.b16 %v3480
      %v3609 = vunpack.c.l.b16 %v3481
      %v3610 = vunpack.c.l.b16 %v3482
      %v3611 = vunpack.c.l.b16 %v3483
      %v3612 = vunpack.c.l.b16 %v3484
      %v3613 = vunpack.c.l.b16 %v3485
      %v3614 = vunpack.c.l.b16 %v3486
      %v3615 = vunpack.c.l.b16 %v3487
      %v3616 = vunpack.c.l.b16 %v3488
      %v3617 = vunpack.c.l.b16 %v3489
      %v3618 = vunpack.c.l.b16 %v3490
      %v3619 = vunpack.c.l.b16 %v3491
      %v3620 = vunpack.c.l.b16 %v3492
      %v3621 = vunpack.c.l.b16 %v3493
      %v3622 = vunpack.c.l.b16 %v3494
      %v3623 = vunpack.c.l.b16 %v3495
      %v3624 = vunpack.c.l.b16 %v3496
      %v3625 = vunpack.c.l.b16 %v3497
      %v3626 = vunpack.c.l.b16 %v3498
      %v3627 = vunpack.c.l.b16 %v3499
      %v3628 = vunpack.c.l.b16 %v3500
      %v3629 = vunpack.c.l.b16 %v3501
      %v3630 = vunpack.c.l.b16 %v3502
      %v3631 = vunpack.c.l.b16 %v3503
      %v3632 = vunpack.c.l.b16 %v3504
      %v3633 = vunpack.c.l.b16 %v3505
      %v3634 = vunpack.c.l.b16 %v3506
      %v3635 = vunpack.c.l.b16 %v3507
      %v3636 = vunpack.c.l.b16 %v3508
      %v3637 = vunpack.c.l.b16 %v3509
      %v3638 = vunpack.c.l.b16 %v3510
      %v3639 = vunpack.c.l.b16 %v3511
      %v3640 = vunpack.c.l.b16 %v3512
      %v3641 = vunpack.c.l.b16 %v3513
      %v3642 = vunpack.c.l.b16 %v3514
      %v3643 = vunpack.c.l.b16 %v3515
      %v3644 = vunpack.c.l.b16 %v3516
      %v3645 = vunpack.c.l.b16 %v3517
      %v3646 = vunpack.c.l.b16 %v3518
      %v3647 = vunpack.c.l.b16 %v3519
      %v3648 = vunpack.c.l.b16 %v3520
      %v3649 = vunpack.c.l.b16 %v3521
      %v3650 = vunpack.c.l.b16 %v3522
      %v3651 = vunpack.c.l.b16 %v3523
      %v3652 = vunpack.c.l.b16 %v3524
      %v3653 = vunpack.c.l.b16 %v3525
      %v3654 = vunpack.c.l.b16 %v3526
      %v3655 = vunpack.c.l.b16 %v3527
      %v3656 = vunpack.c.l.b16 %v3528
      %v3657 = vunpack.c.l.b16 %v3529
      %v3658 = vunpack.c.l.b16 %v3530
      %v3659 = vunpack.c.l.b16 %v3531
      %v3660 = vunpack.c.l.b16 %v3532
      %v3661 = vunpack.c.l.b16 %v3533
      %v3662 = vunpack.c.l.b16 %v3534
      %v3663 = vunpack.c.l.b16 %v3535
      %v3664 = vunpack.c.l.b16 %v3536
      %v3665 = vunpack.c.l.b16 %v3537
      %vm3666 = vcmask 1041409
      %v3667 = vsel %vm3666, %v3603, %v3602
      %vm3668 = vcmask 1042434
      %v3669 = vsel %vm3668, %v3604, %v3667
      %vm3670 = vcmask 1043459
      %v3671 = vsel %vm3670, %v3605, %v3669
      %vm3672 = vcmask 1044484
      %v3673 = vsel %vm3672, %v3606, %v3671
      %vm3674 = vcmask 1045509
      %v3675 = vsel %vm3674, %v3607, %v3673
      %vm3676 = vcmask 1046534
      %v3677 = vsel %vm3676, %v3608, %v3675
      %vm3678 = vcmask 1047559
      %v3679 = vsel %vm3678, %v3609, %v3677
      %v3680 = vsel %vm3666, %v3611, %v3610
      %v3681 = vsel %vm3668, %v3612, %v3680
      %v3682 = vsel %vm3670, %v3613, %v3681
      %v3683 = vsel %vm3672, %v3614, %v3682
      %v3684 = vsel %vm3674, %v3615, %v3683
      %v3685 = vsel %vm3676, %v3616, %v3684
      %v3686 = vsel %vm3678, %v3617, %v3685
      %v3687 = vsel %vm3666, %v3619, %v3618
      %v3688 = vsel %vm3668, %v3620, %v3687
      %v3689 = vsel %vm3670, %v3621, %v3688
      %v3690 = vsel %vm3672, %v3622, %v3689
      %v3691 = vsel %vm3674, %v3623, %v3690
      %v3692 = vsel %vm3676, %v3624, %v3691
      %v3693 = vsel %vm3678, %v3625, %v3692
      %v3694 = vsel %vm3666, %v3627, %v3626
      %v3695 = vsel %vm3668, %v3628, %v3694
      %v3696 = vsel %vm3670, %v3629, %v3695
      %v3697 = vsel %vm3672, %v3630, %v3696
      %v3698 = vsel %vm3674, %v3631, %v3697
      %v3699 = vsel %vm3676, %v3632, %v3698
      %v3700 = vsel %vm3678, %v3633, %v3699
      %v3701 = vsel %vm3666, %v3635, %v3634
      %v3702 = vsel %vm3668, %v3636, %v3701
      %v3703 = vsel %vm3670, %v3637, %v3702
      %v3704 = vsel %vm3672, %v3638, %v3703
      %v3705 = vsel %vm3674, %v3639, %v3704
      %v3706 = vsel %vm3676, %v3640, %v3705
      %v3707 = vsel %vm3678, %v3641, %v3706
      %v3708 = vsel %vm3666, %v3643, %v3642
      %v3709 = vsel %vm3668, %v3644, %v3708
      %v3710 = vsel %vm3670, %v3645, %v3709
      %v3711 = vsel %vm3672, %v3646, %v3710
      %v3712 = vsel %vm3674, %v3647, %v3711
      %v3713 = vsel %vm3676, %v3648, %v3712
      %v3714 = vsel %vm3678, %v3649, %v3713
      %v3715 = vsel %vm3666, %v3651, %v3650
      %v3716 = vsel %vm3668, %v3652, %v3715
      %v3717 = vsel %vm3670, %v3653, %v3716
      %v3718 = vsel %vm3672, %v3654, %v3717
      %v3719 = vsel %vm3674, %v3655, %v3718
      %v3720 = vsel %vm3676, %v3656, %v3719
      %v3721 = vsel %vm3678, %v3657, %v3720
      %v3722 = vsel %vm3666, %v3659, %v3658
      %v3723 = vsel %vm3668, %v3660, %v3722
      %v3724 = vsel %vm3670, %v3661, %v3723
      %v3725 = vsel %vm3672, %v3662, %v3724
      %v3726 = vsel %vm3674, %v3663, %v3725
      %v3727 = vsel %vm3676, %v3664, %v3726
      %v3728 = vsel %vm3678, %v3665, %v3727
      %v3729 = vpack.c.b16 %v3679, %v3679
      %v3730 = vpack.c.b16 %v3686, %v3686
      %v3731 = vpack.c.b16 %v3693, %v3693
      %v3732 = vpack.c.b16 %v3700, %v3700
      %v3733 = vpack.c.b16 %v3707, %v3707
      %v3734 = vpack.c.b16 %v3714, %v3714
      %v3735 = vpack.c.b16 %v3721, %v3721
      %v3736 = vpack.c.b16 %v3728, %v3728
      %vm3745 = vcmask 60416
      %3746 = vst.msk [vmem:[%s170] sm:$0xf] %vm3745, %v3729
      %3747 = vst.msk [vmem:[%s170 + $0x4] sm:$0xf] %vm3745, %v3730
      %3748 = vst.msk [vmem:[%s170 + $0x8] sm:$0xf] %vm3745, %v3731
      %3749 = vst.msk [vmem:[%s170 + $0xc] sm:$0xf] %vm3745, %v3732
      %3750 = vst.msk [vmem:[%s170 + $0x10] sm:$0xf] %vm3745, %v3733
      %3751 = vst.msk [vmem:[%s170 + $0x14] sm:$0xf] %vm3745, %v3734
      %3752 = vst.msk [vmem:[%s170 + $0x18] sm:$0xf] %vm3745, %v3735
      %3753 = vst.msk [vmem:[%s170 + $0x1c] sm:$0xf] %vm3745, %v3736
      %p3754 = scmp.lt.s32.totalorder %s14, 1
      %s3755 = scalar_select %p3754, %s14, 1
      %s3756 = smul.addr %s3755, 8
      %s3757 = smul.addr %s3756, 4
      %s3758 = scalar_lea.vmem %s3, %s3757
      // Predicated region
      $region33: #{tpu_custom_call.1} parent=31 // pred_check
        %p3759 = pneg %p100
      $region34: #{tpu_custom_call.1} parent=31 // pred_check_branch
        %3761 = sbr.rel (%p3759) target = $region36
      $region35: #{tpu_custom_call.1} parent=31 // pred_region
        _
      $region36: #{tpu_custom_call.1} parent=31 // pred_fallthru
        _
    $region32: #{tpu_custom_call.1} parent=5 // pred_fallthru
      _
    %p3762 = scmp.le.s32.totalorder 2, %s9
    // Predicated region
    $region37: #{tpu_custom_call.1} parent=5 // pred_check
      %p3763 = pneg %p3762
    $region38: #{tpu_custom_call.1} parent=5 // pred_check_branch
      %3765 = sbr.rel (%p3763) target = $region40
    $region39: #{tpu_custom_call.1} parent=5 // pred_region
      %s3766 = ssub.s32 %s9, 2
      // Predicated region
      $region41: #{tpu_custom_call.1} parent=39 // pred_check
        %p3767 = pneg %p106
      $region42: #{tpu_custom_call.1} parent=39 // pred_check_branch
        %3769 = sbr.rel (%p3767) target = $region44
      $region43: #{tpu_custom_call.1} parent=39 // pred_region
        %p3770 = scmp.lt.s32.totalorder %s15, 1
        %s3771 = scalar_select %p3770, %s15, 1
        %s3772 = smul.addr %s3771, 8
        %s3773 = smul.addr %s3772, 4
        %s3774 = scalar_lea.vmem %s3, %s3773
      $region44: #{tpu_custom_call.1} parent=39 // pred_fallthru
        _
    $region40: #{tpu_custom_call.1} parent=5 // pred_fallthru
      _
  $region6: #{tpu_custom_call.1} parent=0 // loop_footer
    %s13 = sadd.s32 1, %s9
  $region7: #{tpu_custom_call.1} parent=0 // loop_footer_branch
    %8 = sbr.rel target = $region3
  $region8: #{tpu_custom_call.1} parent=0 // loop_exit
    _

</llo_original>
